<compile_context>
chip_gen: v7x
topology: tpu7x:2x2x1
jax: 0.10.0
libtpu: 0.0.40
codegen_flags: <defaults>
</compile_context>

<pallas_src>
import jax
import jax.numpy as jnp
from jax.experimental import pallas as pl
from jax.experimental.pallas import tpu as pltpu

EPS = 1e-5


def _bn_train(y, gamma, beta):
    """Training-mode BatchNorm2d on flattened (M, C) pre-activations.

    Batch statistics over axis 0 (= N*H*W), biased variance, eps=1e-5,
    computed in a single pass and folded into one per-channel scale/shift.
    """
    inv_m = 1.0 / y.shape[0]
    s1 = jnp.sum(y, axis=0, keepdims=True)
    s2 = jnp.sum(y * y, axis=0, keepdims=True)
    mean = s1 * inv_m
    var = jnp.maximum(s2 * inv_m - mean * mean, 0.0)
    scale = gamma * jax.lax.rsqrt(var + EPS)
    shift = beta - mean * scale
    return y * scale + shift


def _stride1_kernel(x_ref, w1_ref, g1_ref, b1_ref, w2_ref, g2_ref, b2_ref,
                    t2_ref, pad_ref):
    """b3_1 (1x1 conv + BN + ReLU) and b3_2 (3x3 pad=1 conv + BN + ReLU)."""
    N, H, W, Cin = x_ref.shape
    k = w1_ref.shape[1]
    l = w2_ref.shape[2]
    M = N * H * W

    # ---- b3_1: 1x1 conv == one (M, Cin) @ (Cin, k) MXU matmul ----
    xf = x_ref[...].reshape(M, Cin)
    y = jnp.dot(xf.astype(jnp.bfloat16), w1_ref[...],
                preferred_element_type=jnp.float32)
    y = jnp.maximum(_bn_train(y, g1_ref[...], b1_ref[...]), 0.0)

    # ---- b3_2: 3x3 pad=1 conv over a zero-padded VMEM scratch ----
    # One zero fill per call (only the 1-pixel border is actually required;
    # the interior is overwritten right after).
    pad_ref[...] = jnp.zeros(pad_ref.shape, pad_ref.dtype)
    pad_ref[:, 1:H + 1, 1:W + 1, :] = y.reshape(N, H, W, k)
    xp = pad_ref[...]                                  # (N, H+2, W+2, k)

    acc = jnp.zeros((M, l), jnp.float32)
    for t in range(9):                                 # 9 shifted MXU matmuls
        ky, kx = t // 3, t % 3
        patch = xp[:, ky:ky + H, kx:kx + W, :].reshape(M, k)
        acc = acc + jnp.dot(patch.astype(jnp.bfloat16), w2_ref[t],
                            preferred_element_type=jnp.float32)
    y2 = jnp.maximum(_bn_train(acc, g2_ref[...], b2_ref[...]), 0.0)
    t2_ref[...] = y2.reshape(N, H, W, l)


def _stride2_kernel(xtaps_ref, xcol_ref, tcol_ref,
                    wn_ref, gn_ref, bn_ref, wm_ref, gm_ref, bm_ref,
                    y1_ref, y2_ref, y3_ref):
    """b1 (3x3/s2 max-pool), b2 (3x3/s2 conv+BN+ReLU), b3_3 (3x3/s2 conv+BN+ReLU).

    xtaps_ref: (9, Mo, Cin) f32 — tap t = ky*3+kx holds x[:, 2i+ky, 2j+kx, :].
    xcol_ref : (Mo, 9*Cin) bf16 — same taps, lane-concatenated (im2col of x).
    tcol_ref : (Mo, 9*l)   bf16 — im2col of the b3_2 output.
    """
    # ---- branch 1: max-pool = elementwise max over the 9 taps (f32, exact) ----
    mx = xtaps_ref[0]
    for t in range(1, 9):
        mx = jnp.maximum(mx, xtaps_ref[t])
    y1_ref[...] = mx

    # ---- branch 2: 3x3/s2 conv as ONE wide-K (K = 9*Cin) MXU matmul ----
    y2 = jnp.dot(xcol_ref[...], wn_ref[...], preferred_element_type=jnp.float32)
    y2_ref[...] = jnp.maximum(_bn_train(y2, gn_ref[...], bn_ref[...]), 0.0)

    # ---- branch 3 tail: 3x3/s2 conv on the b3_2 output (K = 9*l) ----
    y3 = jnp.dot(tcol_ref[...], wm_ref[...], preferred_element_type=jnp.float32)
    y3_ref[...] = jnp.maximum(_bn_train(y3, gm_ref[...], bm_ref[...]), 0.0)


def _vmem():
    return pl.BlockSpec(memory_space=pltpu.MemorySpace.VMEM)


def _stride2_patches(a, Ho, Wo):
    """The 9 stride-2 taps of `a` (NHWC), each flattened to (N*Ho*Wo, C)."""
    C = a.shape[-1]
    return [a[:, ky:ky + 2 * Ho - 1:2, kx:kx + 2 * Wo - 1:2, :].reshape(-1, C)
            for ky in range(3) for kx in range(3)]


def reduction_a(x_nchw, params):
    """ReductionA forward.  x_nchw: (N, Cin, H, W) f32; params in torch layout."""
    N, Cin, H, W = x_nchw.shape
    Ho, Wo = (H - 3) // 2 + 1, (W - 3) // 2 + 1
    Mo = N * Ho * Wo

    x = jnp.transpose(x_nchw, (0, 2, 3, 1)).astype(jnp.float32)   # NCHW -> NHWC

    def w_1x1(w):                    # torch (O, I, 1, 1) -> (I, O) bf16
        return jnp.transpose(w[:, :, 0, 0], (1, 0)).astype(jnp.bfloat16)

    def w_3x3(w, fold_taps):         # torch (O, I, 3, 3) -> (9*I, O) / (9, I, O) bf16
        o, i = w.shape[0], w.shape[1]
        wt = jnp.transpose(w, (2, 3, 1, 0)).reshape(9, i, o)
        if fold_taps:
            wt = wt.reshape(9 * i, o)
        return wt.astype(jnp.bfloat16)

    def bn_par(name):
        g = params[name + ".g"].reshape(1, -1).astype(jnp.float32)
        b = params[name + ".b"].reshape(1, -1).astype(jnp.float32)
        return g, b

    # Conv biases are intentionally not used: training-mode BN exactly cancels
    # any per-channel constant added before it.
    w31 = w_1x1(params["b3_1.w"]);                  g31, be31 = bn_par("b3_1")
    w32 = w_3x3(params["b3_2.w"], fold_taps=False); g32, be32 = bn_par("b3_2")
    w33 = w_3x3(params["b3_3.w"], fold_taps=True);  g33, be33 = bn_par("b3_3")
    w2  = w_3x3(params["b2.w"],   fold_taps=True);  g2,  be2  = bn_par("b2")

    k, l = w31.shape[1], w32.shape[2]
    m, n = w33.shape[1], w2.shape[1]

    cp = pltpu.CompilerParams(vmem_limit_bytes=32 * 1024 * 1024)

    # Kernel A: stride-1 part of the b3 path.
    t2 = pl.pallas_call(
        _stride1_kernel,
        out_shape=jax.ShapeDtypeStruct((N, H, W, l), jnp.float32),
        in_specs=[_vmem()] * 7,
        out_specs=_vmem(),
        scratch_shapes=[pltpu.VMEM((N, H + 2, W + 2, k), jnp.float32)],
        compiler_params=cp,
    )(x, w31, g31, be31, w32, g32, be32)

    # Layout plumbing (XLA, no arithmetic): the nine stride-2 taps of x (for
    # the max-pool) and the im2col matrices for the two stride-2 convs.
    x_patches = _stride2_patches(x, Ho, Wo)
    x_taps = jnp.stack(x_patches, axis=0)                              # (9, Mo, Cin) f32
    x_col = jnp.concatenate(x_patches, axis=-1).astype(jnp.bfloat16)   # (Mo, 9*Cin)
    t_col = jnp.concatenate(_stride2_patches(t2, Ho, Wo),
                            axis=-1).astype(jnp.bfloat16)              # (Mo, 9*l)

    # Kernel B: the three stride-2 branches.
    y1, y2, y3 = pl.pallas_call(
        _stride2_kernel,
        out_shape=(jax.ShapeDtypeStruct((Mo, Cin), jnp.float32),
                   jax.ShapeDtypeStruct((Mo, n), jnp.float32),
                   jax.ShapeDtypeStruct((Mo, m), jnp.float32)),
        in_specs=[_vmem()] * 9,
        out_specs=(_vmem(), _vmem(), _vmem()),
        compiler_params=cp,
    )(x_taps, x_col, t_col, w2, g2, be2, w33, g33, be33)

    out = jnp.concatenate([y1.reshape(N, Ho, Wo, Cin),
                           y2.reshape(N, Ho, Wo, n),
                           y3.reshape(N, Ho, Wo, m)], axis=-1)
    return jnp.transpose(out, (0, 3, 1, 2))                            # NHWC -> NCHW


# ----------------------------- reference & test -----------------------------

def _ref_basic_conv_bn(x, w, gamma, beta, stride, padding):
    y = jax.lax.conv_general_dilated(
        x, w, window_strides=(stride, stride),
        padding=[(padding, padding), (padding, padding)],
        dimension_numbers=("NCHW", "OIHW", "NCHW"),
        precision=jax.lax.Precision.HIGHEST)
    mean = jnp.mean(y, axis=(0, 2, 3), keepdims=True)
    var = jnp.mean((y - mean) ** 2, axis=(0, 2, 3), keepdims=True)
    yn = (y - mean) * jax.lax.rsqrt(var + EPS)
    return yn * gamma.reshape(1, -1, 1, 1) + beta.reshape(1, -1, 1, 1)


def reduction_a_reference(x, p):
    """Pure-JAX (XLA) reference of the PyTorch ReductionA forward."""
    relu = jax.nn.relu
    y1 = jax.lax.reduce_window(x, -jnp.inf, jax.lax.max,
                               (1, 1, 3, 3), (1, 1, 2, 2), "VALID")
    y2 = relu(_ref_basic_conv_bn(x, p["b2.w"], p["b2.g"], p["b2.b"], 2, 0))
    t = relu(_ref_basic_conv_bn(x, p["b3_1.w"], p["b3_1.g"], p["b3_1.b"], 1, 0))
    t = relu(_ref_basic_conv_bn(t, p["b3_2.w"], p["b3_2.g"], p["b3_2.b"], 1, 1))
    y3 = relu(_ref_basic_conv_bn(t, p["b3_3.w"], p["b3_3.g"], p["b3_3.b"], 2, 0))
    return jnp.concatenate([y1, y2, y3], axis=1)


def init_params(key, in_channels, k, l, m, n):
    def conv_w(kk, o, i, kh, kw):
        bound = (1.0 / (i * kh * kw)) ** 0.5
        return jax.random.uniform(kk, (o, i, kh, kw), jnp.float32, -bound, bound)

    ks = jax.random.split(key, 4)
    return {
        "b2.w": conv_w(ks[0], n, in_channels, 3, 3),
        "b2.g": jnp.ones((n,), jnp.float32), "b2.b": jnp.zeros((n,), jnp.float32),
        "b3_1.w": conv_w(ks[1], k, in_channels, 1, 1),
        "b3_1.g": jnp.ones((k,), jnp.float32), "b3_1.b": jnp.zeros((k,), jnp.float32),
        "b3_2.w": conv_w(ks[2], l, k, 3, 3),
        "b3_2.g": jnp.ones((l,), jnp.float32), "b3_2.b": jnp.zeros((l,), jnp.float32),
        "b3_3.w": conv_w(ks[3], m, l, 3, 3),
        "b3_3.g": jnp.ones((m,), jnp.float32), "b3_3.b": jnp.zeros((m,), jnp.float32),
    }


if __name__ == "__main__":
    key = jax.random.PRNGKey(0)
    kx, kp = jax.random.split(key)

    N, Cin, H, W = 2, 64, 16, 16          # small NCHW test input
    k, l, m, n = 32, 32, 64, 64           # ReductionA(in_channels=64, k, l, m, n)
    x = jax.random.normal(kx, (N, Cin, H, W), jnp.float32)
    params = init_params(kp, Cin, k, l, m, n)

    out = jax.block_until_ready(reduction_a(x, params))

    Ho = (H - 3) // 2 + 1
    assert out.shape == (N, Cin + n + m, Ho, Ho), out.shape
    assert bool(jnp.all(jnp.isfinite(out)))

    # Correctness vs. a pure-JAX reference (loose tolerance: matmul operands
    # are cast to bf16 inside the kernels).
    ref = reduction_a_reference(x, params)
    assert bool(jnp.allclose(out, ref, atol=1e-1, rtol=1e-1)), (
        float(jnp.max(jnp.abs(out - ref))))

    print("KERNEL_OK")
</pallas_src>

<mosaic_0001>
module attributes {stable_mosaic.version = 11 : i64} {
  func.func @_stride1_kernel(%arg0: memref<2x16x16x64xf32, #tpu.memory_space<vmem>>, %arg1: memref<64x32xbf16, #tpu.memory_space<vmem>>, %arg2: memref<1x32xf32, #tpu.memory_space<vmem>>, %arg3: memref<1x32xf32, #tpu.memory_space<vmem>>, %arg4: memref<9x32x32xbf16, #tpu.memory_space<vmem>>, %arg5: memref<1x32xf32, #tpu.memory_space<vmem>>, %arg6: memref<1x32xf32, #tpu.memory_space<vmem>>, %arg7: memref<2x16x16x32xf32, #tpu.memory_space<vmem>>, %arg8: memref<2x18x18x32xf32, #tpu.memory_space<vmem>>) attributes {dimension_semantics = [], scalar_prefetch = 0 : i64, scratch_operands = 1 : i64, tpu.core_type = #tpu.core_type<tc>} {
    %c0 = arith.constant 0 : index
    %c0_0 = arith.constant 0 : index
    %c0_1 = arith.constant 0 : index
    %c0_2 = arith.constant 0 : index
    %0 = vector.load %arg0[%c0, %c0_0, %c0_1, %c0_2] : memref<2x16x16x64xf32, #tpu.memory_space<vmem>>, vector<2x16x16x64xf32>
    %1 = vector.shape_cast %0 : vector<2x16x16x64xf32> to vector<512x64xf32>
    %2 = arith.truncf %1 : vector<512x64xf32> to vector<512x64xbf16>
    %c0_3 = arith.constant 0 : index
    %c0_4 = arith.constant 0 : index
    %3 = vector.load %arg1[%c0_3, %c0_4] : memref<64x32xbf16, #tpu.memory_space<vmem>>, vector<64x32xbf16>
    %cst = arith.constant dense<0.000000e+00> : vector<512x32xf32>
    %4 = tpu.matmul %2, %3, %cst {dimension_numbers = #tpu.dot_dimension_numbers<[1], [0], [0], [1], [0, 0, 1, 1], [], []>} : vector<512x64xbf16>, vector<64x32xbf16>, vector<512x32xf32> -> vector<512x32xf32>
    %c0_5 = arith.constant 0 : index
    %c0_6 = arith.constant 0 : index
    %5 = vector.load %arg2[%c0_5, %c0_6] : memref<1x32xf32, #tpu.memory_space<vmem>>, vector<1x32xf32>
    %c0_7 = arith.constant 0 : index
    %c0_8 = arith.constant 0 : index
    %6 = vector.load %arg3[%c0_7, %c0_8] : memref<1x32xf32, #tpu.memory_space<vmem>>, vector<1x32xf32>
    %cst_9 = arith.constant dense<0.000000e+00> : vector<32xf32>
    %7 = vector.multi_reduction <add>, %4, %cst_9 [0] : vector<512x32xf32> to vector<32xf32>
    %8 = vector.shape_cast %7 : vector<32xf32> to vector<1x32xf32>
    %9 = arith.mulf %4, %4 : vector<512x32xf32>
    %cst_10 = arith.constant dense<0.000000e+00> : vector<32xf32>
    %10 = vector.multi_reduction <add>, %9, %cst_10 [0] : vector<512x32xf32> to vector<32xf32>
    %11 = vector.shape_cast %10 : vector<32xf32> to vector<1x32xf32>
    %cst_11 = arith.constant 0.001953125 : f32
    %12 = vector.broadcast %cst_11 : f32 to vector<1x32xf32>
    %13 = arith.mulf %8, %12 : vector<1x32xf32>
    %cst_12 = arith.constant 0.001953125 : f32
    %14 = vector.broadcast %cst_12 : f32 to vector<1x32xf32>
    %15 = arith.mulf %11, %14 : vector<1x32xf32>
    %16 = arith.mulf %13, %13 : vector<1x32xf32>
    %17 = arith.subf %15, %16 : vector<1x32xf32>
    %cst_13 = arith.constant 0.000000e+00 : f32
    %18 = vector.broadcast %cst_13 : f32 to vector<1x32xf32>
    %19 = arith.maximumf %17, %18 : vector<1x32xf32>
    %cst_14 = arith.constant 9.99999974E-6 : f32
    %20 = vector.broadcast %cst_14 : f32 to vector<1x32xf32>
    %21 = arith.addf %19, %20 : vector<1x32xf32>
    %22 = math.rsqrt %21 : vector<1x32xf32>
    %23 = arith.mulf %5, %22 : vector<1x32xf32>
    %24 = arith.mulf %13, %23 : vector<1x32xf32>
    %25 = arith.subf %6, %24 : vector<1x32xf32>
    %26 = vector.broadcast %23 : vector<1x32xf32> to vector<512x32xf32>
    %27 = arith.mulf %4, %26 : vector<512x32xf32>
    %28 = vector.broadcast %25 : vector<1x32xf32> to vector<512x32xf32>
    %29 = arith.addf %27, %28 : vector<512x32xf32>
    %cst_15 = arith.constant 0.000000e+00 : f32
    %30 = vector.broadcast %cst_15 : f32 to vector<512x32xf32>
    %31 = arith.maximumf %29, %30 : vector<512x32xf32>
    %cst_16 = arith.constant 0.000000e+00 : f32
    %32 = vector.broadcast %cst_16 : f32 to vector<2x18x18x32xf32>
    %c0_17 = arith.constant 0 : index
    %c0_18 = arith.constant 0 : index
    %c0_19 = arith.constant 0 : index
    %c0_20 = arith.constant 0 : index
    %33 = vector.load %arg8[%c0_17, %c0_18, %c0_19, %c0_20] : memref<2x18x18x32xf32, #tpu.memory_space<vmem>>, vector<2x18x18x32xf32>
    tpu.vector_store %arg8[%c0_17, %c0_18, %c0_19, %c0_20], %32 {strides = array<i32>} : memref<2x18x18x32xf32, #tpu.memory_space<vmem>>, vector<2x18x18x32xf32>,
    %34 = vector.shape_cast %31 : vector<512x32xf32> to vector<2x16x16x32xf32>
    %c0_21 = arith.constant 0 : index
    %c1 = arith.constant 1 : index
    %c1_22 = arith.constant 1 : index
    %c0_23 = arith.constant 0 : index
    %35 = vector.load %arg8[%c0_21, %c1, %c1_22, %c0_23] : memref<2x18x18x32xf32, #tpu.memory_space<vmem>>, vector<2x16x16x32xf32>
    tpu.vector_store %arg8[%c0_21, %c1, %c1_22, %c0_23], %34 {strides = array<i32>} : memref<2x18x18x32xf32, #tpu.memory_space<vmem>>, vector<2x16x16x32xf32>,
    %c0_24 = arith.constant 0 : index
    %c0_25 = arith.constant 0 : index
    %c0_26 = arith.constant 0 : index
    %c0_27 = arith.constant 0 : index
    %36 = vector.load %arg8[%c0_24, %c0_25, %c0_26, %c0_27] : memref<2x18x18x32xf32, #tpu.memory_space<vmem>>, vector<2x18x18x32xf32>
    %cst_28 = arith.constant 0.000000e+00 : f32
    %37 = vector.broadcast %cst_28 : f32 to vector<512x32xf32>
    %38 = vector.extract_strided_slice %36 {offsets = [0, 0, 0, 0], sizes = [2, 16, 16, 32], strides = [1, 1, 1, 1]} : vector<2x18x18x32xf32> to vector<2x16x16x32xf32>
    %39 = vector.shape_cast %38 : vector<2x16x16x32xf32> to vector<512x32xf32>
    %40 = arith.truncf %39 : vector<512x32xf32> to vector<512x32xbf16>
    %c0_29 = arith.constant 0 : index
    %c0_30 = arith.constant 0 : index
    %c0_31 = arith.constant 0 : index
    %41 = vector.load %arg4[%c0_29, %c0_30, %c0_31] : memref<9x32x32xbf16, #tpu.memory_space<vmem>>, vector<1x32x32xbf16>
    %42 = vector.shape_cast %41 : vector<1x32x32xbf16> to vector<32x32xbf16>
    %cst_32 = arith.constant dense<0.000000e+00> : vector<512x32xf32>
    %43 = tpu.matmul %40, %42, %cst_32 {dimension_numbers = #tpu.dot_dimension_numbers<[1], [0], [0], [1], [0, 0, 1, 1], [], []>} : vector<512x32xbf16>, vector<32x32xbf16>, vector<512x32xf32> -> vector<512x32xf32>
    %44 = arith.addf %37, %43 : vector<512x32xf32>
    %45 = vector.extract_strided_slice %36 {offsets = [0, 0, 1, 0], sizes = [2, 16, 16, 32], strides = [1, 1, 1, 1]} : vector<2x18x18x32xf32> to vector<2x16x16x32xf32>
    %46 = vector.shape_cast %45 : vector<2x16x16x32xf32> to vector<512x32xf32>
    %47 = arith.truncf %46 : vector<512x32xf32> to vector<512x32xbf16>
    %c1_33 = arith.constant 1 : index
    %c0_34 = arith.constant 0 : index
    %c0_35 = arith.constant 0 : index
    %48 = vector.load %arg4[%c1_33, %c0_34, %c0_35] : memref<9x32x32xbf16, #tpu.memory_space<vmem>>, vector<1x32x32xbf16>
    %49 = vector.shape_cast %48 : vector<1x32x32xbf16> to vector<32x32xbf16>
    %cst_36 = arith.constant dense<0.000000e+00> : vector<512x32xf32>
    %50 = tpu.matmul %47, %49, %cst_36 {dimension_numbers = #tpu.dot_dimension_numbers<[1], [0], [0], [1], [0, 0, 1, 1], [], []>} : vector<512x32xbf16>, vector<32x32xbf16>, vector<512x32xf32> -> vector<512x32xf32>
    %51 = arith.addf %44, %50 : vector<512x32xf32>
    %52 = vector.extract_strided_slice %36 {offsets = [0, 0, 2, 0], sizes = [2, 16, 16, 32], strides = [1, 1, 1, 1]} : vector<2x18x18x32xf32> to vector<2x16x16x32xf32>
    %53 = vector.shape_cast %52 : vector<2x16x16x32xf32> to vector<512x32xf32>
    %54 = arith.truncf %53 : vector<512x32xf32> to vector<512x32xbf16>
    %c2 = arith.constant 2 : index
    %c0_37 = arith.constant 0 : index
    %c0_38 = arith.constant 0 : index
    %55 = vector.load %arg4[%c2, %c0_37, %c0_38] : memref<9x32x32xbf16, #tpu.memory_space<vmem>>, vector<1x32x32xbf16>
    %56 = vector.shape_cast %55 : vector<1x32x32xbf16> to vector<32x32xbf16>
    %cst_39 = arith.constant dense<0.000000e+00> : vector<512x32xf32>
    %57 = tpu.matmul %54, %56, %cst_39 {dimension_numbers = #tpu.dot_dimension_numbers<[1], [0], [0], [1], [0, 0, 1, 1], [], []>} : vector<512x32xbf16>, vector<32x32xbf16>, vector<512x32xf32> -> vector<512x32xf32>
    %58 = arith.addf %51, %57 : vector<512x32xf32>
    %59 = vector.extract_strided_slice %36 {offsets = [0, 1, 0, 0], sizes = [2, 16, 16, 32], strides = [1, 1, 1, 1]} : vector<2x18x18x32xf32> to vector<2x16x16x32xf32>
    %60 = vector.shape_cast %59 : vector<2x16x16x32xf32> to vector<512x32xf32>
    %61 = arith.truncf %60 : vector<512x32xf32> to vector<512x32xbf16>
    %c3 = arith.constant 3 : index
    %c0_40 = arith.constant 0 : index
    %c0_41 = arith.constant 0 : index
    %62 = vector.load %arg4[%c3, %c0_40, %c0_41] : memref<9x32x32xbf16, #tpu.memory_space<vmem>>, vector<1x32x32xbf16>
    %63 = vector.shape_cast %62 : vector<1x32x32xbf16> to vector<32x32xbf16>
    %cst_42 = arith.constant dense<0.000000e+00> : vector<512x32xf32>
    %64 = tpu.matmul %61, %63, %cst_42 {dimension_numbers = #tpu.dot_dimension_numbers<[1], [0], [0], [1], [0, 0, 1, 1], [], []>} : vector<512x32xbf16>, vector<32x32xbf16>, vector<512x32xf32> -> vector<512x32xf32>
    %65 = arith.addf %58, %64 : vector<512x32xf32>
    %66 = vector.extract_strided_slice %36 {offsets = [0, 1, 1, 0], sizes = [2, 16, 16, 32], strides = [1, 1, 1, 1]} : vector<2x18x18x32xf32> to vector<2x16x16x32xf32>
    %67 = vector.shape_cast %66 : vector<2x16x16x32xf32> to vector<512x32xf32>
    %68 = arith.truncf %67 : vector<512x32xf32> to vector<512x32xbf16>
    %c4 = arith.constant 4 : index
    %c0_43 = arith.constant 0 : index
    %c0_44 = arith.constant 0 : index
    %69 = vector.load %arg4[%c4, %c0_43, %c0_44] : memref<9x32x32xbf16, #tpu.memory_space<vmem>>, vector<1x32x32xbf16>
    %70 = vector.shape_cast %69 : vector<1x32x32xbf16> to vector<32x32xbf16>
    %cst_45 = arith.constant dense<0.000000e+00> : vector<512x32xf32>
    %71 = tpu.matmul %68, %70, %cst_45 {dimension_numbers = #tpu.dot_dimension_numbers<[1], [0], [0], [1], [0, 0, 1, 1], [], []>} : vector<512x32xbf16>, vector<32x32xbf16>, vector<512x32xf32> -> vector<512x32xf32>
    %72 = arith.addf %65, %71 : vector<512x32xf32>
    %73 = vector.extract_strided_slice %36 {offsets = [0, 1, 2, 0], sizes = [2, 16, 16, 32], strides = [1, 1, 1, 1]} : vector<2x18x18x32xf32> to vector<2x16x16x32xf32>
    %74 = vector.shape_cast %73 : vector<2x16x16x32xf32> to vector<512x32xf32>
    %75 = arith.truncf %74 : vector<512x32xf32> to vector<512x32xbf16>
    %c5 = arith.constant 5 : index
    %c0_46 = arith.constant 0 : index
    %c0_47 = arith.constant 0 : index
    %76 = vector.load %arg4[%c5, %c0_46, %c0_47] : memref<9x32x32xbf16, #tpu.memory_space<vmem>>, vector<1x32x32xbf16>
    %77 = vector.shape_cast %76 : vector<1x32x32xbf16> to vector<32x32xbf16>
    %cst_48 = arith.constant dense<0.000000e+00> : vector<512x32xf32>
    %78 = tpu.matmul %75, %77, %cst_48 {dimension_numbers = #tpu.dot_dimension_numbers<[1], [0], [0], [1], [0, 0, 1, 1], [], []>} : vector<512x32xbf16>, vector<32x32xbf16>, vector<512x32xf32> -> vector<512x32xf32>
    %79 = arith.addf %72, %78 : vector<512x32xf32>
    %80 = vector.extract_strided_slice %36 {offsets = [0, 2, 0, 0], sizes = [2, 16, 16, 32], strides = [1, 1, 1, 1]} : vector<2x18x18x32xf32> to vector<2x16x16x32xf32>
    %81 = vector.shape_cast %80 : vector<2x16x16x32xf32> to vector<512x32xf32>
    %82 = arith.truncf %81 : vector<512x32xf32> to vector<512x32xbf16>
    %c6 = arith.constant 6 : index
    %c0_49 = arith.constant 0 : index
    %c0_50 = arith.constant 0 : index
    %83 = vector.load %arg4[%c6, %c0_49, %c0_50] : memref<9x32x32xbf16, #tpu.memory_space<vmem>>, vector<1x32x32xbf16>
    %84 = vector.shape_cast %83 : vector<1x32x32xbf16> to vector<32x32xbf16>
    %cst_51 = arith.constant dense<0.000000e+00> : vector<512x32xf32>
    %85 = tpu.matmul %82, %84, %cst_51 {dimension_numbers = #tpu.dot_dimension_numbers<[1], [0], [0], [1], [0, 0, 1, 1], [], []>} : vector<512x32xbf16>, vector<32x32xbf16>, vector<512x32xf32> -> vector<512x32xf32>
    %86 = arith.addf %79, %85 : vector<512x32xf32>
    %87 = vector.extract_strided_slice %36 {offsets = [0, 2, 1, 0], sizes = [2, 16, 16, 32], strides = [1, 1, 1, 1]} : vector<2x18x18x32xf32> to vector<2x16x16x32xf32>
    %88 = vector.shape_cast %87 : vector<2x16x16x32xf32> to vector<512x32xf32>
    %89 = arith.truncf %88 : vector<512x32xf32> to vector<512x32xbf16>
    %c7 = arith.constant 7 : index
    %c0_52 = arith.constant 0 : index
    %c0_53 = arith.constant 0 : index
    %90 = vector.load %arg4[%c7, %c0_52, %c0_53] : memref<9x32x32xbf16, #tpu.memory_space<vmem>>, vector<1x32x32xbf16>
    %91 = vector.shape_cast %90 : vector<1x32x32xbf16> to vector<32x32xbf16>
    %cst_54 = arith.constant dense<0.000000e+00> : vector<512x32xf32>
    %92 = tpu.matmul %89, %91, %cst_54 {dimension_numbers = #tpu.dot_dimension_numbers<[1], [0], [0], [1], [0, 0, 1, 1], [], []>} : vector<512x32xbf16>, vector<32x32xbf16>, vector<512x32xf32> -> vector<512x32xf32>
    %93 = arith.addf %86, %92 : vector<512x32xf32>
    %94 = vector.extract_strided_slice %36 {offsets = [0, 2, 2, 0], sizes = [2, 16, 16, 32], strides = [1, 1, 1, 1]} : vector<2x18x18x32xf32> to vector<2x16x16x32xf32>
    %95 = vector.shape_cast %94 : vector<2x16x16x32xf32> to vector<512x32xf32>
    %96 = arith.truncf %95 : vector<512x32xf32> to vector<512x32xbf16>
    %c8 = arith.constant 8 : index
    %c0_55 = arith.constant 0 : index
    %c0_56 = arith.constant 0 : index
    %97 = vector.load %arg4[%c8, %c0_55, %c0_56] : memref<9x32x32xbf16, #tpu.memory_space<vmem>>, vector<1x32x32xbf16>
    %98 = vector.shape_cast %97 : vector<1x32x32xbf16> to vector<32x32xbf16>
    %cst_57 = arith.constant dense<0.000000e+00> : vector<512x32xf32>
    %99 = tpu.matmul %96, %98, %cst_57 {dimension_numbers = #tpu.dot_dimension_numbers<[1], [0], [0], [1], [0, 0, 1, 1], [], []>} : vector<512x32xbf16>, vector<32x32xbf16>, vector<512x32xf32> -> vector<512x32xf32>
    %100 = arith.addf %93, %99 : vector<512x32xf32>
    %c0_58 = arith.constant 0 : index
    %c0_59 = arith.constant 0 : index
    %101 = vector.load %arg5[%c0_58, %c0_59] : memref<1x32xf32, #tpu.memory_space<vmem>>, vector<1x32xf32>
    %c0_60 = arith.constant 0 : index
    %c0_61 = arith.constant 0 : index
    %102 = vector.load %arg6[%c0_60, %c0_61] : memref<1x32xf32, #tpu.memory_space<vmem>>, vector<1x32xf32>
    %cst_62 = arith.constant dense<0.000000e+00> : vector<32xf32>
    %103 = vector.multi_reduction <add>, %100, %cst_62 [0] : vector<512x32xf32> to vector<32xf32>
    %104 = vector.shape_cast %103 : vector<32xf32> to vector<1x32xf32>
    %105 = arith.mulf %100, %100 : vector<512x32xf32>
    %cst_63 = arith.constant dense<0.000000e+00> : vector<32xf32>
    %106 = vector.multi_reduction <add>, %105, %cst_63 [0] : vector<512x32xf32> to vector<32xf32>
    %107 = vector.shape_cast %106 : vector<32xf32> to vector<1x32xf32>
    %cst_64 = arith.constant 0.001953125 : f32
    %108 = vector.broadcast %cst_64 : f32 to vector<1x32xf32>
    %109 = arith.mulf %104, %108 : vector<1x32xf32>
    %cst_65 = arith.constant 0.001953125 : f32
    %110 = vector.broadcast %cst_65 : f32 to vector<1x32xf32>
    %111 = arith.mulf %107, %110 : vector<1x32xf32>
    %112 = arith.mulf %109, %109 : vector<1x32xf32>
    %113 = arith.subf %111, %112 : vector<1x32xf32>
    %cst_66 = arith.constant 0.000000e+00 : f32
    %114 = vector.broadcast %cst_66 : f32 to vector<1x32xf32>
    %115 = arith.maximumf %113, %114 : vector<1x32xf32>
    %cst_67 = arith.constant 9.99999974E-6 : f32
    %116 = vector.broadcast %cst_67 : f32 to vector<1x32xf32>
    %117 = arith.addf %115, %116 : vector<1x32xf32>
    %118 = math.rsqrt %117 : vector<1x32xf32>
    %119 = arith.mulf %101, %118 : vector<1x32xf32>
    %120 = arith.mulf %109, %119 : vector<1x32xf32>
    %121 = arith.subf %102, %120 : vector<1x32xf32>
    %122 = vector.broadcast %119 : vector<1x32xf32> to vector<512x32xf32>
    %123 = arith.mulf %100, %122 : vector<512x32xf32>
    %124 = vector.broadcast %121 : vector<1x32xf32> to vector<512x32xf32>
    %125 = arith.addf %123, %124 : vector<512x32xf32>
    %cst_68 = arith.constant 0.000000e+00 : f32
    %126 = vector.broadcast %cst_68 : f32 to vector<512x32xf32>
    %127 = arith.maximumf %125, %126 : vector<512x32xf32>
    %128 = vector.shape_cast %127 : vector<512x32xf32> to vector<2x16x16x32xf32>
    %c0_69 = arith.constant 0 : index
    %c0_70 = arith.constant 0 : index
    %c0_71 = arith.constant 0 : index
    %c0_72 = arith.constant 0 : index
    %129 = vector.load %arg7[%c0_69, %c0_70, %c0_71, %c0_72] : memref<2x16x16x32xf32, #tpu.memory_space<vmem>>, vector<2x16x16x32xf32>
    tpu.vector_store %arg7[%c0_69, %c0_70, %c0_71, %c0_72], %128 {strides = array<i32>} : memref<2x16x16x32xf32, #tpu.memory_space<vmem>>, vector<2x16x16x32xf32>,
    return
  }
}

</mosaic_0001>

<llo_original>
// kernel: tpu_custom_call.1
$region0: #{tpu_custom_call.1}
  #allocation0 [shape = 'u32[]', space=smem, size = 0x4, offset = 0x4, fixed_abs, tag = 'smem constant byte address 0x4 - core index']
  #allocation1 [shape = 'u32[144,128]{1,0:T(1,128)}', space=vmem, size = 0x12000, scoped, tag = 'internal scratch']
  #allocation2 [shape = 'f32[2,18,18,32]{3,2,1,0:T(8,128)}', space=vmem, size = 0x6c000, scoped, tag = 'scratch operand']
  %s0 = inlined_call_operand.hbm [shape: f32[2,16,16,64], index: 0, kind: input, shape index: {}]
  %s1 = inlined_call_operand.vmem [shape: bf16[64,32], index: 1, kind: input, shape index: {}]
  %s2 = inlined_call_operand.vmem [shape: f32[1,32], index: 2, kind: input, shape index: {}]
  %s3 = inlined_call_operand.vmem [shape: f32[1,32], index: 3, kind: input, shape index: {}]
  %s4 = inlined_call_operand.hbm [shape: bf16[9,32,32], index: 4, kind: input, shape index: {}]
  %s5 = inlined_call_operand.vmem [shape: f32[1,32], index: 5, kind: input, shape index: {}]
  %s6 = inlined_call_operand.vmem [shape: f32[1,32], index: 6, kind: input, shape index: {}]
  %s7 = inlined_call_operand.hbm [shape: f32[2,16,16,32], index: 7, kind: output, shape index: {}]
  %s8 = sld [smem:[#allocation0]]
  $region46: #{tpu_custom_call.1} parent=0
    _
  %s10 = ssub.s32 1, %s8
  %s11 = scalar_select 0, %s10, %s8
  $region1: #{tpu_custom_call.1} parent=0
    #allocation3 [shape = 'u8[262144]{0}', space=vmem, size = 0x40000, scoped, tag = 'input window, operand 0, single buffered']
    #allocation4 [shape = 's32[1]{0}', space=sflag, size = 0x4, scoped, tag = 'scoped memory for tpu_custom_call.1']
    #allocation5 [shape = 's32[1]{0}', space=sflag, size = 0x4, scoped, tag = 'scoped memory for tpu_custom_call.1']
    #allocation6 [shape = 'u8[73728]{0}', space=vmem, size = 0x12000, scoped, tag = 'input window, operand 4, single buffered']
    #allocation7 [shape = 's32[1]{0}', space=sflag, size = 0x4, scoped, tag = 'scoped memory for tpu_custom_call.1']
    #allocation8 [shape = 'u8[262144]{0}', space=vmem, size = 0x40000, scoped, tag = 'output window, operand 0, single buffered']
    %12 = vsyncpa [#allocation4], 0
    %13 = vsyncpa [#allocation7], 0
    %14 = vsyncpa [#allocation5], 0
    // Predicated region
    $region2: #{tpu_custom_call.1} parent=1 // pred_check
      _
    $region3: #{tpu_custom_call.1} parent=1 // pred_check_branch
      %16 = sbr.rel (0) target = $region5
    $region4: #{tpu_custom_call.1} parent=1 // pred_region
      %s18 = ssub.s32 8192, 8192
      %19 = vsyncadd [#allocation4], %s18
      %s20 = sshll.u32 [#allocation3], 4
      %s21 = int_to_ptr.vmem [resolvable:$true] %s20
      %26 = dma.hbm_to_vmem [thread:$0]  %s0, 8192, %s21, [#allocation4], 128, 128, 8
    $region5: #{tpu_custom_call.1} parent=1 // pred_fallthru
      _
    // Predicated region
    $region6: #{tpu_custom_call.1} parent=1 // pred_check
      _
    $region7: #{tpu_custom_call.1} parent=1 // pred_check_branch
      %28 = sbr.rel (0) target = $region9
    $region8: #{tpu_custom_call.1} parent=1 // pred_region
      _
    $region9: #{tpu_custom_call.1} parent=1 // pred_fallthru
      _
    // Predicated region
    $region10: #{tpu_custom_call.1} parent=1 // pred_check
      _
    $region11: #{tpu_custom_call.1} parent=1 // pred_check_branch
      %30 = sbr.rel (0) target = $region13
    $region12: #{tpu_custom_call.1} parent=1 // pred_region
      _
    $region13: #{tpu_custom_call.1} parent=1 // pred_fallthru
      _
    // Predicated region
    $region14: #{tpu_custom_call.1} parent=1 // pred_check
      _
    $region15: #{tpu_custom_call.1} parent=1 // pred_check_branch
      %32 = sbr.rel (0) target = $region17
    $region16: #{tpu_custom_call.1} parent=1 // pred_region
      _
    $region17: #{tpu_custom_call.1} parent=1 // pred_fallthru
      _
    // Predicated region
    $region18: #{tpu_custom_call.1} parent=1 // pred_check
      _
    $region19: #{tpu_custom_call.1} parent=1 // pred_check_branch
      %34 = sbr.rel (0) target = $region21
    $region20: #{tpu_custom_call.1} parent=1 // pred_region
      %s36 = ssub.s32 2304, 2304
      %37 = vsyncadd [#allocation7], %s36
      %s38 = sshll.u32 [#allocation6], 4
      %s39 = int_to_ptr.vmem [resolvable:$true] %s38
      %44 = dma.hbm_to_vmem [thread:$0]  %s4, 2304, %s39, [#allocation7], 64, 64, 4
    $region21: #{tpu_custom_call.1} parent=1 // pred_fallthru
      _
    // Predicated region
    $region22: #{tpu_custom_call.1} parent=1 // pred_check
      _
    $region23: #{tpu_custom_call.1} parent=1 // pred_check_branch
      %46 = sbr.rel (0) target = $region25
    $region24: #{tpu_custom_call.1} parent=1 // pred_region
      _
    $region25: #{tpu_custom_call.1} parent=1 // pred_fallthru
      _
    // Predicated region
    $region26: #{tpu_custom_call.1} parent=1 // pred_check
      _
    $region27: #{tpu_custom_call.1} parent=1 // pred_check_branch
      %48 = sbr.rel (0) target = $region29
    $region28: #{tpu_custom_call.1} parent=1 // pred_region
      _
    $region29: #{tpu_custom_call.1} parent=1 // pred_fallthru
      _
    // Predicated region
    $region30: #{tpu_custom_call.1} parent=1 // pred_check
      _
    $region31: #{tpu_custom_call.1} parent=1 // pred_check_branch
      %50 = sbr.rel (0) target = $region33
    $region32: #{tpu_custom_call.1} parent=1 // pred_region
      %51 = dma.done [#allocation4], 8192
    $region33: #{tpu_custom_call.1} parent=1 // pred_fallthru
      _
    // Predicated region
    $region34: #{tpu_custom_call.1} parent=1 // pred_check
      _
    $region35: #{tpu_custom_call.1} parent=1 // pred_check_branch
      %53 = sbr.rel (0) target = $region37
    $region36: #{tpu_custom_call.1} parent=1 // pred_region
      %54 = dma.done [#allocation7], 2304
    $region37: #{tpu_custom_call.1} parent=1 // pred_fallthru
      _
    %v56 = vld [vmem:[#allocation3] sm:$0xff]
    %v57 = vld [vmem:[#allocation3 + $0x8] sm:$0xff]
    %v58 = vld [vmem:[#allocation3 + $0x10] sm:$0xff]
    %v59 = vld [vmem:[#allocation3 + $0x18] sm:$0xff]
    %v60 = vld [vmem:[#allocation3 + $0x20] sm:$0xff]
    %v61 = vld [vmem:[#allocation3 + $0x28] sm:$0xff]
    %v62 = vld [vmem:[#allocation3 + $0x30] sm:$0xff]
    %v63 = vld [vmem:[#allocation3 + $0x38] sm:$0xff]
    %v64 = vld [vmem:[#allocation3 + $0x40] sm:$0xff]
    %v65 = vld [vmem:[#allocation3 + $0x48] sm:$0xff]
    %v66 = vld [vmem:[#allocation3 + $0x50] sm:$0xff]
    %v67 = vld [vmem:[#allocation3 + $0x58] sm:$0xff]
    %v68 = vld [vmem:[#allocation3 + $0x60] sm:$0xff]
    %v69 = vld [vmem:[#allocation3 + $0x68] sm:$0xff]
    %v70 = vld [vmem:[#allocation3 + $0x70] sm:$0xff]
    %v71 = vld [vmem:[#allocation3 + $0x78] sm:$0xff]
    %v72 = vld [vmem:[#allocation3 + $0x80] sm:$0xff]
    %v73 = vld [vmem:[#allocation3 + $0x88] sm:$0xff]
    %v74 = vld [vmem:[#allocation3 + $0x90] sm:$0xff]
    %v75 = vld [vmem:[#allocation3 + $0x98] sm:$0xff]
    %v76 = vld [vmem:[#allocation3 + $0xa0] sm:$0xff]
    %v77 = vld [vmem:[#allocation3 + $0xa8] sm:$0xff]
    %v78 = vld [vmem:[#allocation3 + $0xb0] sm:$0xff]
    %v79 = vld [vmem:[#allocation3 + $0xb8] sm:$0xff]
    %v80 = vld [vmem:[#allocation3 + $0xc0] sm:$0xff]
    %v81 = vld [vmem:[#allocation3 + $0xc8] sm:$0xff]
    %v82 = vld [vmem:[#allocation3 + $0xd0] sm:$0xff]
    %v83 = vld [vmem:[#allocation3 + $0xd8] sm:$0xff]
    %v84 = vld [vmem:[#allocation3 + $0xe0] sm:$0xff]
    %v85 = vld [vmem:[#allocation3 + $0xe8] sm:$0xff]
    %v86 = vld [vmem:[#allocation3 + $0xf0] sm:$0xff]
    %v87 = vld [vmem:[#allocation3 + $0xf8] sm:$0xff]
    %v88 = vld [vmem:[#allocation3 + $0x100] sm:$0xff]
    %v89 = vld [vmem:[#allocation3 + $0x108] sm:$0xff]
    %v90 = vld [vmem:[#allocation3 + $0x110] sm:$0xff]
    %v91 = vld [vmem:[#allocation3 + $0x118] sm:$0xff]
    %v92 = vld [vmem:[#allocation3 + $0x120] sm:$0xff]
    %v93 = vld [vmem:[#allocation3 + $0x128] sm:$0xff]
    %v94 = vld [vmem:[#allocation3 + $0x130] sm:$0xff]
    %v95 = vld [vmem:[#allocation3 + $0x138] sm:$0xff]
    %v96 = vld [vmem:[#allocation3 + $0x140] sm:$0xff]
    %v97 = vld [vmem:[#allocation3 + $0x148] sm:$0xff]
    %v98 = vld [vmem:[#allocation3 + $0x150] sm:$0xff]
    %v99 = vld [vmem:[#allocation3 + $0x158] sm:$0xff]
    %v100 = vld [vmem:[#allocation3 + $0x160] sm:$0xff]
    %v101 = vld [vmem:[#allocation3 + $0x168] sm:$0xff]
    %v102 = vld [vmem:[#allocation3 + $0x170] sm:$0xff]
    %v103 = vld [vmem:[#allocation3 + $0x178] sm:$0xff]
    %v104 = vld [vmem:[#allocation3 + $0x180] sm:$0xff]
    %v105 = vld [vmem:[#allocation3 + $0x188] sm:$0xff]
    %v106 = vld [vmem:[#allocation3 + $0x190] sm:$0xff]
    %v107 = vld [vmem:[#allocation3 + $0x198] sm:$0xff]
    %v108 = vld [vmem:[#allocation3 + $0x1a0] sm:$0xff]
    %v109 = vld [vmem:[#allocation3 + $0x1a8] sm:$0xff]
    %v110 = vld [vmem:[#allocation3 + $0x1b0] sm:$0xff]
    %v111 = vld [vmem:[#allocation3 + $0x1b8] sm:$0xff]
    %v112 = vld [vmem:[#allocation3 + $0x1c0] sm:$0xff]
    %v113 = vld [vmem:[#allocation3 + $0x1c8] sm:$0xff]
    %v114 = vld [vmem:[#allocation3 + $0x1d0] sm:$0xff]
    %v115 = vld [vmem:[#allocation3 + $0x1d8] sm:$0xff]
    %v116 = vld [vmem:[#allocation3 + $0x1e0] sm:$0xff]
    %v117 = vld [vmem:[#allocation3 + $0x1e8] sm:$0xff]
    %v118 = vld [vmem:[#allocation3 + $0x1f0] sm:$0xff]
    %v119 = vld [vmem:[#allocation3 + $0x1f8] sm:$0xff]
    %v120 = vpack.c.bf16 %v57, %v56
    %v121 = vpack.c.bf16 %v59, %v58
    %v122 = vpack.c.bf16 %v61, %v60
    %v123 = vpack.c.bf16 %v63, %v62
    %v124 = vpack.c.bf16 %v65, %v64
    %v125 = vpack.c.bf16 %v67, %v66
    %v126 = vpack.c.bf16 %v69, %v68
    %v127 = vpack.c.bf16 %v71, %v70
    %v128 = vpack.c.bf16 %v73, %v72
    %v129 = vpack.c.bf16 %v75, %v74
    %v130 = vpack.c.bf16 %v77, %v76
    %v131 = vpack.c.bf16 %v79, %v78
    %v132 = vpack.c.bf16 %v81, %v80
    %v133 = vpack.c.bf16 %v83, %v82
    %v134 = vpack.c.bf16 %v85, %v84
    %v135 = vpack.c.bf16 %v87, %v86
    %v136 = vpack.c.bf16 %v89, %v88
    %v137 = vpack.c.bf16 %v91, %v90
    %v138 = vpack.c.bf16 %v93, %v92
    %v139 = vpack.c.bf16 %v95, %v94
    %v140 = vpack.c.bf16 %v97, %v96
    %v141 = vpack.c.bf16 %v99, %v98
    %v142 = vpack.c.bf16 %v101, %v100
    %v143 = vpack.c.bf16 %v103, %v102
    %v144 = vpack.c.bf16 %v105, %v104
    %v145 = vpack.c.bf16 %v107, %v106
    %v146 = vpack.c.bf16 %v109, %v108
    %v147 = vpack.c.bf16 %v111, %v110
    %v148 = vpack.c.bf16 %v113, %v112
    %v149 = vpack.c.bf16 %v115, %v114
    %v150 = vpack.c.bf16 %v117, %v116
    %v151 = vpack.c.bf16 %v119, %v118
    %v152 = vld [vmem:[%s1] sm:$0xf]
    %v153 = vld [vmem:[%s1 + $0x4] sm:$0xf]
    %v154 = vld [vmem:[%s1 + $0x8] sm:$0xf]
    %v155 = vld [vmem:[%s1 + $0xc] sm:$0xf]
    %v156 = vld [vmem:[%s1 + $0x10] sm:$0xf]
    %v157 = vld [vmem:[%s1 + $0x14] sm:$0xf]
    %v158 = vld [vmem:[%s1 + $0x18] sm:$0xf]
    %v159 = vld [vmem:[%s1 + $0x1c] sm:$0xf]
    %v168 = vunpack.c.l.b16 %v152
    %v169 = vunpack.c.l.b16 %v153
    %v170 = vunpack.c.l.b16 %v154
    %v171 = vunpack.c.l.b16 %v155
    %v172 = vunpack.c.l.b16 %v156
    %v173 = vunpack.c.l.b16 %v157
    %v174 = vunpack.c.l.b16 %v158
    %v175 = vunpack.c.l.b16 %v159
    %v176 = vpack.c.b16 %v169, %v168
    %v177 = vpack.c.b16 %v171, %v170
    %v178 = vpack.c.b16 %v173, %v172
    %v179 = vpack.c.b16 %v175, %v174
    %vm184 = vcmask 523264
    %v186 = vsel %vm184, %v120, 0
    %v189 = vsel %vm184, %v121, 0
    %v192 = vsel %vm184, %v122, 0
    %v195 = vsel %vm184, %v123, 0
    %v198 = vsel %vm184, %v124, 0
    %v201 = vsel %vm184, %v125, 0
    %v204 = vsel %vm184, %v126, 0
    %v207 = vsel %vm184, %v127, 0
    %v210 = vsel %vm184, %v128, 0
    %v213 = vsel %vm184, %v129, 0
    %v216 = vsel %vm184, %v130, 0
    %v219 = vsel %vm184, %v131, 0
    %v222 = vsel %vm184, %v132, 0
    %v225 = vsel %vm184, %v133, 0
    %v228 = vsel %vm184, %v134, 0
    %v231 = vsel %vm184, %v135, 0
    %v234 = vsel %vm184, %v136, 0
    %v237 = vsel %vm184, %v137, 0
    %v240 = vsel %vm184, %v138, 0
    %v243 = vsel %vm184, %v139, 0
    %v246 = vsel %vm184, %v140, 0
    %v249 = vsel %vm184, %v141, 0
    %v252 = vsel %vm184, %v142, 0
    %v255 = vsel %vm184, %v143, 0
    %v258 = vsel %vm184, %v144, 0
    %v261 = vsel %vm184, %v145, 0
    %v264 = vsel %vm184, %v146, 0
    %v267 = vsel %vm184, %v147, 0
    %v270 = vsel %vm184, %v148, 0
    %v273 = vsel %vm184, %v149, 0
    %v276 = vsel %vm184, %v150, 0
    %v279 = vsel %vm184, %v151, 0
    %281 = vmatprep.subr.bf16.mxu0 0
    %282 = vmatpush1.bf16.msra.mxu0 %v176
    %283 = vmatprep.subr.bf16.mxu0 0
    %284 = vmatpush1.bf16.msra.mxu0 %v177
    %285 = vmatprep.subr.bf16.mxu0 0
    %286 = vmatpush1.bf16.msra.mxu0 %v178
    %287 = vmatprep.subr.bf16.mxu0 0
    %288 = vmatpush1.bf16.msra.mxu0 %v179
    %289 = vmatprep.subr.bf16.mxu0 0
    %290 = vmatpush1.bf16.msra.mxu0 0
    %291 = vmatprep.subr.bf16.mxu0 0
    %292 = vmatpush1.bf16.msra.mxu0 0
    %293 = vmatprep.subr.bf16.mxu0 0
    %294 = vmatpush1.bf16.msra.mxu0 0
    %295 = vmatprep.subr.bf16.mxu0 0
    %296 = vmatpush1.bf16.msra.mxu0 0
    %297 = vmatprep.subr.bf16.mxu0 0
    %298 = vmatpush1.bf16.msra.mxu0 0
    %299 = vmatprep.subr.bf16.mxu0 0
    %300 = vmatpush1.bf16.msra.mxu0 0
    %301 = vmatprep.subr.bf16.mxu0 0
    %302 = vmatpush1.bf16.msra.mxu0 0
    %303 = vmatprep.subr.bf16.mxu0 0
    %304 = vmatpush1.bf16.msra.mxu0 0
    %305 = vmatprep.subr.bf16.mxu0 0
    %306 = vmatpush1.bf16.msra.mxu0 0
    %307 = vmatprep.subr.bf16.mxu0 0
    %308 = vmatpush1.bf16.msra.mxu0 0
    %309 = vmatprep.subr.bf16.mxu0 0
    %310 = vmatpush1.bf16.msra.mxu0 0
    %311 = vmatprep.subr.bf16.mxu0 0
    %312 = vmatpush1.bf16.msra.mxu0 0
    %313 = vmatprep.mubr.bf16.mxu0 0
    %314 = vmatmul.mubr.bf16.gmra.mrb[0].mxu0 %v186
    %v315 = vpop.f32.mrb[0].mxu0
    %v316 = vadd.f32 0.0, %v315
    %v317 = vpop.f32.mrb[0].mxu0
    %v318 = vpop.f32.mrb[0].mxu0
    %v319 = vadd.f32 0.0, %v318
    %v320 = vpop.f32.mrb[0].mxu0
    %321 = vmatprep.mubr.bf16.mxu0 0
    %322 = vmatmul.mubr.bf16.gmra.mrb[0].mxu0 %v189
    %v323 = vpop.f32.mrb[0].mxu0
    %v324 = vadd.f32 0.0, %v323
    %v325 = vpop.f32.mrb[0].mxu0
    %v326 = vpop.f32.mrb[0].mxu0
    %v327 = vadd.f32 0.0, %v326
    %v328 = vpop.f32.mrb[0].mxu0
    %329 = vmatprep.mubr.bf16.mxu0 0
    %330 = vmatmul.mubr.bf16.gmra.mrb[0].mxu0 %v192
    %v331 = vpop.f32.mrb[0].mxu0
    %v332 = vadd.f32 0.0, %v331
    %v333 = vpop.f32.mrb[0].mxu0
    %v334 = vpop.f32.mrb[0].mxu0
    %v335 = vadd.f32 0.0, %v334
    %v336 = vpop.f32.mrb[0].mxu0
    %337 = vmatprep.mubr.bf16.mxu0 0
    %338 = vmatmul.mubr.bf16.gmra.mrb[0].mxu0 %v195
    %v339 = vpop.f32.mrb[0].mxu0
    %v340 = vadd.f32 0.0, %v339
    %v341 = vpop.f32.mrb[0].mxu0
    %v342 = vpop.f32.mrb[0].mxu0
    %v343 = vadd.f32 0.0, %v342
    %v344 = vpop.f32.mrb[0].mxu0
    %345 = vmatprep.mubr.bf16.mxu0 0
    %346 = vmatmul.mubr.bf16.gmra.mrb[0].mxu0 %v198
    %v347 = vpop.f32.mrb[0].mxu0
    %v348 = vadd.f32 0.0, %v347
    %v349 = vpop.f32.mrb[0].mxu0
    %v350 = vpop.f32.mrb[0].mxu0
    %v351 = vadd.f32 0.0, %v350
    %v352 = vpop.f32.mrb[0].mxu0
    %353 = vmatprep.mubr.bf16.mxu0 0
    %354 = vmatmul.mubr.bf16.gmra.mrb[0].mxu0 %v201
    %v355 = vpop.f32.mrb[0].mxu0
    %v356 = vadd.f32 0.0, %v355
    %v357 = vpop.f32.mrb[0].mxu0
    %v358 = vpop.f32.mrb[0].mxu0
    %v359 = vadd.f32 0.0, %v358
    %v360 = vpop.f32.mrb[0].mxu0
    %361 = vmatprep.mubr.bf16.mxu0 0
    %362 = vmatmul.mubr.bf16.gmra.mrb[0].mxu0 %v204
    %v363 = vpop.f32.mrb[0].mxu0
    %v364 = vadd.f32 0.0, %v363
    %v365 = vpop.f32.mrb[0].mxu0
    %v366 = vpop.f32.mrb[0].mxu0
    %v367 = vadd.f32 0.0, %v366
    %v368 = vpop.f32.mrb[0].mxu0
    %369 = vmatprep.mubr.bf16.mxu0 0
    %370 = vmatmul.mubr.bf16.gmra.mrb[0].mxu0 %v207
    %v371 = vpop.f32.mrb[0].mxu0
    %v372 = vadd.f32 0.0, %v371
    %v373 = vpop.f32.mrb[0].mxu0
    %v374 = vpop.f32.mrb[0].mxu0
    %v375 = vadd.f32 0.0, %v374
    %v376 = vpop.f32.mrb[0].mxu0
    %377 = vmatprep.mubr.bf16.mxu0 0
    %378 = vmatmul.mubr.bf16.gmra.mrb[0].mxu0 %v210
    %v379 = vpop.f32.mrb[0].mxu0
    %v380 = vadd.f32 0.0, %v379
    %v381 = vpop.f32.mrb[0].mxu0
    %v382 = vpop.f32.mrb[0].mxu0
    %v383 = vadd.f32 0.0, %v382
    %v384 = vpop.f32.mrb[0].mxu0
    %385 = vmatprep.mubr.bf16.mxu0 0
    %386 = vmatmul.mubr.bf16.gmra.mrb[0].mxu0 %v213
    %v387 = vpop.f32.mrb[0].mxu0
    %v388 = vadd.f32 0.0, %v387
    %v389 = vpop.f32.mrb[0].mxu0
    %v390 = vpop.f32.mrb[0].mxu0
    %v391 = vadd.f32 0.0, %v390
    %v392 = vpop.f32.mrb[0].mxu0
    %393 = vmatprep.mubr.bf16.mxu0 0
    %394 = vmatmul.mubr.bf16.gmra.mrb[0].mxu0 %v216
    %v395 = vpop.f32.mrb[0].mxu0
    %v396 = vadd.f32 0.0, %v395
    %v397 = vpop.f32.mrb[0].mxu0
    %v398 = vpop.f32.mrb[0].mxu0
    %v399 = vadd.f32 0.0, %v398
    %v400 = vpop.f32.mrb[0].mxu0
    %401 = vmatprep.mubr.bf16.mxu0 0
    %402 = vmatmul.mubr.bf16.gmra.mrb[0].mxu0 %v219
    %v403 = vpop.f32.mrb[0].mxu0
    %v404 = vadd.f32 0.0, %v403
    %v405 = vpop.f32.mrb[0].mxu0
    %v406 = vpop.f32.mrb[0].mxu0
    %v407 = vadd.f32 0.0, %v406
    %v408 = vpop.f32.mrb[0].mxu0
    %409 = vmatprep.mubr.bf16.mxu0 0
    %410 = vmatmul.mubr.bf16.gmra.mrb[0].mxu0 %v222
    %v411 = vpop.f32.mrb[0].mxu0
    %v412 = vadd.f32 0.0, %v411
    %v413 = vpop.f32.mrb[0].mxu0
    %v414 = vpop.f32.mrb[0].mxu0
    %v415 = vadd.f32 0.0, %v414
    %v416 = vpop.f32.mrb[0].mxu0
    %417 = vmatprep.mubr.bf16.mxu0 0
    %418 = vmatmul.mubr.bf16.gmra.mrb[0].mxu0 %v225
    %v419 = vpop.f32.mrb[0].mxu0
    %v420 = vadd.f32 0.0, %v419
    %v421 = vpop.f32.mrb[0].mxu0
    %v422 = vpop.f32.mrb[0].mxu0
    %v423 = vadd.f32 0.0, %v422
    %v424 = vpop.f32.mrb[0].mxu0
    %425 = vmatprep.mubr.bf16.mxu0 0
    %426 = vmatmul.mubr.bf16.gmra.mrb[0].mxu0 %v228
    %v427 = vpop.f32.mrb[0].mxu0
    %v428 = vadd.f32 0.0, %v427
    %v429 = vpop.f32.mrb[0].mxu0
    %v430 = vpop.f32.mrb[0].mxu0
    %v431 = vadd.f32 0.0, %v430
    %v432 = vpop.f32.mrb[0].mxu0
    %433 = vmatprep.mubr.bf16.mxu0 0
    %434 = vmatmul.mubr.bf16.gmra.mrb[0].mxu0 %v231
    %v435 = vpop.f32.mrb[0].mxu0
    %v436 = vadd.f32 0.0, %v435
    %v437 = vpop.f32.mrb[0].mxu0
    %v438 = vpop.f32.mrb[0].mxu0
    %v439 = vadd.f32 0.0, %v438
    %v440 = vpop.f32.mrb[0].mxu0
    %441 = vmatprep.mubr.bf16.mxu0 0
    %442 = vmatmul.mubr.bf16.gmra.mrb[0].mxu0 %v234
    %v443 = vpop.f32.mrb[0].mxu0
    %v444 = vadd.f32 0.0, %v443
    %v445 = vpop.f32.mrb[0].mxu0
    %v446 = vpop.f32.mrb[0].mxu0
    %v447 = vadd.f32 0.0, %v446
    %v448 = vpop.f32.mrb[0].mxu0
    %449 = vmatprep.mubr.bf16.mxu0 0
    %450 = vmatmul.mubr.bf16.gmra.mrb[0].mxu0 %v237
    %v451 = vpop.f32.mrb[0].mxu0
    %v452 = vadd.f32 0.0, %v451
    %v453 = vpop.f32.mrb[0].mxu0
    %v454 = vpop.f32.mrb[0].mxu0
    %v455 = vadd.f32 0.0, %v454
    %v456 = vpop.f32.mrb[0].mxu0
    %457 = vmatprep.mubr.bf16.mxu0 0
    %458 = vmatmul.mubr.bf16.gmra.mrb[0].mxu0 %v240
    %v459 = vpop.f32.mrb[0].mxu0
    %v460 = vadd.f32 0.0, %v459
    %v461 = vpop.f32.mrb[0].mxu0
    %v462 = vpop.f32.mrb[0].mxu0
    %v463 = vadd.f32 0.0, %v462
    %v464 = vpop.f32.mrb[0].mxu0
    %465 = vmatprep.mubr.bf16.mxu0 0
    %466 = vmatmul.mubr.bf16.gmra.mrb[0].mxu0 %v243
    %v467 = vpop.f32.mrb[0].mxu0
    %v468 = vadd.f32 0.0, %v467
    %v469 = vpop.f32.mrb[0].mxu0
    %v470 = vpop.f32.mrb[0].mxu0
    %v471 = vadd.f32 0.0, %v470
    %v472 = vpop.f32.mrb[0].mxu0
    %473 = vmatprep.mubr.bf16.mxu0 0
    %474 = vmatmul.mubr.bf16.gmra.mrb[0].mxu0 %v246
    %v475 = vpop.f32.mrb[0].mxu0
    %v476 = vadd.f32 0.0, %v475
    %v477 = vpop.f32.mrb[0].mxu0
    %v478 = vpop.f32.mrb[0].mxu0
    %v479 = vadd.f32 0.0, %v478
    %v480 = vpop.f32.mrb[0].mxu0
    %481 = vmatprep.mubr.bf16.mxu0 0
    %482 = vmatmul.mubr.bf16.gmra.mrb[0].mxu0 %v249
    %v483 = vpop.f32.mrb[0].mxu0
    %v484 = vadd.f32 0.0, %v483
    %v485 = vpop.f32.mrb[0].mxu0
    %v486 = vpop.f32.mrb[0].mxu0
    %v487 = vadd.f32 0.0, %v486
    %v488 = vpop.f32.mrb[0].mxu0
    %489 = vmatprep.mubr.bf16.mxu0 0
    %490 = vmatmul.mubr.bf16.gmra.mrb[0].mxu0 %v252
    %v491 = vpop.f32.mrb[0].mxu0
    %v492 = vadd.f32 0.0, %v491
    %v493 = vpop.f32.mrb[0].mxu0
    %v494 = vpop.f32.mrb[0].mxu0
    %v495 = vadd.f32 0.0, %v494
    %v496 = vpop.f32.mrb[0].mxu0
    %497 = vmatprep.mubr.bf16.mxu0 0
    %498 = vmatmul.mubr.bf16.gmra.mrb[0].mxu0 %v255
    %v499 = vpop.f32.mrb[0].mxu0
    %v500 = vadd.f32 0.0, %v499
    %v501 = vpop.f32.mrb[0].mxu0
    %v502 = vpop.f32.mrb[0].mxu0
    %v503 = vadd.f32 0.0, %v502
    %v504 = vpop.f32.mrb[0].mxu0
    %505 = vmatprep.mubr.bf16.mxu0 0
    %506 = vmatmul.mubr.bf16.gmra.mrb[0].mxu0 %v258
    %v507 = vpop.f32.mrb[0].mxu0
    %v508 = vadd.f32 0.0, %v507
    %v509 = vpop.f32.mrb[0].mxu0
    %v510 = vpop.f32.mrb[0].mxu0
    %v511 = vadd.f32 0.0, %v510
    %v512 = vpop.f32.mrb[0].mxu0
    %513 = vmatprep.mubr.bf16.mxu0 0
    %514 = vmatmul.mubr.bf16.gmra.mrb[0].mxu0 %v261
    %v515 = vpop.f32.mrb[0].mxu0
    %v516 = vadd.f32 0.0, %v515
    %v517 = vpop.f32.mrb[0].mxu0
    %v518 = vpop.f32.mrb[0].mxu0
    %v519 = vadd.f32 0.0, %v518
    %v520 = vpop.f32.mrb[0].mxu0
    %521 = vmatprep.mubr.bf16.mxu0 0
    %522 = vmatmul.mubr.bf16.gmra.mrb[0].mxu0 %v264
    %v523 = vpop.f32.mrb[0].mxu0
    %v524 = vadd.f32 0.0, %v523
    %v525 = vpop.f32.mrb[0].mxu0
    %v526 = vpop.f32.mrb[0].mxu0
    %v527 = vadd.f32 0.0, %v526
    %v528 = vpop.f32.mrb[0].mxu0
    %529 = vmatprep.mubr.bf16.mxu0 0
    %530 = vmatmul.mubr.bf16.gmra.mrb[0].mxu0 %v267
    %v531 = vpop.f32.mrb[0].mxu0
    %v532 = vadd.f32 0.0, %v531
    %v533 = vpop.f32.mrb[0].mxu0
    %v534 = vpop.f32.mrb[0].mxu0
    %v535 = vadd.f32 0.0, %v534
    %v536 = vpop.f32.mrb[0].mxu0
    %537 = vmatprep.mubr.bf16.mxu0 0
    %538 = vmatmul.mubr.bf16.gmra.mrb[0].mxu0 %v270
    %v539 = vpop.f32.mrb[0].mxu0
    %v540 = vadd.f32 0.0, %v539
    %v541 = vpop.f32.mrb[0].mxu0
    %v542 = vpop.f32.mrb[0].mxu0
    %v543 = vadd.f32 0.0, %v542
    %v544 = vpop.f32.mrb[0].mxu0
    %545 = vmatprep.mubr.bf16.mxu0 0
    %546 = vmatmul.mubr.bf16.gmra.mrb[0].mxu0 %v273
    %v547 = vpop.f32.mrb[0].mxu0
    %v548 = vadd.f32 0.0, %v547
    %v549 = vpop.f32.mrb[0].mxu0
    %v550 = vpop.f32.mrb[0].mxu0
    %v551 = vadd.f32 0.0, %v550
    %v552 = vpop.f32.mrb[0].mxu0
    %553 = vmatprep.mubr.bf16.mxu0 0
    %554 = vmatmul.mubr.bf16.gmra.mrb[0].mxu0 %v276
    %v555 = vpop.f32.mrb[0].mxu0
    %v556 = vadd.f32 0.0, %v555
    %v557 = vpop.f32.mrb[0].mxu0
    %v558 = vpop.f32.mrb[0].mxu0
    %v559 = vadd.f32 0.0, %v558
    %v560 = vpop.f32.mrb[0].mxu0
    %561 = vmatprep.mubr.bf16.mxu0 0
    %562 = vmatmul.mubr.bf16.gmra.mrb[0].mxu0 %v279
    %v563 = vpop.f32.mrb[0].mxu0
    %v564 = vadd.f32 0.0, %v563
    %v565 = vpop.f32.mrb[0].mxu0
    %v566 = vpop.f32.mrb[0].mxu0
    %v567 = vadd.f32 0.0, %v566
    %v568 = vpop.f32.mrb[0].mxu0
    %569 = vdwg.mxu0
    %v570 = vld [vmem:[%s2] sm:$0x1]
    %v571 = vld [vmem:[%s3] sm:$0x1]
    %vm572 = vcmask 261120
    %v573 = vsel %vm572, %v316, 0.0
    %v574 = vsel %vm572, %v319, 0.0
    %v575 = vadd.f32 %v573, %v574
    %v576 = vsel %vm572, %v324, 0.0
    %v577 = vadd.f32 %v575, %v576
    %v578 = vsel %vm572, %v327, 0.0
    %v579 = vadd.f32 %v577, %v578
    %v580 = vsel %vm572, %v332, 0.0
    %v581 = vadd.f32 %v579, %v580
    %v582 = vsel %vm572, %v335, 0.0
    %v583 = vadd.f32 %v581, %v582
    %v584 = vsel %vm572, %v340, 0.0
    %v585 = vadd.f32 %v583, %v584
    %v586 = vsel %vm572, %v343, 0.0
    %v587 = vadd.f32 %v585, %v586
    %v588 = vsel %vm572, %v348, 0.0
    %v589 = vadd.f32 %v587, %v588
    %v590 = vsel %vm572, %v351, 0.0
    %v591 = vadd.f32 %v589, %v590
    %v592 = vsel %vm572, %v356, 0.0
    %v593 = vadd.f32 %v591, %v592
    %v594 = vsel %vm572, %v359, 0.0
    %v595 = vadd.f32 %v593, %v594
    %v596 = vsel %vm572, %v364, 0.0
    %v597 = vadd.f32 %v595, %v596
    %v598 = vsel %vm572, %v367, 0.0
    %v599 = vadd.f32 %v597, %v598
    %v600 = vsel %vm572, %v372, 0.0
    %v601 = vadd.f32 %v599, %v600
    %v602 = vsel %vm572, %v375, 0.0
    %v603 = vadd.f32 %v601, %v602
    %v604 = vsel %vm572, %v380, 0.0
    %v605 = vadd.f32 %v603, %v604
    %v606 = vsel %vm572, %v383, 0.0
    %v607 = vadd.f32 %v605, %v606
    %v608 = vsel %vm572, %v388, 0.0
    %v609 = vadd.f32 %v607, %v608
    %v610 = vsel %vm572, %v391, 0.0
    %v611 = vadd.f32 %v609, %v610
    %v612 = vsel %vm572, %v396, 0.0
    %v613 = vadd.f32 %v611, %v612
    %v614 = vsel %vm572, %v399, 0.0
    %v615 = vadd.f32 %v613, %v614
    %v616 = vsel %vm572, %v404, 0.0
    %v617 = vadd.f32 %v615, %v616
    %v618 = vsel %vm572, %v407, 0.0
    %v619 = vadd.f32 %v617, %v618
    %v620 = vsel %vm572, %v412, 0.0
    %v621 = vadd.f32 %v619, %v620
    %v622 = vsel %vm572, %v415, 0.0
    %v623 = vadd.f32 %v621, %v622
    %v624 = vsel %vm572, %v420, 0.0
    %v625 = vadd.f32 %v623, %v624
    %v626 = vsel %vm572, %v423, 0.0
    %v627 = vadd.f32 %v625, %v626
    %v628 = vsel %vm572, %v428, 0.0
    %v629 = vadd.f32 %v627, %v628
    %v630 = vsel %vm572, %v431, 0.0
    %v631 = vadd.f32 %v629, %v630
    %v632 = vsel %vm572, %v436, 0.0
    %v633 = vadd.f32 %v631, %v632
    %v634 = vsel %vm572, %v439, 0.0
    %v635 = vadd.f32 %v633, %v634
    %v636 = vsel %vm572, %v444, 0.0
    %v637 = vadd.f32 %v635, %v636
    %v638 = vsel %vm572, %v447, 0.0
    %v639 = vadd.f32 %v637, %v638
    %v640 = vsel %vm572, %v452, 0.0
    %v641 = vadd.f32 %v639, %v640
    %v642 = vsel %vm572, %v455, 0.0
    %v643 = vadd.f32 %v641, %v642
    %v644 = vsel %vm572, %v460, 0.0
    %v645 = vadd.f32 %v643, %v644
    %v646 = vsel %vm572, %v463, 0.0
    %v647 = vadd.f32 %v645, %v646
    %v648 = vsel %vm572, %v468, 0.0
    %v649 = vadd.f32 %v647, %v648
    %v650 = vsel %vm572, %v471, 0.0
    %v651 = vadd.f32 %v649, %v650
    %v652 = vsel %vm572, %v476, 0.0
    %v653 = vadd.f32 %v651, %v652
    %v654 = vsel %vm572, %v479, 0.0
    %v655 = vadd.f32 %v653, %v654
    %v656 = vsel %vm572, %v484, 0.0
    %v657 = vadd.f32 %v655, %v656
    %v658 = vsel %vm572, %v487, 0.0
    %v659 = vadd.f32 %v657, %v658
    %v660 = vsel %vm572, %v492, 0.0
    %v661 = vadd.f32 %v659, %v660
    %v662 = vsel %vm572, %v495, 0.0
    %v663 = vadd.f32 %v661, %v662
    %v664 = vsel %vm572, %v500, 0.0
    %v665 = vadd.f32 %v663, %v664
    %v666 = vsel %vm572, %v503, 0.0
    %v667 = vadd.f32 %v665, %v666
    %v668 = vsel %vm572, %v508, 0.0
    %v669 = vadd.f32 %v667, %v668
    %v670 = vsel %vm572, %v511, 0.0
    %v671 = vadd.f32 %v669, %v670
    %v672 = vsel %vm572, %v516, 0.0
    %v673 = vadd.f32 %v671, %v672
    %v674 = vsel %vm572, %v519, 0.0
    %v675 = vadd.f32 %v673, %v674
    %v676 = vsel %vm572, %v524, 0.0
    %v677 = vadd.f32 %v675, %v676
    %v678 = vsel %vm572, %v527, 0.0
    %v679 = vadd.f32 %v677, %v678
    %v680 = vsel %vm572, %v532, 0.0
    %v681 = vadd.f32 %v679, %v680
    %v682 = vsel %vm572, %v535, 0.0
    %v683 = vadd.f32 %v681, %v682
    %v684 = vsel %vm572, %v540, 0.0
    %v685 = vadd.f32 %v683, %v684
    %v686 = vsel %vm572, %v543, 0.0
    %v687 = vadd.f32 %v685, %v686
    %v688 = vsel %vm572, %v548, 0.0
    %v689 = vadd.f32 %v687, %v688
    %v690 = vsel %vm572, %v551, 0.0
    %v691 = vadd.f32 %v689, %v690
    %v692 = vsel %vm572, %v556, 0.0
    %v693 = vadd.f32 %v691, %v692
    %v694 = vsel %vm572, %v559, 0.0
    %v695 = vadd.f32 %v693, %v694
    %v696 = vsel %vm572, %v564, 0.0
    %v697 = vadd.f32 %v695, %v696
    %v698 = vsel %vm572, %v567, 0.0
    %v699 = vadd.f32 %v697, %v698
    %v700 = vrot.slane %v699, 4
    %v701 = vadd.f32 %v699, %v700
    %v702 = vrot.slane %v701, 2
    %v703 = vadd.f32 %v701, %v702
    %v704 = vrot.slane %v703, 1
    %v705 = vadd.f32 %v703, %v704
    %v706 = vmul.f32 %v316, %v316
    %v707 = vmul.f32 %v319, %v319
    %v708 = vmul.f32 %v324, %v324
    %v709 = vmul.f32 %v327, %v327
    %v710 = vmul.f32 %v332, %v332
    %v711 = vmul.f32 %v335, %v335
    %v712 = vmul.f32 %v340, %v340
    %v713 = vmul.f32 %v343, %v343
    %v714 = vmul.f32 %v348, %v348
    %v715 = vmul.f32 %v351, %v351
    %v716 = vmul.f32 %v356, %v356
    %v717 = vmul.f32 %v359, %v359
    %v718 = vmul.f32 %v364, %v364
    %v719 = vmul.f32 %v367, %v367
    %v720 = vmul.f32 %v372, %v372
    %v721 = vmul.f32 %v375, %v375
    %v722 = vmul.f32 %v380, %v380
    %v723 = vmul.f32 %v383, %v383
    %v724 = vmul.f32 %v388, %v388
    %v725 = vmul.f32 %v391, %v391
    %v726 = vmul.f32 %v396, %v396
    %v727 = vmul.f32 %v399, %v399
    %v728 = vmul.f32 %v404, %v404
    %v729 = vmul.f32 %v407, %v407
    %v730 = vmul.f32 %v412, %v412
    %v731 = vmul.f32 %v415, %v415
    %v732 = vmul.f32 %v420, %v420
    %v733 = vmul.f32 %v423, %v423
    %v734 = vmul.f32 %v428, %v428
    %v735 = vmul.f32 %v431, %v431
    %v736 = vmul.f32 %v436, %v436
    %v737 = vmul.f32 %v439, %v439
    %v738 = vmul.f32 %v444, %v444
    %v739 = vmul.f32 %v447, %v447
    %v740 = vmul.f32 %v452, %v452
    %v741 = vmul.f32 %v455, %v455
    %v742 = vmul.f32 %v460, %v460
    %v743 = vmul.f32 %v463, %v463
    %v744 = vmul.f32 %v468, %v468
    %v745 = vmul.f32 %v471, %v471
    %v746 = vmul.f32 %v476, %v476
    %v747 = vmul.f32 %v479, %v479
    %v748 = vmul.f32 %v484, %v484
    %v749 = vmul.f32 %v487, %v487
    %v750 = vmul.f32 %v492, %v492
    %v751 = vmul.f32 %v495, %v495
    %v752 = vmul.f32 %v500, %v500
    %v753 = vmul.f32 %v503, %v503
    %v754 = vmul.f32 %v508, %v508
    %v755 = vmul.f32 %v511, %v511
    %v756 = vmul.f32 %v516, %v516
    %v757 = vmul.f32 %v519, %v519
    %v758 = vmul.f32 %v524, %v524
    %v759 = vmul.f32 %v527, %v527
    %v760 = vmul.f32 %v532, %v532
    %v761 = vmul.f32 %v535, %v535
    %v762 = vmul.f32 %v540, %v540
    %v763 = vmul.f32 %v543, %v543
    %v764 = vmul.f32 %v548, %v548
    %v765 = vmul.f32 %v551, %v551
    %v766 = vmul.f32 %v556, %v556
    %v767 = vmul.f32 %v559, %v559
    %v768 = vmul.f32 %v564, %v564
    %v769 = vmul.f32 %v567, %v567
    %v770 = vsel %vm572, %v706, 0.0
    %v771 = vsel %vm572, %v707, 0.0
    %v772 = vadd.f32 %v770, %v771
    %v773 = vsel %vm572, %v708, 0.0
    %v774 = vadd.f32 %v772, %v773
    %v775 = vsel %vm572, %v709, 0.0
    %v776 = vadd.f32 %v774, %v775
    %v777 = vsel %vm572, %v710, 0.0
    %v778 = vadd.f32 %v776, %v777
    %v779 = vsel %vm572, %v711, 0.0
    %v780 = vadd.f32 %v778, %v779
    %v781 = vsel %vm572, %v712, 0.0
    %v782 = vadd.f32 %v780, %v781
    %v783 = vsel %vm572, %v713, 0.0
    %v784 = vadd.f32 %v782, %v783
    %v785 = vsel %vm572, %v714, 0.0
    %v786 = vadd.f32 %v784, %v785
    %v787 = vsel %vm572, %v715, 0.0
    %v788 = vadd.f32 %v786, %v787
    %v789 = vsel %vm572, %v716, 0.0
    %v790 = vadd.f32 %v788, %v789
    %v791 = vsel %vm572, %v717, 0.0
    %v792 = vadd.f32 %v790, %v791
    %v793 = vsel %vm572, %v718, 0.0
    %v794 = vadd.f32 %v792, %v793
    %v795 = vsel %vm572, %v719, 0.0
    %v796 = vadd.f32 %v794, %v795
    %v797 = vsel %vm572, %v720, 0.0
    %v798 = vadd.f32 %v796, %v797
    %v799 = vsel %vm572, %v721, 0.0
    %v800 = vadd.f32 %v798, %v799
    %v801 = vsel %vm572, %v722, 0.0
    %v802 = vadd.f32 %v800, %v801
    %v803 = vsel %vm572, %v723, 0.0
    %v804 = vadd.f32 %v802, %v803
    %v805 = vsel %vm572, %v724, 0.0
    %v806 = vadd.f32 %v804, %v805
    %v807 = vsel %vm572, %v725, 0.0
    %v808 = vadd.f32 %v806, %v807
    %v809 = vsel %vm572, %v726, 0.0
    %v810 = vadd.f32 %v808, %v809
    %v811 = vsel %vm572, %v727, 0.0
    %v812 = vadd.f32 %v810, %v811
    %v813 = vsel %vm572, %v728, 0.0
    %v814 = vadd.f32 %v812, %v813
    %v815 = vsel %vm572, %v729, 0.0
    %v816 = vadd.f32 %v814, %v815
    %v817 = vsel %vm572, %v730, 0.0
    %v818 = vadd.f32 %v816, %v817
    %v819 = vsel %vm572, %v731, 0.0
    %v820 = vadd.f32 %v818, %v819
    %v821 = vsel %vm572, %v732, 0.0
    %v822 = vadd.f32 %v820, %v821
    %v823 = vsel %vm572, %v733, 0.0
    %v824 = vadd.f32 %v822, %v823
    %v825 = vsel %vm572, %v734, 0.0
    %v826 = vadd.f32 %v824, %v825
    %v827 = vsel %vm572, %v735, 0.0
    %v828 = vadd.f32 %v826, %v827
    %v829 = vsel %vm572, %v736, 0.0
    %v830 = vadd.f32 %v828, %v829
    %v831 = vsel %vm572, %v737, 0.0
    %v832 = vadd.f32 %v830, %v831
    %v833 = vsel %vm572, %v738, 0.0
    %v834 = vadd.f32 %v832, %v833
    %v835 = vsel %vm572, %v739, 0.0
    %v836 = vadd.f32 %v834, %v835
    %v837 = vsel %vm572, %v740, 0.0
    %v838 = vadd.f32 %v836, %v837
    %v839 = vsel %vm572, %v741, 0.0
    %v840 = vadd.f32 %v838, %v839
    %v841 = vsel %vm572, %v742, 0.0
    %v842 = vadd.f32 %v840, %v841
    %v843 = vsel %vm572, %v743, 0.0
    %v844 = vadd.f32 %v842, %v843
    %v845 = vsel %vm572, %v744, 0.0
    %v846 = vadd.f32 %v844, %v845
    %v847 = vsel %vm572, %v745, 0.0
    %v848 = vadd.f32 %v846, %v847
    %v849 = vsel %vm572, %v746, 0.0
    %v850 = vadd.f32 %v848, %v849
    %v851 = vsel %vm572, %v747, 0.0
    %v852 = vadd.f32 %v850, %v851
    %v853 = vsel %vm572, %v748, 0.0
    %v854 = vadd.f32 %v852, %v853
    %v855 = vsel %vm572, %v749, 0.0
    %v856 = vadd.f32 %v854, %v855
    %v857 = vsel %vm572, %v750, 0.0
    %v858 = vadd.f32 %v856, %v857
    %v859 = vsel %vm572, %v751, 0.0
    %v860 = vadd.f32 %v858, %v859
    %v861 = vsel %vm572, %v752, 0.0
    %v862 = vadd.f32 %v860, %v861
    %v863 = vsel %vm572, %v753, 0.0
    %v864 = vadd.f32 %v862, %v863
    %v865 = vsel %vm572, %v754, 0.0
    %v866 = vadd.f32 %v864, %v865
    %v867 = vsel %vm572, %v755, 0.0
    %v868 = vadd.f32 %v866, %v867
    %v869 = vsel %vm572, %v756, 0.0
    %v870 = vadd.f32 %v868, %v869
    %v871 = vsel %vm572, %v757, 0.0
    %v872 = vadd.f32 %v870, %v871
    %v873 = vsel %vm572, %v758, 0.0
    %v874 = vadd.f32 %v872, %v873
    %v875 = vsel %vm572, %v759, 0.0
    %v876 = vadd.f32 %v874, %v875
    %v877 = vsel %vm572, %v760, 0.0
    %v878 = vadd.f32 %v876, %v877
    %v879 = vsel %vm572, %v761, 0.0
    %v880 = vadd.f32 %v878, %v879
    %v881 = vsel %vm572, %v762, 0.0
    %v882 = vadd.f32 %v880, %v881
    %v883 = vsel %vm572, %v763, 0.0
    %v884 = vadd.f32 %v882, %v883
    %v885 = vsel %vm572, %v764, 0.0
    %v886 = vadd.f32 %v884, %v885
    %v887 = vsel %vm572, %v765, 0.0
    %v888 = vadd.f32 %v886, %v887
    %v889 = vsel %vm572, %v766, 0.0
    %v890 = vadd.f32 %v888, %v889
    %v891 = vsel %vm572, %v767, 0.0
    %v892 = vadd.f32 %v890, %v891
    %v893 = vsel %vm572, %v768, 0.0
    %v894 = vadd.f32 %v892, %v893
    %v895 = vsel %vm572, %v769, 0.0
    %v896 = vadd.f32 %v894, %v895
    %v897 = vrot.slane %v896, 4
    %v898 = vadd.f32 %v896, %v897
    %v899 = vrot.slane %v898, 2
    %v900 = vadd.f32 %v898, %v899
    %v901 = vrot.slane %v900, 1
    %v902 = vadd.f32 %v900, %v901
    %v903 = vmul.f32 %v705, 0.001953125
    %v904 = vmul.f32 %v902, 0.001953125
    %v905 = vmul.f32 %v903, %v903
    %v906 = vsub.f32 %v904, %v905
    %v907 = vmax.f32 %v906, 0.0
    %v908 = vadd.f32 %v907, 1e-05
    %v909 = vrsqrt.pop %v908
    %v910 = vmul.f32 %v570, %v909
    %v911 = vmul.f32 %v903, %v910
    %v912 = vsub.f32 %v571, %v911
    %v914 = vlaneseq
    %v915 = vshrl.u32 %v914, 7
    %v916 = vsub.s32 0, %v915
    %v917 = vrot.slane %v910, %v916
    %v919 = vmul.f32 %v316, %v917
    %v920 = vmul.f32 %v319, %v917
    %v921 = vmul.f32 %v324, %v917
    %v922 = vmul.f32 %v327, %v917
    %v923 = vmul.f32 %v332, %v917
    %v924 = vmul.f32 %v335, %v917
    %v925 = vmul.f32 %v340, %v917
    %v926 = vmul.f32 %v343, %v917
    %v927 = vmul.f32 %v348, %v917
    %v928 = vmul.f32 %v351, %v917
    %v929 = vmul.f32 %v356, %v917
    %v930 = vmul.f32 %v359, %v917
    %v931 = vmul.f32 %v364, %v917
    %v932 = vmul.f32 %v367, %v917
    %v933 = vmul.f32 %v372, %v917
    %v934 = vmul.f32 %v375, %v917
    %v935 = vmul.f32 %v380, %v917
    %v936 = vmul.f32 %v383, %v917
    %v937 = vmul.f32 %v388, %v917
    %v938 = vmul.f32 %v391, %v917
    %v939 = vmul.f32 %v396, %v917
    %v940 = vmul.f32 %v399, %v917
    %v941 = vmul.f32 %v404, %v917
    %v942 = vmul.f32 %v407, %v917
    %v943 = vmul.f32 %v412, %v917
    %v944 = vmul.f32 %v415, %v917
    %v945 = vmul.f32 %v420, %v917
    %v946 = vmul.f32 %v423, %v917
    %v947 = vmul.f32 %v428, %v917
    %v948 = vmul.f32 %v431, %v917
    %v949 = vmul.f32 %v436, %v917
    %v950 = vmul.f32 %v439, %v917
    %v951 = vmul.f32 %v444, %v917
    %v952 = vmul.f32 %v447, %v917
    %v953 = vmul.f32 %v452, %v917
    %v954 = vmul.f32 %v455, %v917
    %v955 = vmul.f32 %v460, %v917
    %v956 = vmul.f32 %v463, %v917
    %v957 = vmul.f32 %v468, %v917
    %v958 = vmul.f32 %v471, %v917
    %v959 = vmul.f32 %v476, %v917
    %v960 = vmul.f32 %v479, %v917
    %v961 = vmul.f32 %v484, %v917
    %v962 = vmul.f32 %v487, %v917
    %v963 = vmul.f32 %v492, %v917
    %v964 = vmul.f32 %v495, %v917
    %v965 = vmul.f32 %v500, %v917
    %v966 = vmul.f32 %v503, %v917
    %v967 = vmul.f32 %v508, %v917
    %v968 = vmul.f32 %v511, %v917
    %v969 = vmul.f32 %v516, %v917
    %v970 = vmul.f32 %v519, %v917
    %v971 = vmul.f32 %v524, %v917
    %v972 = vmul.f32 %v527, %v917
    %v973 = vmul.f32 %v532, %v917
    %v974 = vmul.f32 %v535, %v917
    %v975 = vmul.f32 %v540, %v917
    %v976 = vmul.f32 %v543, %v917
    %v977 = vmul.f32 %v548, %v917
    %v978 = vmul.f32 %v551, %v917
    %v979 = vmul.f32 %v556, %v917
    %v980 = vmul.f32 %v559, %v917
    %v981 = vmul.f32 %v564, %v917
    %v982 = vmul.f32 %v567, %v917
    %v984 = vlaneseq
    %v985 = vshrl.u32 %v984, 7
    %v986 = vsub.s32 0, %v985
    %v987 = vrot.slane %v912, %v986
    %v989 = vadd.f32 %v919, %v987
    %v990 = vadd.f32 %v920, %v987
    %v991 = vadd.f32 %v921, %v987
    %v992 = vadd.f32 %v922, %v987
    %v993 = vadd.f32 %v923, %v987
    %v994 = vadd.f32 %v924, %v987
    %v995 = vadd.f32 %v925, %v987
    %v996 = vadd.f32 %v926, %v987
    %v997 = vadd.f32 %v927, %v987
    %v998 = vadd.f32 %v928, %v987
    %v999 = vadd.f32 %v929, %v987
    %v1000 = vadd.f32 %v930, %v987
    %v1001 = vadd.f32 %v931, %v987
    %v1002 = vadd.f32 %v932, %v987
    %v1003 = vadd.f32 %v933, %v987
    %v1004 = vadd.f32 %v934, %v987
    %v1005 = vadd.f32 %v935, %v987
    %v1006 = vadd.f32 %v936, %v987
    %v1007 = vadd.f32 %v937, %v987
    %v1008 = vadd.f32 %v938, %v987
    %v1009 = vadd.f32 %v939, %v987
    %v1010 = vadd.f32 %v940, %v987
    %v1011 = vadd.f32 %v941, %v987
    %v1012 = vadd.f32 %v942, %v987
    %v1013 = vadd.f32 %v943, %v987
    %v1014 = vadd.f32 %v944, %v987
    %v1015 = vadd.f32 %v945, %v987
    %v1016 = vadd.f32 %v946, %v987
    %v1017 = vadd.f32 %v947, %v987
    %v1018 = vadd.f32 %v948, %v987
    %v1019 = vadd.f32 %v949, %v987
    %v1020 = vadd.f32 %v950, %v987
    %v1021 = vadd.f32 %v951, %v987
    %v1022 = vadd.f32 %v952, %v987
    %v1023 = vadd.f32 %v953, %v987
    %v1024 = vadd.f32 %v954, %v987
    %v1025 = vadd.f32 %v955, %v987
    %v1026 = vadd.f32 %v956, %v987
    %v1027 = vadd.f32 %v957, %v987
    %v1028 = vadd.f32 %v958, %v987
    %v1029 = vadd.f32 %v959, %v987
    %v1030 = vadd.f32 %v960, %v987
    %v1031 = vadd.f32 %v961, %v987
    %v1032 = vadd.f32 %v962, %v987
    %v1033 = vadd.f32 %v963, %v987
    %v1034 = vadd.f32 %v964, %v987
    %v1035 = vadd.f32 %v965, %v987
    %v1036 = vadd.f32 %v966, %v987
    %v1037 = vadd.f32 %v967, %v987
    %v1038 = vadd.f32 %v968, %v987
    %v1039 = vadd.f32 %v969, %v987
    %v1040 = vadd.f32 %v970, %v987
    %v1041 = vadd.f32 %v971, %v987
    %v1042 = vadd.f32 %v972, %v987
    %v1043 = vadd.f32 %v973, %v987
    %v1044 = vadd.f32 %v974, %v987
    %v1045 = vadd.f32 %v975, %v987
    %v1046 = vadd.f32 %v976, %v987
    %v1047 = vadd.f32 %v977, %v987
    %v1048 = vadd.f32 %v978, %v987
    %v1049 = vadd.f32 %v979, %v987
    %v1050 = vadd.f32 %v980, %v987
    %v1051 = vadd.f32 %v981, %v987
    %v1052 = vadd.f32 %v982, %v987
    %v1053 = vmax.f32 %v989, 0.0
    %v1054 = vmax.f32 %v990, 0.0
    %v1055 = vmax.f32 %v991, 0.0
    %v1056 = vmax.f32 %v992, 0.0
    %v1057 = vmax.f32 %v993, 0.0
    %v1058 = vmax.f32 %v994, 0.0
    %v1059 = vmax.f32 %v995, 0.0
    %v1060 = vmax.f32 %v996, 0.0
    %v1061 = vmax.f32 %v997, 0.0
    %v1062 = vmax.f32 %v998, 0.0
    %v1063 = vmax.f32 %v999, 0.0
    %v1064 = vmax.f32 %v1000, 0.0
    %v1065 = vmax.f32 %v1001, 0.0
    %v1066 = vmax.f32 %v1002, 0.0
    %v1067 = vmax.f32 %v1003, 0.0
    %v1068 = vmax.f32 %v1004, 0.0
    %v1069 = vmax.f32 %v1005, 0.0
    %v1070 = vmax.f32 %v1006, 0.0
    %v1071 = vmax.f32 %v1007, 0.0
    %v1072 = vmax.f32 %v1008, 0.0
    %v1073 = vmax.f32 %v1009, 0.0
    %v1074 = vmax.f32 %v1010, 0.0
    %v1075 = vmax.f32 %v1011, 0.0
    %v1076 = vmax.f32 %v1012, 0.0
    %v1077 = vmax.f32 %v1013, 0.0
    %v1078 = vmax.f32 %v1014, 0.0
    %v1079 = vmax.f32 %v1015, 0.0
    %v1080 = vmax.f32 %v1016, 0.0
    %v1081 = vmax.f32 %v1017, 0.0
    %v1082 = vmax.f32 %v1018, 0.0
    %v1083 = vmax.f32 %v1019, 0.0
    %v1084 = vmax.f32 %v1020, 0.0
    %v1085 = vmax.f32 %v1021, 0.0
    %v1086 = vmax.f32 %v1022, 0.0
    %v1087 = vmax.f32 %v1023, 0.0
    %v1088 = vmax.f32 %v1024, 0.0
    %v1089 = vmax.f32 %v1025, 0.0
    %v1090 = vmax.f32 %v1026, 0.0
    %v1091 = vmax.f32 %v1027, 0.0
    %v1092 = vmax.f32 %v1028, 0.0
    %v1093 = vmax.f32 %v1029, 0.0
    %v1094 = vmax.f32 %v1030, 0.0
    %v1095 = vmax.f32 %v1031, 0.0
    %v1096 = vmax.f32 %v1032, 0.0
    %v1097 = vmax.f32 %v1033, 0.0
    %v1098 = vmax.f32 %v1034, 0.0
    %v1099 = vmax.f32 %v1035, 0.0
    %v1100 = vmax.f32 %v1036, 0.0
    %v1101 = vmax.f32 %v1037, 0.0
    %v1102 = vmax.f32 %v1038, 0.0
    %v1103 = vmax.f32 %v1039, 0.0
    %v1104 = vmax.f32 %v1040, 0.0
    %v1105 = vmax.f32 %v1041, 0.0
    %v1106 = vmax.f32 %v1042, 0.0
    %v1107 = vmax.f32 %v1043, 0.0
    %v1108 = vmax.f32 %v1044, 0.0
    %v1109 = vmax.f32 %v1045, 0.0
    %v1110 = vmax.f32 %v1046, 0.0
    %v1111 = vmax.f32 %v1047, 0.0
    %v1112 = vmax.f32 %v1048, 0.0
    %v1113 = vmax.f32 %v1049, 0.0
    %v1114 = vmax.f32 %v1050, 0.0
    %v1115 = vmax.f32 %v1051, 0.0
    %v1116 = vmax.f32 %v1052, 0.0
    %1117 = vst.msk [vmem:[#allocation2] sm:$0xff] %vm572, 0.0
    %1118 = vst.msk [vmem:[#allocation2 + $0x8] sm:$0xff] %vm572, 0.0
    %vm1119 = vcmask 254976
    %1120 = vst.msk [vmem:[#allocation2 + $0x10] sm:$0x3] %vm1119, 0.0
    %1121 = vst.msk [vmem:[#allocation2 + $0x18] sm:$0xff] %vm572, 0.0
    %1122 = vst.msk [vmem:[#allocation2 + $0x20] sm:$0xff] %vm572, 0.0
    %1123 = vst.msk [vmem:[#allocation2 + $0x28] sm:$0x3] %vm1119, 0.0
    %1124 = vst.msk [vmem:[#allocation2 + $0x30] sm:$0xff] %vm572, 0.0
    %1125 = vst.msk [vmem:[#allocation2 + $0x38] sm:$0xff] %vm572, 0.0
    %1126 = vst.msk [vmem:[#allocation2 + $0x40] sm:$0x3] %vm1119, 0.0
    %1127 = vst.msk [vmem:[#allocation2 + $0x48] sm:$0xff] %vm572, 0.0
    %1128 = vst.msk [vmem:[#allocation2 + $0x50] sm:$0xff] %vm572, 0.0
    %1129 = vst.msk [vmem:[#allocation2 + $0x58] sm:$0x3] %vm1119, 0.0
    %1130 = vst.msk [vmem:[#allocation2 + $0x60] sm:$0xff] %vm572, 0.0
    %1131 = vst.msk [vmem:[#allocation2 + $0x68] sm:$0xff] %vm572, 0.0
    %1132 = vst.msk [vmem:[#allocation2 + $0x70] sm:$0x3] %vm1119, 0.0
    %1133 = vst.msk [vmem:[#allocation2 + $0x78] sm:$0xff] %vm572, 0.0
    %1134 = vst.msk [vmem:[#allocation2 + $0x80] sm:$0xff] %vm572, 0.0
    %1135 = vst.msk [vmem:[#allocation2 + $0x88] sm:$0x3] %vm1119, 0.0
    %1136 = vst.msk [vmem:[#allocation2 + $0x90] sm:$0xff] %vm572, 0.0
    %1137 = vst.msk [vmem:[#allocation2 + $0x98] sm:$0xff] %vm572, 0.0
    %1138 = vst.msk [vmem:[#allocation2 + $0xa0] sm:$0x3] %vm1119, 0.0
    %1139 = vst.msk [vmem:[#allocation2 + $0xa8] sm:$0xff] %vm572, 0.0
    %1140 = vst.msk [vmem:[#allocation2 + $0xb0] sm:$0xff] %vm572, 0.0
    %1141 = vst.msk [vmem:[#allocation2 + $0xb8] sm:$0x3] %vm1119, 0.0
    %1142 = vst.msk [vmem:[#allocation2 + $0xc0] sm:$0xff] %vm572, 0.0
    %1143 = vst.msk [vmem:[#allocation2 + $0xc8] sm:$0xff] %vm572, 0.0
    %1144 = vst.msk [vmem:[#allocation2 + $0xd0] sm:$0x3] %vm1119, 0.0
    %1145 = vst.msk [vmem:[#allocation2 + $0xd8] sm:$0xff] %vm572, 0.0
    %1146 = vst.msk [vmem:[#allocation2 + $0xe0] sm:$0xff] %vm572, 0.0
    %1147 = vst.msk [vmem:[#allocation2 + $0xe8] sm:$0x3] %vm1119, 0.0
    %1148 = vst.msk [vmem:[#allocation2 + $0xf0] sm:$0xff] %vm572, 0.0
    %1149 = vst.msk [vmem:[#allocation2 + $0xf8] sm:$0xff] %vm572, 0.0
    %1150 = vst.msk [vmem:[#allocation2 + $0x100] sm:$0x3] %vm1119, 0.0
    %1151 = vst.msk [vmem:[#allocation2 + $0x108] sm:$0xff] %vm572, 0.0
    %1152 = vst.msk [vmem:[#allocation2 + $0x110] sm:$0xff] %vm572, 0.0
    %1153 = vst.msk [vmem:[#allocation2 + $0x118] sm:$0x3] %vm1119, 0.0
    %1154 = vst.msk [vmem:[#allocation2 + $0x120] sm:$0xff] %vm572, 0.0
    %1155 = vst.msk [vmem:[#allocation2 + $0x128] sm:$0xff] %vm572, 0.0
    %1156 = vst.msk [vmem:[#allocation2 + $0x130] sm:$0x3] %vm1119, 0.0
    %1157 = vst.msk [vmem:[#allocation2 + $0x138] sm:$0xff] %vm572, 0.0
    %1158 = vst.msk [vmem:[#allocation2 + $0x140] sm:$0xff] %vm572, 0.0
    %1159 = vst.msk [vmem:[#allocation2 + $0x148] sm:$0x3] %vm1119, 0.0
    %1160 = vst.msk [vmem:[#allocation2 + $0x150] sm:$0xff] %vm572, 0.0
    %1161 = vst.msk [vmem:[#allocation2 + $0x158] sm:$0xff] %vm572, 0.0
    %1162 = vst.msk [vmem:[#allocation2 + $0x160] sm:$0x3] %vm1119, 0.0
    %1163 = vst.msk [vmem:[#allocation2 + $0x168] sm:$0xff] %vm572, 0.0
    %1164 = vst.msk [vmem:[#allocation2 + $0x170] sm:$0xff] %vm572, 0.0
    %1165 = vst.msk [vmem:[#allocation2 + $0x178] sm:$0x3] %vm1119, 0.0
    %1166 = vst.msk [vmem:[#allocation2 + $0x180] sm:$0xff] %vm572, 0.0
    %1167 = vst.msk [vmem:[#allocation2 + $0x188] sm:$0xff] %vm572, 0.0
    %1168 = vst.msk [vmem:[#allocation2 + $0x190] sm:$0x3] %vm1119, 0.0
    %1169 = vst.msk [vmem:[#allocation2 + $0x198] sm:$0xff] %vm572, 0.0
    %1170 = vst.msk [vmem:[#allocation2 + $0x1a0] sm:$0xff] %vm572, 0.0
    %1171 = vst.msk [vmem:[#allocation2 + $0x1a8] sm:$0x3] %vm1119, 0.0
    %1172 = vst.msk [vmem:[#allocation2 + $0x1b0] sm:$0xff] %vm572, 0.0
    %1173 = vst.msk [vmem:[#allocation2 + $0x1b8] sm:$0xff] %vm572, 0.0
    %1174 = vst.msk [vmem:[#allocation2 + $0x1c0] sm:$0x3] %vm1119, 0.0
    %1175 = vst.msk [vmem:[#allocation2 + $0x1c8] sm:$0xff] %vm572, 0.0
    %1176 = vst.msk [vmem:[#allocation2 + $0x1d0] sm:$0xff] %vm572, 0.0
    %1177 = vst.msk [vmem:[#allocation2 + $0x1d8] sm:$0x3] %vm1119, 0.0
    %1178 = vst.msk [vmem:[#allocation2 + $0x1e0] sm:$0xff] %vm572, 0.0
    %1179 = vst.msk [vmem:[#allocation2 + $0x1e8] sm:$0xff] %vm572, 0.0
    %1180 = vst.msk [vmem:[#allocation2 + $0x1f0] sm:$0x3] %vm1119, 0.0
    %1181 = vst.msk [vmem:[#allocation2 + $0x1f8] sm:$0xff] %vm572, 0.0
    %1182 = vst.msk [vmem:[#allocation2 + $0x200] sm:$0xff] %vm572, 0.0
    %1183 = vst.msk [vmem:[#allocation2 + $0x208] sm:$0x3] %vm1119, 0.0
    %1184 = vst.msk [vmem:[#allocation2 + $0x210] sm:$0xff] %vm572, 0.0
    %1185 = vst.msk [vmem:[#allocation2 + $0x218] sm:$0xff] %vm572, 0.0
    %1186 = vst.msk [vmem:[#allocation2 + $0x220] sm:$0x3] %vm1119, 0.0
    %1187 = vst.msk [vmem:[#allocation2 + $0x228] sm:$0xff] %vm572, 0.0
    %1188 = vst.msk [vmem:[#allocation2 + $0x230] sm:$0xff] %vm572, 0.0
    %1189 = vst.msk [vmem:[#allocation2 + $0x238] sm:$0x3] %vm1119, 0.0
    %1190 = vst.msk [vmem:[#allocation2 + $0x240] sm:$0xff] %vm572, 0.0
    %1191 = vst.msk [vmem:[#allocation2 + $0x248] sm:$0xff] %vm572, 0.0
    %1192 = vst.msk [vmem:[#allocation2 + $0x250] sm:$0x3] %vm1119, 0.0
    %1193 = vst.msk [vmem:[#allocation2 + $0x258] sm:$0xff] %vm572, 0.0
    %1194 = vst.msk [vmem:[#allocation2 + $0x260] sm:$0xff] %vm572, 0.0
    %1195 = vst.msk [vmem:[#allocation2 + $0x268] sm:$0x3] %vm1119, 0.0
    %1196 = vst.msk [vmem:[#allocation2 + $0x270] sm:$0xff] %vm572, 0.0
    %1197 = vst.msk [vmem:[#allocation2 + $0x278] sm:$0xff] %vm572, 0.0
    %1198 = vst.msk [vmem:[#allocation2 + $0x280] sm:$0x3] %vm1119, 0.0
    %1199 = vst.msk [vmem:[#allocation2 + $0x288] sm:$0xff] %vm572, 0.0
    %1200 = vst.msk [vmem:[#allocation2 + $0x290] sm:$0xff] %vm572, 0.0
    %1201 = vst.msk [vmem:[#allocation2 + $0x298] sm:$0x3] %vm1119, 0.0
    %1202 = vst.msk [vmem:[#allocation2 + $0x2a0] sm:$0xff] %vm572, 0.0
    %1203 = vst.msk [vmem:[#allocation2 + $0x2a8] sm:$0xff] %vm572, 0.0
    %1204 = vst.msk [vmem:[#allocation2 + $0x2b0] sm:$0x3] %vm1119, 0.0
    %1205 = vst.msk [vmem:[#allocation2 + $0x2b8] sm:$0xff] %vm572, 0.0
    %1206 = vst.msk [vmem:[#allocation2 + $0x2c0] sm:$0xff] %vm572, 0.0
    %1207 = vst.msk [vmem:[#allocation2 + $0x2c8] sm:$0x3] %vm1119, 0.0
    %1208 = vst.msk [vmem:[#allocation2 + $0x2d0] sm:$0xff] %vm572, 0.0
    %1209 = vst.msk [vmem:[#allocation2 + $0x2d8] sm:$0xff] %vm572, 0.0
    %1210 = vst.msk [vmem:[#allocation2 + $0x2e0] sm:$0x3] %vm1119, 0.0
    %1211 = vst.msk [vmem:[#allocation2 + $0x2e8] sm:$0xff] %vm572, 0.0
    %1212 = vst.msk [vmem:[#allocation2 + $0x2f0] sm:$0xff] %vm572, 0.0
    %1213 = vst.msk [vmem:[#allocation2 + $0x2f8] sm:$0x3] %vm1119, 0.0
    %1214 = vst.msk [vmem:[#allocation2 + $0x300] sm:$0xff] %vm572, 0.0
    %1215 = vst.msk [vmem:[#allocation2 + $0x308] sm:$0xff] %vm572, 0.0
    %1216 = vst.msk [vmem:[#allocation2 + $0x310] sm:$0x3] %vm1119, 0.0
    %1217 = vst.msk [vmem:[#allocation2 + $0x318] sm:$0xff] %vm572, 0.0
    %1218 = vst.msk [vmem:[#allocation2 + $0x320] sm:$0xff] %vm572, 0.0
    %1219 = vst.msk [vmem:[#allocation2 + $0x328] sm:$0x3] %vm1119, 0.0
    %1220 = vst.msk [vmem:[#allocation2 + $0x330] sm:$0xff] %vm572, 0.0
    %1221 = vst.msk [vmem:[#allocation2 + $0x338] sm:$0xff] %vm572, 0.0
    %1222 = vst.msk [vmem:[#allocation2 + $0x340] sm:$0x3] %vm1119, 0.0
    %1223 = vst.msk [vmem:[#allocation2 + $0x348] sm:$0xff] %vm572, 0.0
    %1224 = vst.msk [vmem:[#allocation2 + $0x350] sm:$0xff] %vm572, 0.0
    %1225 = vst.msk [vmem:[#allocation2 + $0x358] sm:$0x3] %vm1119, 0.0
    %s1226 = scalar_lea.vmem [#allocation2], 24
    %1227 = vst.msk [vmem:[%s1226 + $0x1] sm:$0xff] %vm572, %v1053
    %1228 = vst.msk [vmem:[%s1226 + $0x9] sm:$0xff] %vm572, %v1054
    %1229 = vst.msk [vmem:[%s1226 + $0x19] sm:$0xff] %vm572, %v1055
    %1230 = vst.msk [vmem:[%s1226 + $0x21] sm:$0xff] %vm572, %v1056
    %1231 = vst.msk [vmem:[%s1226 + $0x31] sm:$0xff] %vm572, %v1057
    %1232 = vst.msk [vmem:[%s1226 + $0x39] sm:$0xff] %vm572, %v1058
    %1233 = vst.msk [vmem:[%s1226 + $0x49] sm:$0xff] %vm572, %v1059
    %1234 = vst.msk [vmem:[%s1226 + $0x51] sm:$0xff] %vm572, %v1060
    %1235 = vst.msk [vmem:[%s1226 + $0x61] sm:$0xff] %vm572, %v1061
    %1236 = vst.msk [vmem:[%s1226 + $0x69] sm:$0xff] %vm572, %v1062
    %1237 = vst.msk [vmem:[%s1226 + $0x79] sm:$0xff] %vm572, %v1063
    %1238 = vst.msk [vmem:[%s1226 + $0x81] sm:$0xff] %vm572, %v1064
    %1239 = vst.msk [vmem:[%s1226 + $0x91] sm:$0xff] %vm572, %v1065
    %1240 = vst.msk [vmem:[%s1226 + $0x99] sm:$0xff] %vm572, %v1066
    %1241 = vst.msk [vmem:[%s1226 + $0xa9] sm:$0xff] %vm572, %v1067
    %1242 = vst.msk [vmem:[%s1226 + $0xb1] sm:$0xff] %vm572, %v1068
    %1243 = vst.msk [vmem:[%s1226 + $0xc1] sm:$0xff] %vm572, %v1069
    %1244 = vst.msk [vmem:[%s1226 + $0xc9] sm:$0xff] %vm572, %v1070
    %1245 = vst.msk [vmem:[%s1226 + $0xd9] sm:$0xff] %vm572, %v1071
    %1246 = vst.msk [vmem:[%s1226 + $0xe1] sm:$0xff] %vm572, %v1072
    %1247 = vst.msk [vmem:[%s1226 + $0xf1] sm:$0xff] %vm572, %v1073
    %1248 = vst.msk [vmem:[%s1226 + $0xf9] sm:$0xff] %vm572, %v1074
    %1249 = vst.msk [vmem:[%s1226 + $0x109] sm:$0xff] %vm572, %v1075
    %1250 = vst.msk [vmem:[%s1226 + $0x111] sm:$0xff] %vm572, %v1076
    %1251 = vst.msk [vmem:[%s1226 + $0x121] sm:$0xff] %vm572, %v1077
    %1252 = vst.msk [vmem:[%s1226 + $0x129] sm:$0xff] %vm572, %v1078
    %1253 = vst.msk [vmem:[%s1226 + $0x139] sm:$0xff] %vm572, %v1079
    %1254 = vst.msk [vmem:[%s1226 + $0x141] sm:$0xff] %vm572, %v1080
    %1255 = vst.msk [vmem:[%s1226 + $0x151] sm:$0xff] %vm572, %v1081
    %1256 = vst.msk [vmem:[%s1226 + $0x159] sm:$0xff] %vm572, %v1082
    %1257 = vst.msk [vmem:[%s1226 + $0x169] sm:$0xff] %vm572, %v1083
    %1258 = vst.msk [vmem:[%s1226 + $0x171] sm:$0xff] %vm572, %v1084
    %1259 = vst.msk [vmem:[%s1226 + $0x1b1] sm:$0xff] %vm572, %v1085
    %1260 = vst.msk [vmem:[%s1226 + $0x1b9] sm:$0xff] %vm572, %v1086
    %1261 = vst.msk [vmem:[%s1226 + $0x1c9] sm:$0xff] %vm572, %v1087
    %1262 = vst.msk [vmem:[%s1226 + $0x1d1] sm:$0xff] %vm572, %v1088
    %1263 = vst.msk [vmem:[%s1226 + $0x1e1] sm:$0xff] %vm572, %v1089
    %1264 = vst.msk [vmem:[%s1226 + $0x1e9] sm:$0xff] %vm572, %v1090
    %1265 = vst.msk [vmem:[%s1226 + $0x1f9] sm:$0xff] %vm572, %v1091
    %1266 = vst.msk [vmem:[%s1226 + $0x201] sm:$0xff] %vm572, %v1092
    %1267 = vst.msk [vmem:[%s1226 + $0x211] sm:$0xff] %vm572, %v1093
    %1268 = vst.msk [vmem:[%s1226 + $0x219] sm:$0xff] %vm572, %v1094
    %1269 = vst.msk [vmem:[%s1226 + $0x229] sm:$0xff] %vm572, %v1095
    %1270 = vst.msk [vmem:[%s1226 + $0x231] sm:$0xff] %vm572, %v1096
    %1271 = vst.msk [vmem:[%s1226 + $0x241] sm:$0xff] %vm572, %v1097
    %1272 = vst.msk [vmem:[%s1226 + $0x249] sm:$0xff] %vm572, %v1098
    %1273 = vst.msk [vmem:[%s1226 + $0x259] sm:$0xff] %vm572, %v1099
    %1274 = vst.msk [vmem:[%s1226 + $0x261] sm:$0xff] %vm572, %v1100
    %1275 = vst.msk [vmem:[%s1226 + $0x271] sm:$0xff] %vm572, %v1101
    %1276 = vst.msk [vmem:[%s1226 + $0x279] sm:$0xff] %vm572, %v1102
    %1277 = vst.msk [vmem:[%s1226 + $0x289] sm:$0xff] %vm572, %v1103
    %1278 = vst.msk [vmem:[%s1226 + $0x291] sm:$0xff] %vm572, %v1104
    %1279 = vst.msk [vmem:[%s1226 + $0x2a1] sm:$0xff] %vm572, %v1105
    %1280 = vst.msk [vmem:[%s1226 + $0x2a9] sm:$0xff] %vm572, %v1106
    %1281 = vst.msk [vmem:[%s1226 + $0x2b9] sm:$0xff] %vm572, %v1107
    %1282 = vst.msk [vmem:[%s1226 + $0x2c1] sm:$0xff] %vm572, %v1108
    %1283 = vst.msk [vmem:[%s1226 + $0x2d1] sm:$0xff] %vm572, %v1109
    %1284 = vst.msk [vmem:[%s1226 + $0x2d9] sm:$0xff] %vm572, %v1110
    %1285 = vst.msk [vmem:[%s1226 + $0x2e9] sm:$0xff] %vm572, %v1111
    %1286 = vst.msk [vmem:[%s1226 + $0x2f1] sm:$0xff] %vm572, %v1112
    %1287 = vst.msk [vmem:[%s1226 + $0x301] sm:$0xff] %vm572, %v1113
    %1288 = vst.msk [vmem:[%s1226 + $0x309] sm:$0xff] %vm572, %v1114
    %1289 = vst.msk [vmem:[%s1226 + $0x319] sm:$0xff] %vm572, %v1115
    %1290 = vst.msk [vmem:[%s1226 + $0x321] sm:$0xff] %vm572, %v1116
    %v1291 = vld [vmem:[#allocation2] sm:$0xff]
    %v1292 = vld [vmem:[#allocation2 + $0x8] sm:$0xff]
    %v1293 = vld [vmem:[#allocation2 + $0x10] sm:$0x3]
    %v1294 = vld [vmem:[#allocation2 + $0x18] sm:$0xff]
    %v1295 = vld [vmem:[#allocation2 + $0x20] sm:$0xff]
    %v1296 = vld [vmem:[#allocation2 + $0x28] sm:$0x3]
    %v1297 = vld [vmem:[#allocation2 + $0x30] sm:$0xff]
    %v1298 = vld [vmem:[#allocation2 + $0x38] sm:$0xff]
    %v1299 = vld [vmem:[#allocation2 + $0x40] sm:$0x3]
    %v1300 = vld [vmem:[#allocation2 + $0x48] sm:$0xff]
    %v1301 = vld [vmem:[#allocation2 + $0x50] sm:$0xff]
    %v1302 = vld [vmem:[#allocation2 + $0x58] sm:$0x3]
    %v1303 = vld [vmem:[#allocation2 + $0x60] sm:$0xff]
    %v1304 = vld [vmem:[#allocation2 + $0x68] sm:$0xff]
    %v1305 = vld [vmem:[#allocation2 + $0x70] sm:$0x3]
    %v1306 = vld [vmem:[#allocation2 + $0x78] sm:$0xff]
    %v1307 = vld [vmem:[#allocation2 + $0x80] sm:$0xff]
    %v1308 = vld [vmem:[#allocation2 + $0x88] sm:$0x3]
    %v1309 = vld [vmem:[#allocation2 + $0x90] sm:$0xff]
    %v1310 = vld [vmem:[#allocation2 + $0x98] sm:$0xff]
    %v1311 = vld [vmem:[#allocation2 + $0xa0] sm:$0x3]
    %v1312 = vld [vmem:[#allocation2 + $0xa8] sm:$0xff]
    %v1313 = vld [vmem:[#allocation2 + $0xb0] sm:$0xff]
    %v1314 = vld [vmem:[#allocation2 + $0xb8] sm:$0x3]
    %v1315 = vld [vmem:[#allocation2 + $0xc0] sm:$0xff]
    %v1316 = vld [vmem:[#allocation2 + $0xc8] sm:$0xff]
    %v1317 = vld [vmem:[#allocation2 + $0xd0] sm:$0x3]
    %v1318 = vld [vmem:[#allocation2 + $0xd8] sm:$0xff]
    %v1319 = vld [vmem:[#allocation2 + $0xe0] sm:$0xff]
    %v1320 = vld [vmem:[#allocation2 + $0xe8] sm:$0x3]
    %v1321 = vld [vmem:[#allocation2 + $0xf0] sm:$0xff]
    %v1322 = vld [vmem:[#allocation2 + $0xf8] sm:$0xff]
    %v1323 = vld [vmem:[#allocation2 + $0x100] sm:$0x3]
    %v1324 = vld [vmem:[#allocation2 + $0x108] sm:$0xff]
    %v1325 = vld [vmem:[#allocation2 + $0x110] sm:$0xff]
    %v1326 = vld [vmem:[#allocation2 + $0x118] sm:$0x3]
    %v1327 = vld [vmem:[#allocation2 + $0x120] sm:$0xff]
    %v1328 = vld [vmem:[#allocation2 + $0x128] sm:$0xff]
    %v1329 = vld [vmem:[#allocation2 + $0x130] sm:$0x3]
    %v1330 = vld [vmem:[#allocation2 + $0x138] sm:$0xff]
    %v1331 = vld [vmem:[#allocation2 + $0x140] sm:$0xff]
    %v1332 = vld [vmem:[#allocation2 + $0x148] sm:$0x3]
    %v1333 = vld [vmem:[#allocation2 + $0x150] sm:$0xff]
    %v1334 = vld [vmem:[#allocation2 + $0x158] sm:$0xff]
    %v1335 = vld [vmem:[#allocation2 + $0x160] sm:$0x3]
    %v1336 = vld [vmem:[#allocation2 + $0x168] sm:$0xff]
    %v1337 = vld [vmem:[#allocation2 + $0x170] sm:$0xff]
    %v1338 = vld [vmem:[#allocation2 + $0x178] sm:$0x3]
    %v1339 = vld [vmem:[#allocation2 + $0x180] sm:$0xff]
    %v1340 = vld [vmem:[#allocation2 + $0x188] sm:$0xff]
    %v1341 = vld [vmem:[#allocation2 + $0x190] sm:$0x3]
    %v1342 = vld [vmem:[#allocation2 + $0x198] sm:$0xff]
    %v1343 = vld [vmem:[#allocation2 + $0x1a0] sm:$0xff]
    %v1344 = vld [vmem:[#allocation2 + $0x1a8] sm:$0x3]
    %v1345 = vld [vmem:[#allocation2 + $0x1b0] sm:$0xff]
    %v1346 = vld [vmem:[#allocation2 + $0x1b8] sm:$0xff]
    %v1347 = vld [vmem:[#allocation2 + $0x1c0] sm:$0x3]
    %v1348 = vld [vmem:[#allocation2 + $0x1c8] sm:$0xff]
    %v1349 = vld [vmem:[#allocation2 + $0x1d0] sm:$0xff]
    %v1350 = vld [vmem:[#allocation2 + $0x1d8] sm:$0x3]
    %v1351 = vld [vmem:[#allocation2 + $0x1e0] sm:$0xff]
    %v1352 = vld [vmem:[#allocation2 + $0x1e8] sm:$0xff]
    %v1353 = vld [vmem:[#allocation2 + $0x1f0] sm:$0x3]
    %v1354 = vld [vmem:[#allocation2 + $0x1f8] sm:$0xff]
    %v1355 = vld [vmem:[#allocation2 + $0x200] sm:$0xff]
    %v1356 = vld [vmem:[#allocation2 + $0x208] sm:$0x3]
    %v1357 = vld [vmem:[#allocation2 + $0x210] sm:$0xff]
    %v1358 = vld [vmem:[#allocation2 + $0x218] sm:$0xff]
    %v1359 = vld [vmem:[#allocation2 + $0x220] sm:$0x3]
    %v1360 = vld [vmem:[#allocation2 + $0x228] sm:$0xff]
    %v1361 = vld [vmem:[#allocation2 + $0x230] sm:$0xff]
    %v1362 = vld [vmem:[#allocation2 + $0x238] sm:$0x3]
    %v1363 = vld [vmem:[#allocation2 + $0x240] sm:$0xff]
    %v1364 = vld [vmem:[#allocation2 + $0x248] sm:$0xff]
    %v1365 = vld [vmem:[#allocation2 + $0x250] sm:$0x3]
    %v1366 = vld [vmem:[#allocation2 + $0x258] sm:$0xff]
    %v1367 = vld [vmem:[#allocation2 + $0x260] sm:$0xff]
    %v1368 = vld [vmem:[#allocation2 + $0x268] sm:$0x3]
    %v1369 = vld [vmem:[#allocation2 + $0x270] sm:$0xff]
    %v1370 = vld [vmem:[#allocation2 + $0x278] sm:$0xff]
    %v1371 = vld [vmem:[#allocation2 + $0x280] sm:$0x3]
    %v1372 = vld [vmem:[#allocation2 + $0x288] sm:$0xff]
    %v1373 = vld [vmem:[#allocation2 + $0x290] sm:$0xff]
    %v1374 = vld [vmem:[#allocation2 + $0x298] sm:$0x3]
    %v1375 = vld [vmem:[#allocation2 + $0x2a0] sm:$0xff]
    %v1376 = vld [vmem:[#allocation2 + $0x2a8] sm:$0xff]
    %v1377 = vld [vmem:[#allocation2 + $0x2b0] sm:$0x3]
    %v1378 = vld [vmem:[#allocation2 + $0x2b8] sm:$0xff]
    %v1379 = vld [vmem:[#allocation2 + $0x2c0] sm:$0xff]
    %v1380 = vld [vmem:[#allocation2 + $0x2c8] sm:$0x3]
    %v1381 = vld [vmem:[#allocation2 + $0x2d0] sm:$0xff]
    %v1382 = vld [vmem:[#allocation2 + $0x2d8] sm:$0xff]
    %v1383 = vld [vmem:[#allocation2 + $0x2e0] sm:$0x3]
    %v1384 = vld [vmem:[#allocation2 + $0x2e8] sm:$0xff]
    %v1385 = vld [vmem:[#allocation2 + $0x2f0] sm:$0xff]
    %v1386 = vld [vmem:[#allocation2 + $0x2f8] sm:$0x3]
    %v1387 = vld [vmem:[#allocation2 + $0x300] sm:$0xff]
    %v1388 = vld [vmem:[#allocation2 + $0x308] sm:$0xff]
    %v1389 = vld [vmem:[#allocation2 + $0x310] sm:$0x3]
    %v1390 = vld [vmem:[#allocation2 + $0x318] sm:$0xff]
    %v1391 = vld [vmem:[#allocation2 + $0x320] sm:$0xff]
    %v1392 = vld [vmem:[#allocation2 + $0x328] sm:$0x3]
    %v1393 = vld [vmem:[#allocation2 + $0x330] sm:$0xff]
    %v1394 = vld [vmem:[#allocation2 + $0x338] sm:$0xff]
    %v1395 = vld [vmem:[#allocation2 + $0x340] sm:$0x3]
    %v1396 = vld [vmem:[#allocation2 + $0x348] sm:$0xff]
    %v1397 = vld [vmem:[#allocation2 + $0x350] sm:$0xff]
    %v1398 = vld [vmem:[#allocation2 + $0x358] sm:$0x3]
    %v1399 = vpack.c.bf16 %v1292, %v1291
    %v1400 = vpack.c.bf16 %v1295, %v1294
    %v1401 = vpack.c.bf16 %v1298, %v1297
    %v1402 = vpack.c.bf16 %v1301, %v1300
    %v1403 = vpack.c.bf16 %v1304, %v1303
    %v1404 = vpack.c.bf16 %v1307, %v1306
    %v1405 = vpack.c.bf16 %v1310, %v1309
    %v1406 = vpack.c.bf16 %v1313, %v1312
    %v1407 = vpack.c.bf16 %v1316, %v1315
    %v1408 = vpack.c.bf16 %v1319, %v1318
    %v1409 = vpack.c.bf16 %v1322, %v1321
    %v1410 = vpack.c.bf16 %v1325, %v1324
    %v1411 = vpack.c.bf16 %v1328, %v1327
    %v1412 = vpack.c.bf16 %v1331, %v1330
    %v1413 = vpack.c.bf16 %v1334, %v1333
    %v1414 = vpack.c.bf16 %v1337, %v1336
    %v1415 = vpack.c.bf16 %v1346, %v1345
    %v1416 = vpack.c.bf16 %v1349, %v1348
    %v1417 = vpack.c.bf16 %v1352, %v1351
    %v1418 = vpack.c.bf16 %v1355, %v1354
    %v1419 = vpack.c.bf16 %v1358, %v1357
    %v1420 = vpack.c.bf16 %v1361, %v1360
    %v1421 = vpack.c.bf16 %v1364, %v1363
    %v1422 = vpack.c.bf16 %v1367, %v1366
    %v1423 = vpack.c.bf16 %v1370, %v1369
    %v1424 = vpack.c.bf16 %v1373, %v1372
    %v1425 = vpack.c.bf16 %v1376, %v1375
    %v1426 = vpack.c.bf16 %v1379, %v1378
    %v1427 = vpack.c.bf16 %v1382, %v1381
    %v1428 = vpack.c.bf16 %v1385, %v1384
    %v1429 = vpack.c.bf16 %v1388, %v1387
    %v1430 = vpack.c.bf16 %v1391, %v1390
    %v1431 = vld [vmem:[#allocation6] sm:$0xf]
    %v1432 = vld [vmem:[#allocation6 + $0x4] sm:$0xf]
    %v1433 = vld [vmem:[#allocation6 + $0x8] sm:$0xf]
    %v1434 = vld [vmem:[#allocation6 + $0xc] sm:$0xf]
    %vm1531 = vcmask 1046528
    %v1532 = vrot.slane %v1291, 1
    %v1533 = vrot.slane %v1292, 1
    %v1534 = vsel %vm1531, %v1532, %v1533
    %v1535 = vrot.slane %v1293, 1
    %v1536 = vsel %vm1531, %v1533, %v1535
    %v1537 = vrot.slane %v1294, 1
    %v1538 = vrot.slane %v1295, 1
    %v1539 = vsel %vm1531, %v1537, %v1538
    %v1540 = vrot.slane %v1296, 1
    %v1541 = vsel %vm1531, %v1538, %v1540
    %v1542 = vrot.slane %v1297, 1
    %v1543 = vrot.slane %v1298, 1
    %v1544 = vsel %vm1531, %v1542, %v1543
    %v1545 = vrot.slane %v1299, 1
    %v1546 = vsel %vm1531, %v1543, %v1545
    %v1547 = vrot.slane %v1300, 1
    %v1548 = vrot.slane %v1301, 1
    %v1549 = vsel %vm1531, %v1547, %v1548
    %v1550 = vrot.slane %v1302, 1
    %v1551 = vsel %vm1531, %v1548, %v1550
    %v1552 = vrot.slane %v1303, 1
    %v1553 = vrot.slane %v1304, 1
    %v1554 = vsel %vm1531, %v1552, %v1553
    %v1555 = vrot.slane %v1305, 1
    %v1556 = vsel %vm1531, %v1553, %v1555
    %v1557 = vrot.slane %v1306, 1
    %v1558 = vrot.slane %v1307, 1
    %v1559 = vsel %vm1531, %v1557, %v1558
    %v1560 = vrot.slane %v1308, 1
    %v1561 = vsel %vm1531, %v1558, %v1560
    %v1562 = vrot.slane %v1309, 1
    %v1563 = vrot.slane %v1310, 1
    %v1564 = vsel %vm1531, %v1562, %v1563
    %v1565 = vrot.slane %v1311, 1
    %v1566 = vsel %vm1531, %v1563, %v1565
    %v1567 = vrot.slane %v1312, 1
    %v1568 = vrot.slane %v1313, 1
    %v1569 = vsel %vm1531, %v1567, %v1568
    %v1570 = vrot.slane %v1314, 1
    %v1571 = vsel %vm1531, %v1568, %v1570
    %v1572 = vrot.slane %v1315, 1
    %v1573 = vrot.slane %v1316, 1
    %v1574 = vsel %vm1531, %v1572, %v1573
    %v1575 = vrot.slane %v1317, 1
    %v1576 = vsel %vm1531, %v1573, %v1575
    %v1577 = vrot.slane %v1318, 1
    %v1578 = vrot.slane %v1319, 1
    %v1579 = vsel %vm1531, %v1577, %v1578
    %v1580 = vrot.slane %v1320, 1
    %v1581 = vsel %vm1531, %v1578, %v1580
    %v1582 = vrot.slane %v1321, 1
    %v1583 = vrot.slane %v1322, 1
    %v1584 = vsel %vm1531, %v1582, %v1583
    %v1585 = vrot.slane %v1323, 1
    %v1586 = vsel %vm1531, %v1583, %v1585
    %v1587 = vrot.slane %v1324, 1
    %v1588 = vrot.slane %v1325, 1
    %v1589 = vsel %vm1531, %v1587, %v1588
    %v1590 = vrot.slane %v1326, 1
    %v1591 = vsel %vm1531, %v1588, %v1590
    %v1592 = vrot.slane %v1327, 1
    %v1593 = vrot.slane %v1328, 1
    %v1594 = vsel %vm1531, %v1592, %v1593
    %v1595 = vrot.slane %v1329, 1
    %v1596 = vsel %vm1531, %v1593, %v1595
    %v1597 = vrot.slane %v1330, 1
    %v1598 = vrot.slane %v1331, 1
    %v1599 = vsel %vm1531, %v1597, %v1598
    %v1600 = vrot.slane %v1332, 1
    %v1601 = vsel %vm1531, %v1598, %v1600
    %v1602 = vrot.slane %v1333, 1
    %v1603 = vrot.slane %v1334, 1
    %v1604 = vsel %vm1531, %v1602, %v1603
    %v1605 = vrot.slane %v1335, 1
    %v1606 = vsel %vm1531, %v1603, %v1605
    %v1607 = vrot.slane %v1336, 1
    %v1608 = vrot.slane %v1337, 1
    %v1609 = vsel %vm1531, %v1607, %v1608
    %v1610 = vrot.slane %v1338, 1
    %v1611 = vsel %vm1531, %v1608, %v1610
    %v1612 = vrot.slane %v1345, 1
    %v1613 = vrot.slane %v1346, 1
    %v1614 = vsel %vm1531, %v1612, %v1613
    %v1615 = vrot.slane %v1347, 1
    %v1616 = vsel %vm1531, %v1613, %v1615
    %v1617 = vrot.slane %v1348, 1
    %v1618 = vrot.slane %v1349, 1
    %v1619 = vsel %vm1531, %v1617, %v1618
    %v1620 = vrot.slane %v1350, 1
    %v1621 = vsel %vm1531, %v1618, %v1620
    %v1622 = vrot.slane %v1351, 1
    %v1623 = vrot.slane %v1352, 1
    %v1624 = vsel %vm1531, %v1622, %v1623
    %v1625 = vrot.slane %v1353, 1
    %v1626 = vsel %vm1531, %v1623, %v1625
    %v1627 = vrot.slane %v1354, 1
    %v1628 = vrot.slane %v1355, 1
    %v1629 = vsel %vm1531, %v1627, %v1628
    %v1630 = vrot.slane %v1356, 1
    %v1631 = vsel %vm1531, %v1628, %v1630
    %v1632 = vrot.slane %v1357, 1
    %v1633 = vrot.slane %v1358, 1
    %v1634 = vsel %vm1531, %v1632, %v1633
    %v1635 = vrot.slane %v1359, 1
    %v1636 = vsel %vm1531, %v1633, %v1635
    %v1637 = vrot.slane %v1360, 1
    %v1638 = vrot.slane %v1361, 1
    %v1639 = vsel %vm1531, %v1637, %v1638
    %v1640 = vrot.slane %v1362, 1
    %v1641 = vsel %vm1531, %v1638, %v1640
    %v1642 = vrot.slane %v1363, 1
    %v1643 = vrot.slane %v1364, 1
    %v1644 = vsel %vm1531, %v1642, %v1643
    %v1645 = vrot.slane %v1365, 1
    %v1646 = vsel %vm1531, %v1643, %v1645
    %v1647 = vrot.slane %v1366, 1
    %v1648 = vrot.slane %v1367, 1
    %v1649 = vsel %vm1531, %v1647, %v1648
    %v1650 = vrot.slane %v1368, 1
    %v1651 = vsel %vm1531, %v1648, %v1650
    %v1652 = vrot.slane %v1369, 1
    %v1653 = vrot.slane %v1370, 1
    %v1654 = vsel %vm1531, %v1652, %v1653
    %v1655 = vrot.slane %v1371, 1
    %v1656 = vsel %vm1531, %v1653, %v1655
    %v1657 = vrot.slane %v1372, 1
    %v1658 = vrot.slane %v1373, 1
    %v1659 = vsel %vm1531, %v1657, %v1658
    %v1660 = vrot.slane %v1374, 1
    %v1661 = vsel %vm1531, %v1658, %v1660
    %v1662 = vrot.slane %v1375, 1
    %v1663 = vrot.slane %v1376, 1
    %v1664 = vsel %vm1531, %v1662, %v1663
    %v1665 = vrot.slane %v1377, 1
    %v1666 = vsel %vm1531, %v1663, %v1665
    %v1667 = vrot.slane %v1378, 1
    %v1668 = vrot.slane %v1379, 1
    %v1669 = vsel %vm1531, %v1667, %v1668
    %v1670 = vrot.slane %v1380, 1
    %v1671 = vsel %vm1531, %v1668, %v1670
    %v1672 = vrot.slane %v1381, 1
    %v1673 = vrot.slane %v1382, 1
    %v1674 = vsel %vm1531, %v1672, %v1673
    %v1675 = vrot.slane %v1383, 1
    %v1676 = vsel %vm1531, %v1673, %v1675
    %v1677 = vrot.slane %v1384, 1
    %v1678 = vrot.slane %v1385, 1
    %v1679 = vsel %vm1531, %v1677, %v1678
    %v1680 = vrot.slane %v1386, 1
    %v1681 = vsel %vm1531, %v1678, %v1680
    %v1682 = vrot.slane %v1387, 1
    %v1683 = vrot.slane %v1388, 1
    %v1684 = vsel %vm1531, %v1682, %v1683
    %v1685 = vrot.slane %v1389, 1
    %v1686 = vsel %vm1531, %v1683, %v1685
    %v1687 = vrot.slane %v1390, 1
    %v1688 = vrot.slane %v1391, 1
    %v1689 = vsel %vm1531, %v1687, %v1688
    %v1690 = vrot.slane %v1392, 1
    %v1691 = vsel %vm1531, %v1688, %v1690
    %v1756 = vpack.c.bf16 %v1536, %v1534
    %v1757 = vpack.c.bf16 %v1541, %v1539
    %v1758 = vpack.c.bf16 %v1546, %v1544
    %v1759 = vpack.c.bf16 %v1551, %v1549
    %v1760 = vpack.c.bf16 %v1556, %v1554
    %v1761 = vpack.c.bf16 %v1561, %v1559
    %v1762 = vpack.c.bf16 %v1566, %v1564
    %v1763 = vpack.c.bf16 %v1571, %v1569
    %v1764 = vpack.c.bf16 %v1576, %v1574
    %v1765 = vpack.c.bf16 %v1581, %v1579
    %v1766 = vpack.c.bf16 %v1586, %v1584
    %v1767 = vpack.c.bf16 %v1591, %v1589
    %v1768 = vpack.c.bf16 %v1596, %v1594
    %v1769 = vpack.c.bf16 %v1601, %v1599
    %v1770 = vpack.c.bf16 %v1606, %v1604
    %v1771 = vpack.c.bf16 %v1611, %v1609
    %v1772 = vpack.c.bf16 %v1616, %v1614
    %v1773 = vpack.c.bf16 %v1621, %v1619
    %v1774 = vpack.c.bf16 %v1626, %v1624
    %v1775 = vpack.c.bf16 %v1631, %v1629
    %v1776 = vpack.c.bf16 %v1636, %v1634
    %v1777 = vpack.c.bf16 %v1641, %v1639
    %v1778 = vpack.c.bf16 %v1646, %v1644
    %v1779 = vpack.c.bf16 %v1651, %v1649
    %v1780 = vpack.c.bf16 %v1656, %v1654
    %v1781 = vpack.c.bf16 %v1661, %v1659
    %v1782 = vpack.c.bf16 %v1666, %v1664
    %v1783 = vpack.c.bf16 %v1671, %v1669
    %v1784 = vpack.c.bf16 %v1676, %v1674
    %v1785 = vpack.c.bf16 %v1681, %v1679
    %v1786 = vpack.c.bf16 %v1686, %v1684
    %v1787 = vpack.c.bf16 %v1691, %v1689
    %s1788 = scalar_lea.vmem [#allocation6], 16
    %v1789 = vld [vmem:[%s1788] sm:$0xf]
    %v1790 = vld [vmem:[%s1788 + $0x4] sm:$0xf]
    %v1791 = vld [vmem:[%s1788 + $0x8] sm:$0xf]
    %v1792 = vld [vmem:[%s1788 + $0xc] sm:$0xf]
    %v1797 = vunpack.c.l.b16 %v1789
    %v1798 = vunpack.c.l.b16 %v1790
    %v1799 = vunpack.c.l.b16 %v1791
    %v1800 = vunpack.c.l.b16 %v1792
    %v1801 = vpack.c.b16 %v1798, %v1797
    %v1802 = vpack.c.b16 %v1800, %v1799
    %v1806 = vsel %vm572, %v1756, 0
    %v1809 = vsel %vm572, %v1757, 0
    %v1812 = vsel %vm572, %v1758, 0
    %v1815 = vsel %vm572, %v1759, 0
    %v1818 = vsel %vm572, %v1760, 0
    %v1821 = vsel %vm572, %v1761, 0
    %v1824 = vsel %vm572, %v1762, 0
    %v1827 = vsel %vm572, %v1763, 0
    %v1830 = vsel %vm572, %v1764, 0
    %v1833 = vsel %vm572, %v1765, 0
    %v1836 = vsel %vm572, %v1766, 0
    %v1839 = vsel %vm572, %v1767, 0
    %v1842 = vsel %vm572, %v1768, 0
    %v1845 = vsel %vm572, %v1769, 0
    %v1848 = vsel %vm572, %v1770, 0
    %v1851 = vsel %vm572, %v1771, 0
    %v1854 = vsel %vm572, %v1772, 0
    %v1857 = vsel %vm572, %v1773, 0
    %v1860 = vsel %vm572, %v1774, 0
    %v1863 = vsel %vm572, %v1775, 0
    %v1866 = vsel %vm572, %v1776, 0
    %v1869 = vsel %vm572, %v1777, 0
    %v1872 = vsel %vm572, %v1778, 0
    %v1875 = vsel %vm572, %v1779, 0
    %v1878 = vsel %vm572, %v1780, 0
    %v1881 = vsel %vm572, %v1781, 0
    %v1884 = vsel %vm572, %v1782, 0
    %v1887 = vsel %vm572, %v1783, 0
    %v1890 = vsel %vm572, %v1784, 0
    %v1893 = vsel %vm572, %v1785, 0
    %v1896 = vsel %vm572, %v1786, 0
    %v1899 = vsel %vm572, %v1787, 0
    %1901 = vmatprep.subr.bf16.mxu0 0
    %1902 = vmatpush1.bf16.msra.mxu0 %v1801
    %1903 = vmatprep.subr.bf16.mxu0 0
    %1904 = vmatpush1.bf16.msra.mxu0 %v1802
    %1905 = vmatprep.subr.bf16.mxu0 0
    %1906 = vmatpush1.bf16.msra.mxu0 0
    %1907 = vmatprep.subr.bf16.mxu0 0
    %1908 = vmatpush1.bf16.msra.mxu0 0
    %1909 = vmatprep.subr.bf16.mxu0 0
    %1910 = vmatpush1.bf16.msra.mxu0 0
    %1911 = vmatprep.subr.bf16.mxu0 0
    %1912 = vmatpush1.bf16.msra.mxu0 0
    %1913 = vmatprep.subr.bf16.mxu0 0
    %1914 = vmatpush1.bf16.msra.mxu0 0
    %1915 = vmatprep.subr.bf16.mxu0 0
    %1916 = vmatpush1.bf16.msra.mxu0 0
    %1917 = vmatprep.subr.bf16.mxu0 0
    %1918 = vmatpush1.bf16.msra.mxu0 0
    %1919 = vmatprep.subr.bf16.mxu0 0
    %1920 = vmatpush1.bf16.msra.mxu0 0
    %1921 = vmatprep.subr.bf16.mxu0 0
    %1922 = vmatpush1.bf16.msra.mxu0 0
    %1923 = vmatprep.subr.bf16.mxu0 0
    %1924 = vmatpush1.bf16.msra.mxu0 0
    %1925 = vmatprep.subr.bf16.mxu0 0
    %1926 = vmatpush1.bf16.msra.mxu0 0
    %1927 = vmatprep.subr.bf16.mxu0 0
    %1928 = vmatpush1.bf16.msra.mxu0 0
    %1929 = vmatprep.subr.bf16.mxu0 0
    %1930 = vmatpush1.bf16.msra.mxu0 0
    %1931 = vmatprep.subr.bf16.mxu0 0
    %1932 = vmatpush1.bf16.msra.mxu0 0
    %1933 = vmatprep.mubr.bf16.mxu0 0
    %1934 = vmatmul.mubr.bf16.gmra.mrb[0].mxu0 %v1806
    %v1935 = vpop.f32.mrb[0].mxu0
    %v1936 = vadd.f32 0.0, %v1935
    %v1937 = vpop.f32.mrb[0].mxu0
    %v1938 = vpop.f32.mrb[0].mxu0
    %v1939 = vadd.f32 0.0, %v1938
    %v1940 = vpop.f32.mrb[0].mxu0
    %1941 = vmatprep.mubr.bf16.mxu0 0
    %1942 = vmatmul.mubr.bf16.gmra.mrb[0].mxu0 %v1809
    %v1943 = vpop.f32.mrb[0].mxu0
    %v1944 = vadd.f32 0.0, %v1943
    %v1945 = vpop.f32.mrb[0].mxu0
    %v1946 = vpop.f32.mrb[0].mxu0
    %v1947 = vadd.f32 0.0, %v1946
    %v1948 = vpop.f32.mrb[0].mxu0
    %1949 = vmatprep.mubr.bf16.mxu0 0
    %1950 = vmatmul.mubr.bf16.gmra.mrb[0].mxu0 %v1812
    %v1951 = vpop.f32.mrb[0].mxu0
    %v1952 = vadd.f32 0.0, %v1951
    %v1953 = vpop.f32.mrb[0].mxu0
    %v1954 = vpop.f32.mrb[0].mxu0
    %v1955 = vadd.f32 0.0, %v1954
    %v1956 = vpop.f32.mrb[0].mxu0
    %1957 = vmatprep.mubr.bf16.mxu0 0
    %1958 = vmatmul.mubr.bf16.gmra.mrb[0].mxu0 %v1815
    %v1959 = vpop.f32.mrb[0].mxu0
    %v1960 = vadd.f32 0.0, %v1959
    %v1961 = vpop.f32.mrb[0].mxu0
    %v1962 = vpop.f32.mrb[0].mxu0
    %v1963 = vadd.f32 0.0, %v1962
    %v1964 = vpop.f32.mrb[0].mxu0
    %1965 = vmatprep.mubr.bf16.mxu0 0
    %1966 = vmatmul.mubr.bf16.gmra.mrb[0].mxu0 %v1818
    %v1967 = vpop.f32.mrb[0].mxu0
    %v1968 = vadd.f32 0.0, %v1967
    %v1969 = vpop.f32.mrb[0].mxu0
    %v1970 = vpop.f32.mrb[0].mxu0
    %v1971 = vadd.f32 0.0, %v1970
    %v1972 = vpop.f32.mrb[0].mxu0
    %1973 = vmatprep.mubr.bf16.mxu0 0
    %1974 = vmatmul.mubr.bf16.gmra.mrb[0].mxu0 %v1821
    %v1975 = vpop.f32.mrb[0].mxu0
    %v1976 = vadd.f32 0.0, %v1975
    %v1977 = vpop.f32.mrb[0].mxu0
    %v1978 = vpop.f32.mrb[0].mxu0
    %v1979 = vadd.f32 0.0, %v1978
    %v1980 = vpop.f32.mrb[0].mxu0
    %1981 = vmatprep.mubr.bf16.mxu0 0
    %1982 = vmatmul.mubr.bf16.gmra.mrb[0].mxu0 %v1824
    %v1983 = vpop.f32.mrb[0].mxu0
    %v1984 = vadd.f32 0.0, %v1983
    %v1985 = vpop.f32.mrb[0].mxu0
    %v1986 = vpop.f32.mrb[0].mxu0
    %v1987 = vadd.f32 0.0, %v1986
    %v1988 = vpop.f32.mrb[0].mxu0
    %1989 = vmatprep.mubr.bf16.mxu0 0
    %1990 = vmatmul.mubr.bf16.gmra.mrb[0].mxu0 %v1827
    %v1991 = vpop.f32.mrb[0].mxu0
    %v1992 = vadd.f32 0.0, %v1991
    %v1993 = vpop.f32.mrb[0].mxu0
    %v1994 = vpop.f32.mrb[0].mxu0
    %v1995 = vadd.f32 0.0, %v1994
    %v1996 = vpop.f32.mrb[0].mxu0
    %1997 = vmatprep.mubr.bf16.mxu0 0
    %1998 = vmatmul.mubr.bf16.gmra.mrb[0].mxu0 %v1830
    %v1999 = vpop.f32.mrb[0].mxu0
    %v2000 = vadd.f32 0.0, %v1999
    %v2001 = vpop.f32.mrb[0].mxu0
    %v2002 = vpop.f32.mrb[0].mxu0
    %v2003 = vadd.f32 0.0, %v2002
    %v2004 = vpop.f32.mrb[0].mxu0
    %2005 = vmatprep.mubr.bf16.mxu0 0
    %2006 = vmatmul.mubr.bf16.gmra.mrb[0].mxu0 %v1833
    %v2007 = vpop.f32.mrb[0].mxu0
    %v2008 = vadd.f32 0.0, %v2007
    %v2009 = vpop.f32.mrb[0].mxu0
    %v2010 = vpop.f32.mrb[0].mxu0
    %v2011 = vadd.f32 0.0, %v2010
    %v2012 = vpop.f32.mrb[0].mxu0
    %2013 = vmatprep.mubr.bf16.mxu0 0
    %2014 = vmatmul.mubr.bf16.gmra.mrb[0].mxu0 %v1836
    %v2015 = vpop.f32.mrb[0].mxu0
    %v2016 = vadd.f32 0.0, %v2015
    %v2017 = vpop.f32.mrb[0].mxu0
    %v2018 = vpop.f32.mrb[0].mxu0
    %v2019 = vadd.f32 0.0, %v2018
    %v2020 = vpop.f32.mrb[0].mxu0
    %2021 = vmatprep.mubr.bf16.mxu0 0
    %2022 = vmatmul.mubr.bf16.gmra.mrb[0].mxu0 %v1839
    %v2023 = vpop.f32.mrb[0].mxu0
    %v2024 = vadd.f32 0.0, %v2023
    %v2025 = vpop.f32.mrb[0].mxu0
    %v2026 = vpop.f32.mrb[0].mxu0
    %v2027 = vadd.f32 0.0, %v2026
    %v2028 = vpop.f32.mrb[0].mxu0
    %2029 = vmatprep.mubr.bf16.mxu0 0
    %2030 = vmatmul.mubr.bf16.gmra.mrb[0].mxu0 %v1842
    %v2031 = vpop.f32.mrb[0].mxu0
    %v2032 = vadd.f32 0.0, %v2031
    %v2033 = vpop.f32.mrb[0].mxu0
    %v2034 = vpop.f32.mrb[0].mxu0
    %v2035 = vadd.f32 0.0, %v2034
    %v2036 = vpop.f32.mrb[0].mxu0
    %2037 = vmatprep.mubr.bf16.mxu0 0
    %2038 = vmatmul.mubr.bf16.gmra.mrb[0].mxu0 %v1845
    %v2039 = vpop.f32.mrb[0].mxu0
    %v2040 = vadd.f32 0.0, %v2039
    %v2041 = vpop.f32.mrb[0].mxu0
    %v2042 = vpop.f32.mrb[0].mxu0
    %v2043 = vadd.f32 0.0, %v2042
    %v2044 = vpop.f32.mrb[0].mxu0
    %2045 = vmatprep.mubr.bf16.mxu0 0
    %2046 = vmatmul.mubr.bf16.gmra.mrb[0].mxu0 %v1848
    %v2047 = vpop.f32.mrb[0].mxu0
    %v2048 = vadd.f32 0.0, %v2047
    %v2049 = vpop.f32.mrb[0].mxu0
    %v2050 = vpop.f32.mrb[0].mxu0
    %v2051 = vadd.f32 0.0, %v2050
    %v2052 = vpop.f32.mrb[0].mxu0
    %2053 = vmatprep.mubr.bf16.mxu0 0
    %2054 = vmatmul.mubr.bf16.gmra.mrb[0].mxu0 %v1851
    %v2055 = vpop.f32.mrb[0].mxu0
    %v2056 = vadd.f32 0.0, %v2055
    %v2057 = vpop.f32.mrb[0].mxu0
    %v2058 = vpop.f32.mrb[0].mxu0
    %v2059 = vadd.f32 0.0, %v2058
    %v2060 = vpop.f32.mrb[0].mxu0
    %2061 = vmatprep.mubr.bf16.mxu0 0
    %2062 = vmatmul.mubr.bf16.gmra.mrb[0].mxu0 %v1854
    %v2063 = vpop.f32.mrb[0].mxu0
    %v2064 = vadd.f32 0.0, %v2063
    %v2065 = vpop.f32.mrb[0].mxu0
    %v2066 = vpop.f32.mrb[0].mxu0
    %v2067 = vadd.f32 0.0, %v2066
    %v2068 = vpop.f32.mrb[0].mxu0
    %2069 = vmatprep.mubr.bf16.mxu0 0
    %2070 = vmatmul.mubr.bf16.gmra.mrb[0].mxu0 %v1857
    %v2071 = vpop.f32.mrb[0].mxu0
    %v2072 = vadd.f32 0.0, %v2071
    %v2073 = vpop.f32.mrb[0].mxu0
    %v2074 = vpop.f32.mrb[0].mxu0
    %v2075 = vadd.f32 0.0, %v2074
    %v2076 = vpop.f32.mrb[0].mxu0
    %2077 = vmatprep.mubr.bf16.mxu0 0
    %2078 = vmatmul.mubr.bf16.gmra.mrb[0].mxu0 %v1860
    %v2079 = vpop.f32.mrb[0].mxu0
    %v2080 = vadd.f32 0.0, %v2079
    %v2081 = vpop.f32.mrb[0].mxu0
    %v2082 = vpop.f32.mrb[0].mxu0
    %v2083 = vadd.f32 0.0, %v2082
    %v2084 = vpop.f32.mrb[0].mxu0
    %2085 = vmatprep.mubr.bf16.mxu0 0
    %2086 = vmatmul.mubr.bf16.gmra.mrb[0].mxu0 %v1863
    %v2087 = vpop.f32.mrb[0].mxu0
    %v2088 = vadd.f32 0.0, %v2087
    %v2089 = vpop.f32.mrb[0].mxu0
    %v2090 = vpop.f32.mrb[0].mxu0
    %v2091 = vadd.f32 0.0, %v2090
    %v2092 = vpop.f32.mrb[0].mxu0
    %2093 = vmatprep.mubr.bf16.mxu0 0
    %2094 = vmatmul.mubr.bf16.gmra.mrb[0].mxu0 %v1866
    %v2095 = vpop.f32.mrb[0].mxu0
    %v2096 = vadd.f32 0.0, %v2095
    %v2097 = vpop.f32.mrb[0].mxu0
    %v2098 = vpop.f32.mrb[0].mxu0
    %v2099 = vadd.f32 0.0, %v2098
    %v2100 = vpop.f32.mrb[0].mxu0
    %2101 = vmatprep.mubr.bf16.mxu0 0
    %2102 = vmatmul.mubr.bf16.gmra.mrb[0].mxu0 %v1869
    %v2103 = vpop.f32.mrb[0].mxu0
    %v2104 = vadd.f32 0.0, %v2103
    %v2105 = vpop.f32.mrb[0].mxu0
    %v2106 = vpop.f32.mrb[0].mxu0
    %v2107 = vadd.f32 0.0, %v2106
    %v2108 = vpop.f32.mrb[0].mxu0
    %2109 = vmatprep.mubr.bf16.mxu0 0
    %2110 = vmatmul.mubr.bf16.gmra.mrb[0].mxu0 %v1872
    %v2111 = vpop.f32.mrb[0].mxu0
    %v2112 = vadd.f32 0.0, %v2111
    %v2113 = vpop.f32.mrb[0].mxu0
    %v2114 = vpop.f32.mrb[0].mxu0
    %v2115 = vadd.f32 0.0, %v2114
    %v2116 = vpop.f32.mrb[0].mxu0
    %2117 = vmatprep.mubr.bf16.mxu0 0
    %2118 = vmatmul.mubr.bf16.gmra.mrb[0].mxu0 %v1875
    %v2119 = vpop.f32.mrb[0].mxu0
    %v2120 = vadd.f32 0.0, %v2119
    %v2121 = vpop.f32.mrb[0].mxu0
    %v2122 = vpop.f32.mrb[0].mxu0
    %v2123 = vadd.f32 0.0, %v2122
    %v2124 = vpop.f32.mrb[0].mxu0
    %2125 = vmatprep.mubr.bf16.mxu0 0
    %2126 = vmatmul.mubr.bf16.gmra.mrb[0].mxu0 %v1878
    %v2127 = vpop.f32.mrb[0].mxu0
    %v2128 = vadd.f32 0.0, %v2127
    %v2129 = vpop.f32.mrb[0].mxu0
    %v2130 = vpop.f32.mrb[0].mxu0
    %v2131 = vadd.f32 0.0, %v2130
    %v2132 = vpop.f32.mrb[0].mxu0
    %2133 = vmatprep.mubr.bf16.mxu0 0
    %2134 = vmatmul.mubr.bf16.gmra.mrb[0].mxu0 %v1881
    %v2135 = vpop.f32.mrb[0].mxu0
    %v2136 = vadd.f32 0.0, %v2135
    %v2137 = vpop.f32.mrb[0].mxu0
    %v2138 = vpop.f32.mrb[0].mxu0
    %v2139 = vadd.f32 0.0, %v2138
    %v2140 = vpop.f32.mrb[0].mxu0
    %2141 = vmatprep.mubr.bf16.mxu0 0
    %2142 = vmatmul.mubr.bf16.gmra.mrb[0].mxu0 %v1884
    %v2143 = vpop.f32.mrb[0].mxu0
    %v2144 = vadd.f32 0.0, %v2143
    %v2145 = vpop.f32.mrb[0].mxu0
    %v2146 = vpop.f32.mrb[0].mxu0
    %v2147 = vadd.f32 0.0, %v2146
    %v2148 = vpop.f32.mrb[0].mxu0
    %2149 = vmatprep.mubr.bf16.mxu0 0
    %2150 = vmatmul.mubr.bf16.gmra.mrb[0].mxu0 %v1887
    %v2151 = vpop.f32.mrb[0].mxu0
    %v2152 = vadd.f32 0.0, %v2151
    %v2153 = vpop.f32.mrb[0].mxu0
    %v2154 = vpop.f32.mrb[0].mxu0
    %v2155 = vadd.f32 0.0, %v2154
    %v2156 = vpop.f32.mrb[0].mxu0
    %2157 = vmatprep.mubr.bf16.mxu0 0
    %2158 = vmatmul.mubr.bf16.gmra.mrb[0].mxu0 %v1890
    %v2159 = vpop.f32.mrb[0].mxu0
    %v2160 = vadd.f32 0.0, %v2159
    %v2161 = vpop.f32.mrb[0].mxu0
    %v2162 = vpop.f32.mrb[0].mxu0
    %v2163 = vadd.f32 0.0, %v2162
    %v2164 = vpop.f32.mrb[0].mxu0
    %2165 = vmatprep.mubr.bf16.mxu0 0
    %2166 = vmatmul.mubr.bf16.gmra.mrb[0].mxu0 %v1893
    %v2167 = vpop.f32.mrb[0].mxu0
    %v2168 = vadd.f32 0.0, %v2167
    %v2169 = vpop.f32.mrb[0].mxu0
    %v2170 = vpop.f32.mrb[0].mxu0
    %v2171 = vadd.f32 0.0, %v2170
    %v2172 = vpop.f32.mrb[0].mxu0
    %2173 = vmatprep.mubr.bf16.mxu0 0
    %2174 = vmatmul.mubr.bf16.gmra.mrb[0].mxu0 %v1896
    %v2175 = vpop.f32.mrb[0].mxu0
    %v2176 = vadd.f32 0.0, %v2175
    %v2177 = vpop.f32.mrb[0].mxu0
    %v2178 = vpop.f32.mrb[0].mxu0
    %v2179 = vadd.f32 0.0, %v2178
    %v2180 = vpop.f32.mrb[0].mxu0
    %2181 = vmatprep.mubr.bf16.mxu0 0
    %2182 = vmatmul.mubr.bf16.gmra.mrb[0].mxu0 %v1899
    %v2183 = vpop.f32.mrb[0].mxu0
    %v2184 = vadd.f32 0.0, %v2183
    %v2185 = vpop.f32.mrb[0].mxu0
    %v2186 = vpop.f32.mrb[0].mxu0
    %v2187 = vadd.f32 0.0, %v2186
    %v2188 = vpop.f32.mrb[0].mxu0
    %2189 = vdwg.mxu0
    %v2194 = vunpack.c.l.b16 %v1431
    %v2195 = vunpack.c.l.b16 %v1432
    %v2196 = vunpack.c.l.b16 %v1433
    %v2197 = vunpack.c.l.b16 %v1434
    %v2198 = vpack.c.b16 %v2195, %v2194
    %v2199 = vpack.c.b16 %v2197, %v2196
    %v2203 = vsel %vm572, %v1399, 0
    %v2206 = vsel %vm572, %v1400, 0
    %v2209 = vsel %vm572, %v1401, 0
    %v2212 = vsel %vm572, %v1402, 0
    %v2215 = vsel %vm572, %v1403, 0
    %v2218 = vsel %vm572, %v1404, 0
    %v2221 = vsel %vm572, %v1405, 0
    %v2224 = vsel %vm572, %v1406, 0
    %v2227 = vsel %vm572, %v1407, 0
    %v2230 = vsel %vm572, %v1408, 0
    %v2233 = vsel %vm572, %v1409, 0
    %v2236 = vsel %vm572, %v1410, 0
    %v2239 = vsel %vm572, %v1411, 0
    %v2242 = vsel %vm572, %v1412, 0
    %v2245 = vsel %vm572, %v1413, 0
    %v2248 = vsel %vm572, %v1414, 0
    %v2251 = vsel %vm572, %v1415, 0
    %v2254 = vsel %vm572, %v1416, 0
    %v2257 = vsel %vm572, %v1417, 0
    %v2260 = vsel %vm572, %v1418, 0
    %v2263 = vsel %vm572, %v1419, 0
    %v2266 = vsel %vm572, %v1420, 0
    %v2269 = vsel %vm572, %v1421, 0
    %v2272 = vsel %vm572, %v1422, 0
    %v2275 = vsel %vm572, %v1423, 0
    %v2278 = vsel %vm572, %v1424, 0
    %v2281 = vsel %vm572, %v1425, 0
    %v2284 = vsel %vm572, %v1426, 0
    %v2287 = vsel %vm572, %v1427, 0
    %v2290 = vsel %vm572, %v1428, 0
    %v2293 = vsel %vm572, %v1429, 0
    %v2296 = vsel %vm572, %v1430, 0
    %2298 = vmatprep.subr.bf16.mxu0 0
    %2299 = vmatpush1.bf16.msra.mxu0 %v2198
    %2300 = vmatprep.subr.bf16.mxu0 0
    %2301 = vmatpush1.bf16.msra.mxu0 %v2199
    %2302 = vmatprep.subr.bf16.mxu0 0
    %2303 = vmatpush1.bf16.msra.mxu0 0
    %2304 = vmatprep.subr.bf16.mxu0 0
    %2305 = vmatpush1.bf16.msra.mxu0 0
    %2306 = vmatprep.subr.bf16.mxu0 0
    %2307 = vmatpush1.bf16.msra.mxu0 0
    %2308 = vmatprep.subr.bf16.mxu0 0
    %2309 = vmatpush1.bf16.msra.mxu0 0
    %2310 = vmatprep.subr.bf16.mxu0 0
    %2311 = vmatpush1.bf16.msra.mxu0 0
    %2312 = vmatprep.subr.bf16.mxu0 0
    %2313 = vmatpush1.bf16.msra.mxu0 0
    %2314 = vmatprep.subr.bf16.mxu0 0
    %2315 = vmatpush1.bf16.msra.mxu0 0
    %2316 = vmatprep.subr.bf16.mxu0 0
    %2317 = vmatpush1.bf16.msra.mxu0 0
    %2318 = vmatprep.subr.bf16.mxu0 0
    %2319 = vmatpush1.bf16.msra.mxu0 0
    %2320 = vmatprep.subr.bf16.mxu0 0
    %2321 = vmatpush1.bf16.msra.mxu0 0
    %2322 = vmatprep.subr.bf16.mxu0 0
    %2323 = vmatpush1.bf16.msra.mxu0 0
    %2324 = vmatprep.subr.bf16.mxu0 0
    %2325 = vmatpush1.bf16.msra.mxu0 0
    %2326 = vmatprep.subr.bf16.mxu0 0
    %2327 = vmatpush1.bf16.msra.mxu0 0
    %2328 = vmatprep.subr.bf16.mxu0 0
    %2329 = vmatpush1.bf16.msra.mxu0 0
    %2330 = vmatprep.mubr.bf16.mxu0 0
    %2331 = vmatmul.mubr.bf16.gmra.mrb[0].mxu0 %v2203
    %v2332 = vpop.f32.mrb[0].mxu0
    %v2333 = vadd.f32 %v1936, %v2332
    %v2334 = vpop.f32.mrb[0].mxu0
    %v2335 = vpop.f32.mrb[0].mxu0
    %v2336 = vadd.f32 %v1939, %v2335
    %v2337 = vpop.f32.mrb[0].mxu0
    %2338 = vmatprep.mubr.bf16.mxu0 0
    %2339 = vmatmul.mubr.bf16.gmra.mrb[0].mxu0 %v2206
    %v2340 = vpop.f32.mrb[0].mxu0
    %v2341 = vadd.f32 %v1944, %v2340
    %v2342 = vpop.f32.mrb[0].mxu0
    %v2343 = vpop.f32.mrb[0].mxu0
    %v2344 = vadd.f32 %v1947, %v2343
    %v2345 = vpop.f32.mrb[0].mxu0
    %2346 = vmatprep.mubr.bf16.mxu0 0
    %2347 = vmatmul.mubr.bf16.gmra.mrb[0].mxu0 %v2209
    %v2348 = vpop.f32.mrb[0].mxu0
    %v2349 = vadd.f32 %v1952, %v2348
    %v2350 = vpop.f32.mrb[0].mxu0
    %v2351 = vpop.f32.mrb[0].mxu0
    %v2352 = vadd.f32 %v1955, %v2351
    %v2353 = vpop.f32.mrb[0].mxu0
    %2354 = vmatprep.mubr.bf16.mxu0 0
    %2355 = vmatmul.mubr.bf16.gmra.mrb[0].mxu0 %v2212
    %v2356 = vpop.f32.mrb[0].mxu0
    %v2357 = vadd.f32 %v1960, %v2356
    %v2358 = vpop.f32.mrb[0].mxu0
    %v2359 = vpop.f32.mrb[0].mxu0
    %v2360 = vadd.f32 %v1963, %v2359
    %v2361 = vpop.f32.mrb[0].mxu0
    %2362 = vmatprep.mubr.bf16.mxu0 0
    %2363 = vmatmul.mubr.bf16.gmra.mrb[0].mxu0 %v2215
    %v2364 = vpop.f32.mrb[0].mxu0
    %v2365 = vadd.f32 %v1968, %v2364
    %v2366 = vpop.f32.mrb[0].mxu0
    %v2367 = vpop.f32.mrb[0].mxu0
    %v2368 = vadd.f32 %v1971, %v2367
    %v2369 = vpop.f32.mrb[0].mxu0
    %2370 = vmatprep.mubr.bf16.mxu0 0
    %2371 = vmatmul.mubr.bf16.gmra.mrb[0].mxu0 %v2218
    %v2372 = vpop.f32.mrb[0].mxu0
    %v2373 = vadd.f32 %v1976, %v2372
    %v2374 = vpop.f32.mrb[0].mxu0
    %v2375 = vpop.f32.mrb[0].mxu0
    %v2376 = vadd.f32 %v1979, %v2375
    %v2377 = vpop.f32.mrb[0].mxu0
    %2378 = vmatprep.mubr.bf16.mxu0 0
    %2379 = vmatmul.mubr.bf16.gmra.mrb[0].mxu0 %v2221
    %v2380 = vpop.f32.mrb[0].mxu0
    %v2381 = vadd.f32 %v1984, %v2380
    %v2382 = vpop.f32.mrb[0].mxu0
    %v2383 = vpop.f32.mrb[0].mxu0
    %v2384 = vadd.f32 %v1987, %v2383
    %v2385 = vpop.f32.mrb[0].mxu0
    %2386 = vmatprep.mubr.bf16.mxu0 0
    %2387 = vmatmul.mubr.bf16.gmra.mrb[0].mxu0 %v2224
    %v2388 = vpop.f32.mrb[0].mxu0
    %v2389 = vadd.f32 %v1992, %v2388
    %v2390 = vpop.f32.mrb[0].mxu0
    %v2391 = vpop.f32.mrb[0].mxu0
    %v2392 = vadd.f32 %v1995, %v2391
    %v2393 = vpop.f32.mrb[0].mxu0
    %2394 = vmatprep.mubr.bf16.mxu0 0
    %2395 = vmatmul.mubr.bf16.gmra.mrb[0].mxu0 %v2227
    %v2396 = vpop.f32.mrb[0].mxu0
    %v2397 = vadd.f32 %v2000, %v2396
    %v2398 = vpop.f32.mrb[0].mxu0
    %v2399 = vpop.f32.mrb[0].mxu0
    %v2400 = vadd.f32 %v2003, %v2399
    %v2401 = vpop.f32.mrb[0].mxu0
    %2402 = vmatprep.mubr.bf16.mxu0 0
    %2403 = vmatmul.mubr.bf16.gmra.mrb[0].mxu0 %v2230
    %v2404 = vpop.f32.mrb[0].mxu0
    %v2405 = vadd.f32 %v2008, %v2404
    %v2406 = vpop.f32.mrb[0].mxu0
    %v2407 = vpop.f32.mrb[0].mxu0
    %v2408 = vadd.f32 %v2011, %v2407
    %v2409 = vpop.f32.mrb[0].mxu0
    %2410 = vmatprep.mubr.bf16.mxu0 0
    %2411 = vmatmul.mubr.bf16.gmra.mrb[0].mxu0 %v2233
    %v2412 = vpop.f32.mrb[0].mxu0
    %v2413 = vadd.f32 %v2016, %v2412
    %v2414 = vpop.f32.mrb[0].mxu0
    %v2415 = vpop.f32.mrb[0].mxu0
    %v2416 = vadd.f32 %v2019, %v2415
    %v2417 = vpop.f32.mrb[0].mxu0
    %2418 = vmatprep.mubr.bf16.mxu0 0
    %2419 = vmatmul.mubr.bf16.gmra.mrb[0].mxu0 %v2236
    %v2420 = vpop.f32.mrb[0].mxu0
    %v2421 = vadd.f32 %v2024, %v2420
    %v2422 = vpop.f32.mrb[0].mxu0
    %v2423 = vpop.f32.mrb[0].mxu0
    %v2424 = vadd.f32 %v2027, %v2423
    %v2425 = vpop.f32.mrb[0].mxu0
    %2426 = vmatprep.mubr.bf16.mxu0 0
    %2427 = vmatmul.mubr.bf16.gmra.mrb[0].mxu0 %v2239
    %v2428 = vpop.f32.mrb[0].mxu0
    %v2429 = vadd.f32 %v2032, %v2428
    %v2430 = vpop.f32.mrb[0].mxu0
    %v2431 = vpop.f32.mrb[0].mxu0
    %v2432 = vadd.f32 %v2035, %v2431
    %v2433 = vpop.f32.mrb[0].mxu0
    %2434 = vmatprep.mubr.bf16.mxu0 0
    %2435 = vmatmul.mubr.bf16.gmra.mrb[0].mxu0 %v2242
    %v2436 = vpop.f32.mrb[0].mxu0
    %v2437 = vadd.f32 %v2040, %v2436
    %v2438 = vpop.f32.mrb[0].mxu0
    %v2439 = vpop.f32.mrb[0].mxu0
    %v2440 = vadd.f32 %v2043, %v2439
    %v2441 = vpop.f32.mrb[0].mxu0
    %2442 = vmatprep.mubr.bf16.mxu0 0
    %2443 = vmatmul.mubr.bf16.gmra.mrb[0].mxu0 %v2245
    %v2444 = vpop.f32.mrb[0].mxu0
    %v2445 = vadd.f32 %v2048, %v2444
    %v2446 = vpop.f32.mrb[0].mxu0
    %v2447 = vpop.f32.mrb[0].mxu0
    %v2448 = vadd.f32 %v2051, %v2447
    %v2449 = vpop.f32.mrb[0].mxu0
    %2450 = vmatprep.mubr.bf16.mxu0 0
    %2451 = vmatmul.mubr.bf16.gmra.mrb[0].mxu0 %v2248
    %v2452 = vpop.f32.mrb[0].mxu0
    %v2453 = vadd.f32 %v2056, %v2452
    %v2454 = vpop.f32.mrb[0].mxu0
    %v2455 = vpop.f32.mrb[0].mxu0
    %v2456 = vadd.f32 %v2059, %v2455
    %v2457 = vpop.f32.mrb[0].mxu0
    %2458 = vmatprep.mubr.bf16.mxu0 0
    %2459 = vmatmul.mubr.bf16.gmra.mrb[0].mxu0 %v2251
    %v2460 = vpop.f32.mrb[0].mxu0
    %v2461 = vadd.f32 %v2064, %v2460
    %v2462 = vpop.f32.mrb[0].mxu0
    %v2463 = vpop.f32.mrb[0].mxu0
    %v2464 = vadd.f32 %v2067, %v2463
    %v2465 = vpop.f32.mrb[0].mxu0
    %2466 = vmatprep.mubr.bf16.mxu0 0
    %2467 = vmatmul.mubr.bf16.gmra.mrb[0].mxu0 %v2254
    %v2468 = vpop.f32.mrb[0].mxu0
    %v2469 = vadd.f32 %v2072, %v2468
    %v2470 = vpop.f32.mrb[0].mxu0
    %v2471 = vpop.f32.mrb[0].mxu0
    %v2472 = vadd.f32 %v2075, %v2471
    %v2473 = vpop.f32.mrb[0].mxu0
    %2474 = vmatprep.mubr.bf16.mxu0 0
    %2475 = vmatmul.mubr.bf16.gmra.mrb[0].mxu0 %v2257
    %v2476 = vpop.f32.mrb[0].mxu0
    %v2477 = vadd.f32 %v2080, %v2476
    %v2478 = vpop.f32.mrb[0].mxu0
    %v2479 = vpop.f32.mrb[0].mxu0
    %v2480 = vadd.f32 %v2083, %v2479
    %v2481 = vpop.f32.mrb[0].mxu0
    %2482 = vmatprep.mubr.bf16.mxu0 0
    %2483 = vmatmul.mubr.bf16.gmra.mrb[0].mxu0 %v2260
    %v2484 = vpop.f32.mrb[0].mxu0
    %v2485 = vadd.f32 %v2088, %v2484
    %v2486 = vpop.f32.mrb[0].mxu0
    %v2487 = vpop.f32.mrb[0].mxu0
    %v2488 = vadd.f32 %v2091, %v2487
    %v2489 = vpop.f32.mrb[0].mxu0
    %2490 = vmatprep.mubr.bf16.mxu0 0
    %2491 = vmatmul.mubr.bf16.gmra.mrb[0].mxu0 %v2263
    %v2492 = vpop.f32.mrb[0].mxu0
    %v2493 = vadd.f32 %v2096, %v2492
    %v2494 = vpop.f32.mrb[0].mxu0
    %v2495 = vpop.f32.mrb[0].mxu0
    %v2496 = vadd.f32 %v2099, %v2495
    %v2497 = vpop.f32.mrb[0].mxu0
    %2498 = vmatprep.mubr.bf16.mxu0 0
    %2499 = vmatmul.mubr.bf16.gmra.mrb[0].mxu0 %v2266
    %v2500 = vpop.f32.mrb[0].mxu0
    %v2501 = vadd.f32 %v2104, %v2500
    %v2502 = vpop.f32.mrb[0].mxu0
    %v2503 = vpop.f32.mrb[0].mxu0
    %v2504 = vadd.f32 %v2107, %v2503
    %v2505 = vpop.f32.mrb[0].mxu0
    %2506 = vmatprep.mubr.bf16.mxu0 0
    %2507 = vmatmul.mubr.bf16.gmra.mrb[0].mxu0 %v2269
    %v2508 = vpop.f32.mrb[0].mxu0
    %v2509 = vadd.f32 %v2112, %v2508
    %v2510 = vpop.f32.mrb[0].mxu0
    %v2511 = vpop.f32.mrb[0].mxu0
    %v2512 = vadd.f32 %v2115, %v2511
    %v2513 = vpop.f32.mrb[0].mxu0
    %2514 = vmatprep.mubr.bf16.mxu0 0
    %2515 = vmatmul.mubr.bf16.gmra.mrb[0].mxu0 %v2272
    %v2516 = vpop.f32.mrb[0].mxu0
    %v2517 = vadd.f32 %v2120, %v2516
    %v2518 = vpop.f32.mrb[0].mxu0
    %v2519 = vpop.f32.mrb[0].mxu0
    %v2520 = vadd.f32 %v2123, %v2519
    %v2521 = vpop.f32.mrb[0].mxu0
    %2522 = vmatprep.mubr.bf16.mxu0 0
    %2523 = vmatmul.mubr.bf16.gmra.mrb[0].mxu0 %v2275
    %v2524 = vpop.f32.mrb[0].mxu0
    %v2525 = vadd.f32 %v2128, %v2524
    %v2526 = vpop.f32.mrb[0].mxu0
    %v2527 = vpop.f32.mrb[0].mxu0
    %v2528 = vadd.f32 %v2131, %v2527
    %v2529 = vpop.f32.mrb[0].mxu0
    %2530 = vmatprep.mubr.bf16.mxu0 0
    %2531 = vmatmul.mubr.bf16.gmra.mrb[0].mxu0 %v2278
    %v2532 = vpop.f32.mrb[0].mxu0
    %v2533 = vadd.f32 %v2136, %v2532
    %v2534 = vpop.f32.mrb[0].mxu0
    %v2535 = vpop.f32.mrb[0].mxu0
    %v2536 = vadd.f32 %v2139, %v2535
    %v2537 = vpop.f32.mrb[0].mxu0
    %2538 = vmatprep.mubr.bf16.mxu0 0
    %2539 = vmatmul.mubr.bf16.gmra.mrb[0].mxu0 %v2281
    %v2540 = vpop.f32.mrb[0].mxu0
    %v2541 = vadd.f32 %v2144, %v2540
    %v2542 = vpop.f32.mrb[0].mxu0
    %v2543 = vpop.f32.mrb[0].mxu0
    %v2544 = vadd.f32 %v2147, %v2543
    %v2545 = vpop.f32.mrb[0].mxu0
    %2546 = vmatprep.mubr.bf16.mxu0 0
    %2547 = vmatmul.mubr.bf16.gmra.mrb[0].mxu0 %v2284
    %v2548 = vpop.f32.mrb[0].mxu0
    %v2549 = vadd.f32 %v2152, %v2548
    %v2550 = vpop.f32.mrb[0].mxu0
    %v2551 = vpop.f32.mrb[0].mxu0
    %v2552 = vadd.f32 %v2155, %v2551
    %v2553 = vpop.f32.mrb[0].mxu0
    %2554 = vmatprep.mubr.bf16.mxu0 0
    %2555 = vmatmul.mubr.bf16.gmra.mrb[0].mxu0 %v2287
    %v2556 = vpop.f32.mrb[0].mxu0
    %v2557 = vadd.f32 %v2160, %v2556
    %v2558 = vpop.f32.mrb[0].mxu0
    %v2559 = vpop.f32.mrb[0].mxu0
    %v2560 = vadd.f32 %v2163, %v2559
    %v2561 = vpop.f32.mrb[0].mxu0
    %2562 = vmatprep.mubr.bf16.mxu0 0
    %2563 = vmatmul.mubr.bf16.gmra.mrb[0].mxu0 %v2290
    %v2564 = vpop.f32.mrb[0].mxu0
    %v2565 = vadd.f32 %v2168, %v2564
    %v2566 = vpop.f32.mrb[0].mxu0
    %v2567 = vpop.f32.mrb[0].mxu0
    %v2568 = vadd.f32 %v2171, %v2567
    %v2569 = vpop.f32.mrb[0].mxu0
    %2570 = vmatprep.mubr.bf16.mxu0 0
    %2571 = vmatmul.mubr.bf16.gmra.mrb[0].mxu0 %v2293
    %v2572 = vpop.f32.mrb[0].mxu0
    %v2573 = vadd.f32 %v2176, %v2572
    %v2574 = vpop.f32.mrb[0].mxu0
    %v2575 = vpop.f32.mrb[0].mxu0
    %v2576 = vadd.f32 %v2179, %v2575
    %v2577 = vpop.f32.mrb[0].mxu0
    %2578 = vmatprep.mubr.bf16.mxu0 0
    %2579 = vmatmul.mubr.bf16.gmra.mrb[0].mxu0 %v2296
    %v2580 = vpop.f32.mrb[0].mxu0
    %v2581 = vadd.f32 %v2184, %v2580
    %v2582 = vpop.f32.mrb[0].mxu0
    %v2583 = vpop.f32.mrb[0].mxu0
    %v2584 = vadd.f32 %v2187, %v2583
    %v2585 = vpop.f32.mrb[0].mxu0
    %2586 = vdwg.mxu0
    %vm2587 = vcmask 1045504
    %v2588 = vrot.slane %v1291, 2
    %v2589 = vrot.slane %v1292, 2
    %v2590 = vsel %vm2587, %v2588, %v2589
    %v2591 = vrot.slane %v1293, 2
    %v2592 = vsel %vm2587, %v2589, %v2591
    %v2593 = vrot.slane %v1294, 2
    %v2594 = vrot.slane %v1295, 2
    %v2595 = vsel %vm2587, %v2593, %v2594
    %v2596 = vrot.slane %v1296, 2
    %v2597 = vsel %vm2587, %v2594, %v2596
    %v2598 = vrot.slane %v1297, 2
    %v2599 = vrot.slane %v1298, 2
    %v2600 = vsel %vm2587, %v2598, %v2599
    %v2601 = vrot.slane %v1299, 2
    %v2602 = vsel %vm2587, %v2599, %v2601
    %v2603 = vrot.slane %v1300, 2
    %v2604 = vrot.slane %v1301, 2
    %v2605 = vsel %vm2587, %v2603, %v2604
    %v2606 = vrot.slane %v1302, 2
    %v2607 = vsel %vm2587, %v2604, %v2606
    %v2608 = vrot.slane %v1303, 2
    %v2609 = vrot.slane %v1304, 2
    %v2610 = vsel %vm2587, %v2608, %v2609
    %v2611 = vrot.slane %v1305, 2
    %v2612 = vsel %vm2587, %v2609, %v2611
    %v2613 = vrot.slane %v1306, 2
    %v2614 = vrot.slane %v1307, 2
    %v2615 = vsel %vm2587, %v2613, %v2614
    %v2616 = vrot.slane %v1308, 2
    %v2617 = vsel %vm2587, %v2614, %v2616
    %v2618 = vrot.slane %v1309, 2
    %v2619 = vrot.slane %v1310, 2
    %v2620 = vsel %vm2587, %v2618, %v2619
    %v2621 = vrot.slane %v1311, 2
    %v2622 = vsel %vm2587, %v2619, %v2621
    %v2623 = vrot.slane %v1312, 2
    %v2624 = vrot.slane %v1313, 2
    %v2625 = vsel %vm2587, %v2623, %v2624
    %v2626 = vrot.slane %v1314, 2
    %v2627 = vsel %vm2587, %v2624, %v2626
    %v2628 = vrot.slane %v1315, 2
    %v2629 = vrot.slane %v1316, 2
    %v2630 = vsel %vm2587, %v2628, %v2629
    %v2631 = vrot.slane %v1317, 2
    %v2632 = vsel %vm2587, %v2629, %v2631
    %v2633 = vrot.slane %v1318, 2
    %v2634 = vrot.slane %v1319, 2
    %v2635 = vsel %vm2587, %v2633, %v2634
    %v2636 = vrot.slane %v1320, 2
    %v2637 = vsel %vm2587, %v2634, %v2636
    %v2638 = vrot.slane %v1321, 2
    %v2639 = vrot.slane %v1322, 2
    %v2640 = vsel %vm2587, %v2638, %v2639
    %v2641 = vrot.slane %v1323, 2
    %v2642 = vsel %vm2587, %v2639, %v2641
    %v2643 = vrot.slane %v1324, 2
    %v2644 = vrot.slane %v1325, 2
    %v2645 = vsel %vm2587, %v2643, %v2644
    %v2646 = vrot.slane %v1326, 2
    %v2647 = vsel %vm2587, %v2644, %v2646
    %v2648 = vrot.slane %v1327, 2
    %v2649 = vrot.slane %v1328, 2
    %v2650 = vsel %vm2587, %v2648, %v2649
    %v2651 = vrot.slane %v1329, 2
    %v2652 = vsel %vm2587, %v2649, %v2651
    %v2653 = vrot.slane %v1330, 2
    %v2654 = vrot.slane %v1331, 2
    %v2655 = vsel %vm2587, %v2653, %v2654
    %v2656 = vrot.slane %v1332, 2
    %v2657 = vsel %vm2587, %v2654, %v2656
    %v2658 = vrot.slane %v1333, 2
    %v2659 = vrot.slane %v1334, 2
    %v2660 = vsel %vm2587, %v2658, %v2659
    %v2661 = vrot.slane %v1335, 2
    %v2662 = vsel %vm2587, %v2659, %v2661
    %v2663 = vrot.slane %v1336, 2
    %v2664 = vrot.slane %v1337, 2
    %v2665 = vsel %vm2587, %v2663, %v2664
    %v2666 = vrot.slane %v1338, 2
    %v2667 = vsel %vm2587, %v2664, %v2666
    %v2668 = vrot.slane %v1345, 2
    %v2669 = vrot.slane %v1346, 2
    %v2670 = vsel %vm2587, %v2668, %v2669
    %v2671 = vrot.slane %v1347, 2
    %v2672 = vsel %vm2587, %v2669, %v2671
    %v2673 = vrot.slane %v1348, 2
    %v2674 = vrot.slane %v1349, 2
    %v2675 = vsel %vm2587, %v2673, %v2674
    %v2676 = vrot.slane %v1350, 2
    %v2677 = vsel %vm2587, %v2674, %v2676
    %v2678 = vrot.slane %v1351, 2
    %v2679 = vrot.slane %v1352, 2
    %v2680 = vsel %vm2587, %v2678, %v2679
    %v2681 = vrot.slane %v1353, 2
    %v2682 = vsel %vm2587, %v2679, %v2681
    %v2683 = vrot.slane %v1354, 2
    %v2684 = vrot.slane %v1355, 2
    %v2685 = vsel %vm2587, %v2683, %v2684
    %v2686 = vrot.slane %v1356, 2
    %v2687 = vsel %vm2587, %v2684, %v2686
    %v2688 = vrot.slane %v1357, 2
    %v2689 = vrot.slane %v1358, 2
    %v2690 = vsel %vm2587, %v2688, %v2689
    %v2691 = vrot.slane %v1359, 2
    %v2692 = vsel %vm2587, %v2689, %v2691
    %v2693 = vrot.slane %v1360, 2
    %v2694 = vrot.slane %v1361, 2
    %v2695 = vsel %vm2587, %v2693, %v2694
    %v2696 = vrot.slane %v1362, 2
    %v2697 = vsel %vm2587, %v2694, %v2696
    %v2698 = vrot.slane %v1363, 2
    %v2699 = vrot.slane %v1364, 2
    %v2700 = vsel %vm2587, %v2698, %v2699
    %v2701 = vrot.slane %v1365, 2
    %v2702 = vsel %vm2587, %v2699, %v2701
    %v2703 = vrot.slane %v1366, 2
    %v2704 = vrot.slane %v1367, 2
    %v2705 = vsel %vm2587, %v2703, %v2704
    %v2706 = vrot.slane %v1368, 2
    %v2707 = vsel %vm2587, %v2704, %v2706
    %v2708 = vrot.slane %v1369, 2
    %v2709 = vrot.slane %v1370, 2
    %v2710 = vsel %vm2587, %v2708, %v2709
    %v2711 = vrot.slane %v1371, 2
    %v2712 = vsel %vm2587, %v2709, %v2711
    %v2713 = vrot.slane %v1372, 2
    %v2714 = vrot.slane %v1373, 2
    %v2715 = vsel %vm2587, %v2713, %v2714
    %v2716 = vrot.slane %v1374, 2
    %v2717 = vsel %vm2587, %v2714, %v2716
    %v2718 = vrot.slane %v1375, 2
    %v2719 = vrot.slane %v1376, 2
    %v2720 = vsel %vm2587, %v2718, %v2719
    %v2721 = vrot.slane %v1377, 2
    %v2722 = vsel %vm2587, %v2719, %v2721
    %v2723 = vrot.slane %v1378, 2
    %v2724 = vrot.slane %v1379, 2
    %v2725 = vsel %vm2587, %v2723, %v2724
    %v2726 = vrot.slane %v1380, 2
    %v2727 = vsel %vm2587, %v2724, %v2726
    %v2728 = vrot.slane %v1381, 2
    %v2729 = vrot.slane %v1382, 2
    %v2730 = vsel %vm2587, %v2728, %v2729
    %v2731 = vrot.slane %v1383, 2
    %v2732 = vsel %vm2587, %v2729, %v2731
    %v2733 = vrot.slane %v1384, 2
    %v2734 = vrot.slane %v1385, 2
    %v2735 = vsel %vm2587, %v2733, %v2734
    %v2736 = vrot.slane %v1386, 2
    %v2737 = vsel %vm2587, %v2734, %v2736
    %v2738 = vrot.slane %v1387, 2
    %v2739 = vrot.slane %v1388, 2
    %v2740 = vsel %vm2587, %v2738, %v2739
    %v2741 = vrot.slane %v1389, 2
    %v2742 = vsel %vm2587, %v2739, %v2741
    %v2743 = vrot.slane %v1390, 2
    %v2744 = vrot.slane %v1391, 2
    %v2745 = vsel %vm2587, %v2743, %v2744
    %v2746 = vrot.slane %v1392, 2
    %v2747 = vsel %vm2587, %v2744, %v2746
    %v2812 = vpack.c.bf16 %v2592, %v2590
    %v2813 = vpack.c.bf16 %v2597, %v2595
    %v2814 = vpack.c.bf16 %v2602, %v2600
    %v2815 = vpack.c.bf16 %v2607, %v2605
    %v2816 = vpack.c.bf16 %v2612, %v2610
    %v2817 = vpack.c.bf16 %v2617, %v2615
    %v2818 = vpack.c.bf16 %v2622, %v2620
    %v2819 = vpack.c.bf16 %v2627, %v2625
    %v2820 = vpack.c.bf16 %v2632, %v2630
    %v2821 = vpack.c.bf16 %v2637, %v2635
    %v2822 = vpack.c.bf16 %v2642, %v2640
    %v2823 = vpack.c.bf16 %v2647, %v2645
    %v2824 = vpack.c.bf16 %v2652, %v2650
    %v2825 = vpack.c.bf16 %v2657, %v2655
    %v2826 = vpack.c.bf16 %v2662, %v2660
    %v2827 = vpack.c.bf16 %v2667, %v2665
    %v2828 = vpack.c.bf16 %v2672, %v2670
    %v2829 = vpack.c.bf16 %v2677, %v2675
    %v2830 = vpack.c.bf16 %v2682, %v2680
    %v2831 = vpack.c.bf16 %v2687, %v2685
    %v2832 = vpack.c.bf16 %v2692, %v2690
    %v2833 = vpack.c.bf16 %v2697, %v2695
    %v2834 = vpack.c.bf16 %v2702, %v2700
    %v2835 = vpack.c.bf16 %v2707, %v2705
    %v2836 = vpack.c.bf16 %v2712, %v2710
    %v2837 = vpack.c.bf16 %v2717, %v2715
    %v2838 = vpack.c.bf16 %v2722, %v2720
    %v2839 = vpack.c.bf16 %v2727, %v2725
    %v2840 = vpack.c.bf16 %v2732, %v2730
    %v2841 = vpack.c.bf16 %v2737, %v2735
    %v2842 = vpack.c.bf16 %v2742, %v2740
    %v2843 = vpack.c.bf16 %v2747, %v2745
    %s2844 = scalar_lea.vmem [#allocation6], 32
    %v2845 = vld [vmem:[%s2844] sm:$0xf]
    %v2846 = vld [vmem:[%s2844 + $0x4] sm:$0xf]
    %v2847 = vld [vmem:[%s2844 + $0x8] sm:$0xf]
    %v2848 = vld [vmem:[%s2844 + $0xc] sm:$0xf]
    %v2853 = vunpack.c.l.b16 %v2845
    %v2854 = vunpack.c.l.b16 %v2846
    %v2855 = vunpack.c.l.b16 %v2847
    %v2856 = vunpack.c.l.b16 %v2848
    %v2857 = vpack.c.b16 %v2854, %v2853
    %v2858 = vpack.c.b16 %v2856, %v2855
    %v2862 = vsel %vm572, %v2812, 0
    %v2865 = vsel %vm572, %v2813, 0
    %v2868 = vsel %vm572, %v2814, 0
    %v2871 = vsel %vm572, %v2815, 0
    %v2874 = vsel %vm572, %v2816, 0
    %v2877 = vsel %vm572, %v2817, 0
    %v2880 = vsel %vm572, %v2818, 0
    %v2883 = vsel %vm572, %v2819, 0
    %v2886 = vsel %vm572, %v2820, 0
    %v2889 = vsel %vm572, %v2821, 0
    %v2892 = vsel %vm572, %v2822, 0
    %v2895 = vsel %vm572, %v2823, 0
    %v2898 = vsel %vm572, %v2824, 0
    %v2901 = vsel %vm572, %v2825, 0
    %v2904 = vsel %vm572, %v2826, 0
    %v2907 = vsel %vm572, %v2827, 0
    %v2910 = vsel %vm572, %v2828, 0
    %v2913 = vsel %vm572, %v2829, 0
    %v2916 = vsel %vm572, %v2830, 0
    %v2919 = vsel %vm572, %v2831, 0
    %v2922 = vsel %vm572, %v2832, 0
    %v2925 = vsel %vm572, %v2833, 0
    %v2928 = vsel %vm572, %v2834, 0
    %v2931 = vsel %vm572, %v2835, 0
    %v2934 = vsel %vm572, %v2836, 0
    %v2937 = vsel %vm572, %v2837, 0
    %v2940 = vsel %vm572, %v2838, 0
    %v2943 = vsel %vm572, %v2839, 0
    %v2946 = vsel %vm572, %v2840, 0
    %v2949 = vsel %vm572, %v2841, 0
    %v2952 = vsel %vm572, %v2842, 0
    %v2955 = vsel %vm572, %v2843, 0
    %2957 = vmatprep.subr.bf16.mxu0 0
    %2958 = vmatpush1.bf16.msra.mxu0 %v2857
    %2959 = vmatprep.subr.bf16.mxu0 0
    %2960 = vmatpush1.bf16.msra.mxu0 %v2858
    %2961 = vmatprep.subr.bf16.mxu0 0
    %2962 = vmatpush1.bf16.msra.mxu0 0
    %2963 = vmatprep.subr.bf16.mxu0 0
    %2964 = vmatpush1.bf16.msra.mxu0 0
    %2965 = vmatprep.subr.bf16.mxu0 0
    %2966 = vmatpush1.bf16.msra.mxu0 0
    %2967 = vmatprep.subr.bf16.mxu0 0
    %2968 = vmatpush1.bf16.msra.mxu0 0
    %2969 = vmatprep.subr.bf16.mxu0 0
    %2970 = vmatpush1.bf16.msra.mxu0 0
    %2971 = vmatprep.subr.bf16.mxu0 0
    %2972 = vmatpush1.bf16.msra.mxu0 0
    %2973 = vmatprep.subr.bf16.mxu0 0
    %2974 = vmatpush1.bf16.msra.mxu0 0
    %2975 = vmatprep.subr.bf16.mxu0 0
    %2976 = vmatpush1.bf16.msra.mxu0 0
    %2977 = vmatprep.subr.bf16.mxu0 0
    %2978 = vmatpush1.bf16.msra.mxu0 0
    %2979 = vmatprep.subr.bf16.mxu0 0
    %2980 = vmatpush1.bf16.msra.mxu0 0
    %2981 = vmatprep.subr.bf16.mxu0 0
    %2982 = vmatpush1.bf16.msra.mxu0 0
    %2983 = vmatprep.subr.bf16.mxu0 0
    %2984 = vmatpush1.bf16.msra.mxu0 0
    %2985 = vmatprep.subr.bf16.mxu0 0
    %2986 = vmatpush1.bf16.msra.mxu0 0
    %2987 = vmatprep.subr.bf16.mxu0 0
    %2988 = vmatpush1.bf16.msra.mxu0 0
    %2989 = vmatprep.mubr.bf16.mxu0 0
    %2990 = vmatmul.mubr.bf16.gmra.mrb[0].mxu0 %v2862
    %v2991 = vpop.f32.mrb[0].mxu0
    %v2992 = vadd.f32 0.0, %v2991
    %v2993 = vpop.f32.mrb[0].mxu0
    %v2994 = vpop.f32.mrb[0].mxu0
    %v2995 = vadd.f32 0.0, %v2994
    %v2996 = vpop.f32.mrb[0].mxu0
    %2997 = vmatprep.mubr.bf16.mxu0 0
    %2998 = vmatmul.mubr.bf16.gmra.mrb[0].mxu0 %v2865
    %v2999 = vpop.f32.mrb[0].mxu0
    %v3000 = vadd.f32 0.0, %v2999
    %v3001 = vpop.f32.mrb[0].mxu0
    %v3002 = vpop.f32.mrb[0].mxu0
    %v3003 = vadd.f32 0.0, %v3002
    %v3004 = vpop.f32.mrb[0].mxu0
    %3005 = vmatprep.mubr.bf16.mxu0 0
    %3006 = vmatmul.mubr.bf16.gmra.mrb[0].mxu0 %v2868
    %v3007 = vpop.f32.mrb[0].mxu0
    %v3008 = vadd.f32 0.0, %v3007
    %v3009 = vpop.f32.mrb[0].mxu0
    %v3010 = vpop.f32.mrb[0].mxu0
    %v3011 = vadd.f32 0.0, %v3010
    %v3012 = vpop.f32.mrb[0].mxu0
    %3013 = vmatprep.mubr.bf16.mxu0 0
    %3014 = vmatmul.mubr.bf16.gmra.mrb[0].mxu0 %v2871
    %v3015 = vpop.f32.mrb[0].mxu0
    %v3016 = vadd.f32 0.0, %v3015
    %v3017 = vpop.f32.mrb[0].mxu0
    %v3018 = vpop.f32.mrb[0].mxu0
    %v3019 = vadd.f32 0.0, %v3018
    %v3020 = vpop.f32.mrb[0].mxu0
    %3021 = vmatprep.mubr.bf16.mxu0 0
    %3022 = vmatmul.mubr.bf16.gmra.mrb[0].mxu0 %v2874
    %v3023 = vpop.f32.mrb[0].mxu0
    %v3024 = vadd.f32 0.0, %v3023
    %v3025 = vpop.f32.mrb[0].mxu0
    %v3026 = vpop.f32.mrb[0].mxu0
    %v3027 = vadd.f32 0.0, %v3026
    %v3028 = vpop.f32.mrb[0].mxu0
    %3029 = vmatprep.mubr.bf16.mxu0 0
    %3030 = vmatmul.mubr.bf16.gmra.mrb[0].mxu0 %v2877
    %v3031 = vpop.f32.mrb[0].mxu0
    %v3032 = vadd.f32 0.0, %v3031
    %v3033 = vpop.f32.mrb[0].mxu0
    %v3034 = vpop.f32.mrb[0].mxu0
    %v3035 = vadd.f32 0.0, %v3034
    %v3036 = vpop.f32.mrb[0].mxu0
    %3037 = vmatprep.mubr.bf16.mxu0 0
    %3038 = vmatmul.mubr.bf16.gmra.mrb[0].mxu0 %v2880
    %v3039 = vpop.f32.mrb[0].mxu0
    %v3040 = vadd.f32 0.0, %v3039
    %v3041 = vpop.f32.mrb[0].mxu0
    %v3042 = vpop.f32.mrb[0].mxu0
    %v3043 = vadd.f32 0.0, %v3042
    %v3044 = vpop.f32.mrb[0].mxu0
    %3045 = vmatprep.mubr.bf16.mxu0 0
    %3046 = vmatmul.mubr.bf16.gmra.mrb[0].mxu0 %v2883
    %v3047 = vpop.f32.mrb[0].mxu0
    %v3048 = vadd.f32 0.0, %v3047
    %v3049 = vpop.f32.mrb[0].mxu0
    %v3050 = vpop.f32.mrb[0].mxu0
    %v3051 = vadd.f32 0.0, %v3050
    %v3052 = vpop.f32.mrb[0].mxu0
    %3053 = vmatprep.mubr.bf16.mxu0 0
    %3054 = vmatmul.mubr.bf16.gmra.mrb[0].mxu0 %v2886
    %v3055 = vpop.f32.mrb[0].mxu0
    %v3056 = vadd.f32 0.0, %v3055
    %v3057 = vpop.f32.mrb[0].mxu0
    %v3058 = vpop.f32.mrb[0].mxu0
    %v3059 = vadd.f32 0.0, %v3058
    %v3060 = vpop.f32.mrb[0].mxu0
    %3061 = vmatprep.mubr.bf16.mxu0 0
    %3062 = vmatmul.mubr.bf16.gmra.mrb[0].mxu0 %v2889
    %v3063 = vpop.f32.mrb[0].mxu0
    %v3064 = vadd.f32 0.0, %v3063
    %v3065 = vpop.f32.mrb[0].mxu0
    %v3066 = vpop.f32.mrb[0].mxu0
    %v3067 = vadd.f32 0.0, %v3066
    %v3068 = vpop.f32.mrb[0].mxu0
    %3069 = vmatprep.mubr.bf16.mxu0 0
    %3070 = vmatmul.mubr.bf16.gmra.mrb[0].mxu0 %v2892
    %v3071 = vpop.f32.mrb[0].mxu0
    %v3072 = vadd.f32 0.0, %v3071
    %v3073 = vpop.f32.mrb[0].mxu0
    %v3074 = vpop.f32.mrb[0].mxu0
    %v3075 = vadd.f32 0.0, %v3074
    %v3076 = vpop.f32.mrb[0].mxu0
    %3077 = vmatprep.mubr.bf16.mxu0 0
    %3078 = vmatmul.mubr.bf16.gmra.mrb[0].mxu0 %v2895
    %v3079 = vpop.f32.mrb[0].mxu0
    %v3080 = vadd.f32 0.0, %v3079
    %v3081 = vpop.f32.mrb[0].mxu0
    %v3082 = vpop.f32.mrb[0].mxu0
    %v3083 = vadd.f32 0.0, %v3082
    %v3084 = vpop.f32.mrb[0].mxu0
    %3085 = vmatprep.mubr.bf16.mxu0 0
    %3086 = vmatmul.mubr.bf16.gmra.mrb[0].mxu0 %v2898
    %v3087 = vpop.f32.mrb[0].mxu0
    %v3088 = vadd.f32 0.0, %v3087
    %v3089 = vpop.f32.mrb[0].mxu0
    %v3090 = vpop.f32.mrb[0].mxu0
    %v3091 = vadd.f32 0.0, %v3090
    %v3092 = vpop.f32.mrb[0].mxu0
    %3093 = vmatprep.mubr.bf16.mxu0 0
    %3094 = vmatmul.mubr.bf16.gmra.mrb[0].mxu0 %v2901
    %v3095 = vpop.f32.mrb[0].mxu0
    %v3096 = vadd.f32 0.0, %v3095
    %v3097 = vpop.f32.mrb[0].mxu0
    %v3098 = vpop.f32.mrb[0].mxu0
    %v3099 = vadd.f32 0.0, %v3098
    %v3100 = vpop.f32.mrb[0].mxu0
    %3101 = vmatprep.mubr.bf16.mxu0 0
    %3102 = vmatmul.mubr.bf16.gmra.mrb[0].mxu0 %v2904
    %v3103 = vpop.f32.mrb[0].mxu0
    %v3104 = vadd.f32 0.0, %v3103
    %v3105 = vpop.f32.mrb[0].mxu0
    %v3106 = vpop.f32.mrb[0].mxu0
    %v3107 = vadd.f32 0.0, %v3106
    %v3108 = vpop.f32.mrb[0].mxu0
    %3109 = vmatprep.mubr.bf16.mxu0 0
    %3110 = vmatmul.mubr.bf16.gmra.mrb[0].mxu0 %v2907
    %v3111 = vpop.f32.mrb[0].mxu0
    %v3112 = vadd.f32 0.0, %v3111
    %v3113 = vpop.f32.mrb[0].mxu0
    %v3114 = vpop.f32.mrb[0].mxu0
    %v3115 = vadd.f32 0.0, %v3114
    %v3116 = vpop.f32.mrb[0].mxu0
    %3117 = vmatprep.mubr.bf16.mxu0 0
    %3118 = vmatmul.mubr.bf16.gmra.mrb[0].mxu0 %v2910
    %v3119 = vpop.f32.mrb[0].mxu0
    %v3120 = vadd.f32 0.0, %v3119
    %v3121 = vpop.f32.mrb[0].mxu0
    %v3122 = vpop.f32.mrb[0].mxu0
    %v3123 = vadd.f32 0.0, %v3122
    %v3124 = vpop.f32.mrb[0].mxu0
    %3125 = vmatprep.mubr.bf16.mxu0 0
    %3126 = vmatmul.mubr.bf16.gmra.mrb[0].mxu0 %v2913
    %v3127 = vpop.f32.mrb[0].mxu0
    %v3128 = vadd.f32 0.0, %v3127
    %v3129 = vpop.f32.mrb[0].mxu0
    %v3130 = vpop.f32.mrb[0].mxu0
    %v3131 = vadd.f32 0.0, %v3130
    %v3132 = vpop.f32.mrb[0].mxu0
    %3133 = vmatprep.mubr.bf16.mxu0 0
    %3134 = vmatmul.mubr.bf16.gmra.mrb[0].mxu0 %v2916
    %v3135 = vpop.f32.mrb[0].mxu0
    %v3136 = vadd.f32 0.0, %v3135
    %v3137 = vpop.f32.mrb[0].mxu0
    %v3138 = vpop.f32.mrb[0].mxu0
    %v3139 = vadd.f32 0.0, %v3138
    %v3140 = vpop.f32.mrb[0].mxu0
    %3141 = vmatprep.mubr.bf16.mxu0 0
    %3142 = vmatmul.mubr.bf16.gmra.mrb[0].mxu0 %v2919
    %v3143 = vpop.f32.mrb[0].mxu0
    %v3144 = vadd.f32 0.0, %v3143
    %v3145 = vpop.f32.mrb[0].mxu0
    %v3146 = vpop.f32.mrb[0].mxu0
    %v3147 = vadd.f32 0.0, %v3146
    %v3148 = vpop.f32.mrb[0].mxu0
    %3149 = vmatprep.mubr.bf16.mxu0 0
    %3150 = vmatmul.mubr.bf16.gmra.mrb[0].mxu0 %v2922
    %v3151 = vpop.f32.mrb[0].mxu0
    %v3152 = vadd.f32 0.0, %v3151
    %v3153 = vpop.f32.mrb[0].mxu0
    %v3154 = vpop.f32.mrb[0].mxu0
    %v3155 = vadd.f32 0.0, %v3154
    %v3156 = vpop.f32.mrb[0].mxu0
    %3157 = vmatprep.mubr.bf16.mxu0 0
    %3158 = vmatmul.mubr.bf16.gmra.mrb[0].mxu0 %v2925
    %v3159 = vpop.f32.mrb[0].mxu0
    %v3160 = vadd.f32 0.0, %v3159
    %v3161 = vpop.f32.mrb[0].mxu0
    %v3162 = vpop.f32.mrb[0].mxu0
    %v3163 = vadd.f32 0.0, %v3162
    %v3164 = vpop.f32.mrb[0].mxu0
    %3165 = vmatprep.mubr.bf16.mxu0 0
    %3166 = vmatmul.mubr.bf16.gmra.mrb[0].mxu0 %v2928
    %v3167 = vpop.f32.mrb[0].mxu0
    %v3168 = vadd.f32 0.0, %v3167
    %v3169 = vpop.f32.mrb[0].mxu0
    %v3170 = vpop.f32.mrb[0].mxu0
    %v3171 = vadd.f32 0.0, %v3170
    %v3172 = vpop.f32.mrb[0].mxu0
    %3173 = vmatprep.mubr.bf16.mxu0 0
    %3174 = vmatmul.mubr.bf16.gmra.mrb[0].mxu0 %v2931
    %v3175 = vpop.f32.mrb[0].mxu0
    %v3176 = vadd.f32 0.0, %v3175
    %v3177 = vpop.f32.mrb[0].mxu0
    %v3178 = vpop.f32.mrb[0].mxu0
    %v3179 = vadd.f32 0.0, %v3178
    %v3180 = vpop.f32.mrb[0].mxu0
    %3181 = vmatprep.mubr.bf16.mxu0 0
    %3182 = vmatmul.mubr.bf16.gmra.mrb[0].mxu0 %v2934
    %v3183 = vpop.f32.mrb[0].mxu0
    %v3184 = vadd.f32 0.0, %v3183
    %v3185 = vpop.f32.mrb[0].mxu0
    %v3186 = vpop.f32.mrb[0].mxu0
    %v3187 = vadd.f32 0.0, %v3186
    %v3188 = vpop.f32.mrb[0].mxu0
    %3189 = vmatprep.mubr.bf16.mxu0 0
    %3190 = vmatmul.mubr.bf16.gmra.mrb[0].mxu0 %v2937
    %v3191 = vpop.f32.mrb[0].mxu0
    %v3192 = vadd.f32 0.0, %v3191
    %v3193 = vpop.f32.mrb[0].mxu0
    %v3194 = vpop.f32.mrb[0].mxu0
    %v3195 = vadd.f32 0.0, %v3194
    %v3196 = vpop.f32.mrb[0].mxu0
    %3197 = vmatprep.mubr.bf16.mxu0 0
    %3198 = vmatmul.mubr.bf16.gmra.mrb[0].mxu0 %v2940
    %v3199 = vpop.f32.mrb[0].mxu0
    %v3200 = vadd.f32 0.0, %v3199
    %v3201 = vpop.f32.mrb[0].mxu0
    %v3202 = vpop.f32.mrb[0].mxu0
    %v3203 = vadd.f32 0.0, %v3202
    %v3204 = vpop.f32.mrb[0].mxu0
    %3205 = vmatprep.mubr.bf16.mxu0 0
    %3206 = vmatmul.mubr.bf16.gmra.mrb[0].mxu0 %v2943
    %v3207 = vpop.f32.mrb[0].mxu0
    %v3208 = vadd.f32 0.0, %v3207
    %v3209 = vpop.f32.mrb[0].mxu0
    %v3210 = vpop.f32.mrb[0].mxu0
    %v3211 = vadd.f32 0.0, %v3210
    %v3212 = vpop.f32.mrb[0].mxu0
    %3213 = vmatprep.mubr.bf16.mxu0 0
    %3214 = vmatmul.mubr.bf16.gmra.mrb[0].mxu0 %v2946
    %v3215 = vpop.f32.mrb[0].mxu0
    %v3216 = vadd.f32 0.0, %v3215
    %v3217 = vpop.f32.mrb[0].mxu0
    %v3218 = vpop.f32.mrb[0].mxu0
    %v3219 = vadd.f32 0.0, %v3218
    %v3220 = vpop.f32.mrb[0].mxu0
    %3221 = vmatprep.mubr.bf16.mxu0 0
    %3222 = vmatmul.mubr.bf16.gmra.mrb[0].mxu0 %v2949
    %v3223 = vpop.f32.mrb[0].mxu0
    %v3224 = vadd.f32 0.0, %v3223
    %v3225 = vpop.f32.mrb[0].mxu0
    %v3226 = vpop.f32.mrb[0].mxu0
    %v3227 = vadd.f32 0.0, %v3226
    %v3228 = vpop.f32.mrb[0].mxu0
    %3229 = vmatprep.mubr.bf16.mxu0 0
    %3230 = vmatmul.mubr.bf16.gmra.mrb[0].mxu0 %v2952
    %v3231 = vpop.f32.mrb[0].mxu0
    %v3232 = vadd.f32 0.0, %v3231
    %v3233 = vpop.f32.mrb[0].mxu0
    %v3234 = vpop.f32.mrb[0].mxu0
    %v3235 = vadd.f32 0.0, %v3234
    %v3236 = vpop.f32.mrb[0].mxu0
    %3237 = vmatprep.mubr.bf16.mxu0 0
    %3238 = vmatmul.mubr.bf16.gmra.mrb[0].mxu0 %v2955
    %v3239 = vpop.f32.mrb[0].mxu0
    %v3240 = vadd.f32 0.0, %v3239
    %v3241 = vpop.f32.mrb[0].mxu0
    %v3242 = vpop.f32.mrb[0].mxu0
    %v3243 = vadd.f32 0.0, %v3242
    %v3244 = vpop.f32.mrb[0].mxu0
    %3245 = vdwg.mxu0
    %v3246 = vadd.f32 %v2333, %v2992
    %v3247 = vadd.f32 %v2336, %v2995
    %v3248 = vadd.f32 %v2341, %v3000
    %v3249 = vadd.f32 %v2344, %v3003
    %v3250 = vadd.f32 %v2349, %v3008
    %v3251 = vadd.f32 %v2352, %v3011
    %v3252 = vadd.f32 %v2357, %v3016
    %v3253 = vadd.f32 %v2360, %v3019
    %v3254 = vadd.f32 %v2365, %v3024
    %v3255 = vadd.f32 %v2368, %v3027
    %v3256 = vadd.f32 %v2373, %v3032
    %v3257 = vadd.f32 %v2376, %v3035
    %v3258 = vadd.f32 %v2381, %v3040
    %v3259 = vadd.f32 %v2384, %v3043
    %v3260 = vadd.f32 %v2389, %v3048
    %v3261 = vadd.f32 %v2392, %v3051
    %v3262 = vadd.f32 %v2397, %v3056
    %v3263 = vadd.f32 %v2400, %v3059
    %v3264 = vadd.f32 %v2405, %v3064
    %v3265 = vadd.f32 %v2408, %v3067
    %v3266 = vadd.f32 %v2413, %v3072
    %v3267 = vadd.f32 %v2416, %v3075
    %v3268 = vadd.f32 %v2421, %v3080
    %v3269 = vadd.f32 %v2424, %v3083
    %v3270 = vadd.f32 %v2429, %v3088
    %v3271 = vadd.f32 %v2432, %v3091
    %v3272 = vadd.f32 %v2437, %v3096
    %v3273 = vadd.f32 %v2440, %v3099
    %v3274 = vadd.f32 %v2445, %v3104
    %v3275 = vadd.f32 %v2448, %v3107
    %v3276 = vadd.f32 %v2453, %v3112
    %v3277 = vadd.f32 %v2456, %v3115
    %v3278 = vadd.f32 %v2461, %v3120
    %v3279 = vadd.f32 %v2464, %v3123
    %v3280 = vadd.f32 %v2469, %v3128
    %v3281 = vadd.f32 %v2472, %v3131
    %v3282 = vadd.f32 %v2477, %v3136
    %v3283 = vadd.f32 %v2480, %v3139
    %v3284 = vadd.f32 %v2485, %v3144
    %v3285 = vadd.f32 %v2488, %v3147
    %v3286 = vadd.f32 %v2493, %v3152
    %v3287 = vadd.f32 %v2496, %v3155
    %v3288 = vadd.f32 %v2501, %v3160
    %v3289 = vadd.f32 %v2504, %v3163
    %v3290 = vadd.f32 %v2509, %v3168
    %v3291 = vadd.f32 %v2512, %v3171
    %v3292 = vadd.f32 %v2517, %v3176
    %v3293 = vadd.f32 %v2520, %v3179
    %v3294 = vadd.f32 %v2525, %v3184
    %v3295 = vadd.f32 %v2528, %v3187
    %v3296 = vadd.f32 %v2533, %v3192
    %v3297 = vadd.f32 %v2536, %v3195
    %v3298 = vadd.f32 %v2541, %v3200
    %v3299 = vadd.f32 %v2544, %v3203
    %v3300 = vadd.f32 %v2549, %v3208
    %v3301 = vadd.f32 %v2552, %v3211
    %v3302 = vadd.f32 %v2557, %v3216
    %v3303 = vadd.f32 %v2560, %v3219
    %v3304 = vadd.f32 %v2565, %v3224
    %v3305 = vadd.f32 %v2568, %v3227
    %v3306 = vadd.f32 %v2573, %v3232
    %v3307 = vadd.f32 %v2576, %v3235
    %v3308 = vadd.f32 %v2581, %v3240
    %v3309 = vadd.f32 %v2584, %v3243
    %v3310 = vpack.c.bf16 %v1340, %v1339
    %v3311 = vpack.c.bf16 %v1394, %v1393
    %s3312 = scalar_lea.vmem [#allocation6], 48
    %v3313 = vld [vmem:[%s3312] sm:$0xf]
    %v3314 = vld [vmem:[%s3312 + $0x4] sm:$0xf]
    %v3315 = vld [vmem:[%s3312 + $0x8] sm:$0xf]
    %v3316 = vld [vmem:[%s3312 + $0xc] sm:$0xf]
    %v3321 = vunpack.c.l.b16 %v3313
    %v3322 = vunpack.c.l.b16 %v3314
    %v3323 = vunpack.c.l.b16 %v3315
    %v3324 = vunpack.c.l.b16 %v3316
    %v3325 = vpack.c.b16 %v3322, %v3321
    %v3326 = vpack.c.b16 %v3324, %v3323
    %v3330 = vsel %vm572, %v3310, 0
    %v3333 = vsel %vm572, %v3311, 0
    %3335 = vmatprep.subr.bf16.mxu0 0
    %3336 = vmatpush1.bf16.msra.mxu0 %v3325
    %3337 = vmatprep.subr.bf16.mxu0 0
    %3338 = vmatpush1.bf16.msra.mxu0 %v3326
    %3339 = vmatprep.subr.bf16.mxu0 0
    %3340 = vmatpush1.bf16.msra.mxu0 0
    %3341 = vmatprep.subr.bf16.mxu0 0
    %3342 = vmatpush1.bf16.msra.mxu0 0
    %3343 = vmatprep.subr.bf16.mxu0 0
    %3344 = vmatpush1.bf16.msra.mxu0 0
    %3345 = vmatprep.subr.bf16.mxu0 0
    %3346 = vmatpush1.bf16.msra.mxu0 0
    %3347 = vmatprep.subr.bf16.mxu0 0
    %3348 = vmatpush1.bf16.msra.mxu0 0
    %3349 = vmatprep.subr.bf16.mxu0 0
    %3350 = vmatpush1.bf16.msra.mxu0 0
    %3351 = vmatprep.subr.bf16.mxu0 0
    %3352 = vmatpush1.bf16.msra.mxu0 0
    %3353 = vmatprep.subr.bf16.mxu0 0
    %3354 = vmatpush1.bf16.msra.mxu0 0
    %3355 = vmatprep.subr.bf16.mxu0 0
    %3356 = vmatpush1.bf16.msra.mxu0 0
    %3357 = vmatprep.subr.bf16.mxu0 0
    %3358 = vmatpush1.bf16.msra.mxu0 0
    %3359 = vmatprep.subr.bf16.mxu0 0
    %3360 = vmatpush1.bf16.msra.mxu0 0
    %3361 = vmatprep.subr.bf16.mxu0 0
    %3362 = vmatpush1.bf16.msra.mxu0 0
    %3363 = vmatprep.subr.bf16.mxu0 0
    %3364 = vmatpush1.bf16.msra.mxu0 0
    %3365 = vmatprep.subr.bf16.mxu0 0
    %3366 = vmatpush1.bf16.msra.mxu0 0
    %3367 = vmatprep.mubr.bf16.mxu0 0
    %3368 = vmatmul.mubr.bf16.gmra.mrb[0].mxu0 %v2206
    %v3369 = vpop.f32.mrb[0].mxu0
    %v3370 = vadd.f32 0.0, %v3369
    %v3371 = vpop.f32.mrb[0].mxu0
    %v3372 = vpop.f32.mrb[0].mxu0
    %v3373 = vadd.f32 0.0, %v3372
    %v3374 = vpop.f32.mrb[0].mxu0
    %3375 = vmatprep.mubr.bf16.mxu0 0
    %3376 = vmatmul.mubr.bf16.gmra.mrb[0].mxu0 %v2209
    %v3377 = vpop.f32.mrb[0].mxu0
    %v3378 = vadd.f32 0.0, %v3377
    %v3379 = vpop.f32.mrb[0].mxu0
    %v3380 = vpop.f32.mrb[0].mxu0
    %v3381 = vadd.f32 0.0, %v3380
    %v3382 = vpop.f32.mrb[0].mxu0
    %3383 = vmatprep.mubr.bf16.mxu0 0
    %3384 = vmatmul.mubr.bf16.gmra.mrb[0].mxu0 %v2212
    %v3385 = vpop.f32.mrb[0].mxu0
    %v3386 = vadd.f32 0.0, %v3385
    %v3387 = vpop.f32.mrb[0].mxu0
    %v3388 = vpop.f32.mrb[0].mxu0
    %v3389 = vadd.f32 0.0, %v3388
    %v3390 = vpop.f32.mrb[0].mxu0
    %3391 = vmatprep.mubr.bf16.mxu0 0
    %3392 = vmatmul.mubr.bf16.gmra.mrb[0].mxu0 %v2215
    %v3393 = vpop.f32.mrb[0].mxu0
    %v3394 = vadd.f32 0.0, %v3393
    %v3395 = vpop.f32.mrb[0].mxu0
    %v3396 = vpop.f32.mrb[0].mxu0
    %v3397 = vadd.f32 0.0, %v3396
    %v3398 = vpop.f32.mrb[0].mxu0
    %3399 = vmatprep.mubr.bf16.mxu0 0
    %3400 = vmatmul.mubr.bf16.gmra.mrb[0].mxu0 %v2218
    %v3401 = vpop.f32.mrb[0].mxu0
    %v3402 = vadd.f32 0.0, %v3401
    %v3403 = vpop.f32.mrb[0].mxu0
    %v3404 = vpop.f32.mrb[0].mxu0
    %v3405 = vadd.f32 0.0, %v3404
    %v3406 = vpop.f32.mrb[0].mxu0
    %3407 = vmatprep.mubr.bf16.mxu0 0
    %3408 = vmatmul.mubr.bf16.gmra.mrb[0].mxu0 %v2221
    %v3409 = vpop.f32.mrb[0].mxu0
    %v3410 = vadd.f32 0.0, %v3409
    %v3411 = vpop.f32.mrb[0].mxu0
    %v3412 = vpop.f32.mrb[0].mxu0
    %v3413 = vadd.f32 0.0, %v3412
    %v3414 = vpop.f32.mrb[0].mxu0
    %3415 = vmatprep.mubr.bf16.mxu0 0
    %3416 = vmatmul.mubr.bf16.gmra.mrb[0].mxu0 %v2224
    %v3417 = vpop.f32.mrb[0].mxu0
    %v3418 = vadd.f32 0.0, %v3417
    %v3419 = vpop.f32.mrb[0].mxu0
    %v3420 = vpop.f32.mrb[0].mxu0
    %v3421 = vadd.f32 0.0, %v3420
    %v3422 = vpop.f32.mrb[0].mxu0
    %3423 = vmatprep.mubr.bf16.mxu0 0
    %3424 = vmatmul.mubr.bf16.gmra.mrb[0].mxu0 %v2227
    %v3425 = vpop.f32.mrb[0].mxu0
    %v3426 = vadd.f32 0.0, %v3425
    %v3427 = vpop.f32.mrb[0].mxu0
    %v3428 = vpop.f32.mrb[0].mxu0
    %v3429 = vadd.f32 0.0, %v3428
    %v3430 = vpop.f32.mrb[0].mxu0
    %3431 = vmatprep.mubr.bf16.mxu0 0
    %3432 = vmatmul.mubr.bf16.gmra.mrb[0].mxu0 %v2230
    %v3433 = vpop.f32.mrb[0].mxu0
    %v3434 = vadd.f32 0.0, %v3433
    %v3435 = vpop.f32.mrb[0].mxu0
    %v3436 = vpop.f32.mrb[0].mxu0
    %v3437 = vadd.f32 0.0, %v3436
    %v3438 = vpop.f32.mrb[0].mxu0
    %3439 = vmatprep.mubr.bf16.mxu0 0
    %3440 = vmatmul.mubr.bf16.gmra.mrb[0].mxu0 %v2233
    %v3441 = vpop.f32.mrb[0].mxu0
    %v3442 = vadd.f32 0.0, %v3441
    %v3443 = vpop.f32.mrb[0].mxu0
    %v3444 = vpop.f32.mrb[0].mxu0
    %v3445 = vadd.f32 0.0, %v3444
    %v3446 = vpop.f32.mrb[0].mxu0
    %3447 = vmatprep.mubr.bf16.mxu0 0
    %3448 = vmatmul.mubr.bf16.gmra.mrb[0].mxu0 %v2236
    %v3449 = vpop.f32.mrb[0].mxu0
    %v3450 = vadd.f32 0.0, %v3449
    %v3451 = vpop.f32.mrb[0].mxu0
    %v3452 = vpop.f32.mrb[0].mxu0
    %v3453 = vadd.f32 0.0, %v3452
    %v3454 = vpop.f32.mrb[0].mxu0
    %3455 = vmatprep.mubr.bf16.mxu0 0
    %3456 = vmatmul.mubr.bf16.gmra.mrb[0].mxu0 %v2239
    %v3457 = vpop.f32.mrb[0].mxu0
    %v3458 = vadd.f32 0.0, %v3457
    %v3459 = vpop.f32.mrb[0].mxu0
    %v3460 = vpop.f32.mrb[0].mxu0
    %v3461 = vadd.f32 0.0, %v3460
    %v3462 = vpop.f32.mrb[0].mxu0
    %3463 = vmatprep.mubr.bf16.mxu0 0
    %3464 = vmatmul.mubr.bf16.gmra.mrb[0].mxu0 %v2242
    %v3465 = vpop.f32.mrb[0].mxu0
    %v3466 = vadd.f32 0.0, %v3465
    %v3467 = vpop.f32.mrb[0].mxu0
    %v3468 = vpop.f32.mrb[0].mxu0
    %v3469 = vadd.f32 0.0, %v3468
    %v3470 = vpop.f32.mrb[0].mxu0
    %3471 = vmatprep.mubr.bf16.mxu0 0
    %3472 = vmatmul.mubr.bf16.gmra.mrb[0].mxu0 %v2245
    %v3473 = vpop.f32.mrb[0].mxu0
    %v3474 = vadd.f32 0.0, %v3473
    %v3475 = vpop.f32.mrb[0].mxu0
    %v3476 = vpop.f32.mrb[0].mxu0
    %v3477 = vadd.f32 0.0, %v3476
    %v3478 = vpop.f32.mrb[0].mxu0
    %3479 = vmatprep.mubr.bf16.mxu0 0
    %3480 = vmatmul.mubr.bf16.gmra.mrb[0].mxu0 %v2248
    %v3481 = vpop.f32.mrb[0].mxu0
    %v3482 = vadd.f32 0.0, %v3481
    %v3483 = vpop.f32.mrb[0].mxu0
    %v3484 = vpop.f32.mrb[0].mxu0
    %v3485 = vadd.f32 0.0, %v3484
    %v3486 = vpop.f32.mrb[0].mxu0
    %3487 = vmatprep.mubr.bf16.mxu0 0
    %3488 = vmatmul.mubr.bf16.gmra.mrb[0].mxu0 %v3330
    %v3489 = vpop.f32.mrb[0].mxu0
    %v3490 = vadd.f32 0.0, %v3489
    %v3491 = vpop.f32.mrb[0].mxu0
    %v3492 = vpop.f32.mrb[0].mxu0
    %v3493 = vadd.f32 0.0, %v3492
    %v3494 = vpop.f32.mrb[0].mxu0
    %3495 = vmatprep.mubr.bf16.mxu0 0
    %3496 = vmatmul.mubr.bf16.gmra.mrb[0].mxu0 %v2254
    %v3497 = vpop.f32.mrb[0].mxu0
    %v3498 = vadd.f32 0.0, %v3497
    %v3499 = vpop.f32.mrb[0].mxu0
    %v3500 = vpop.f32.mrb[0].mxu0
    %v3501 = vadd.f32 0.0, %v3500
    %v3502 = vpop.f32.mrb[0].mxu0
    %3503 = vmatprep.mubr.bf16.mxu0 0
    %3504 = vmatmul.mubr.bf16.gmra.mrb[0].mxu0 %v2257
    %v3505 = vpop.f32.mrb[0].mxu0
    %v3506 = vadd.f32 0.0, %v3505
    %v3507 = vpop.f32.mrb[0].mxu0
    %v3508 = vpop.f32.mrb[0].mxu0
    %v3509 = vadd.f32 0.0, %v3508
    %v3510 = vpop.f32.mrb[0].mxu0
    %3511 = vmatprep.mubr.bf16.mxu0 0
    %3512 = vmatmul.mubr.bf16.gmra.mrb[0].mxu0 %v2260
    %v3513 = vpop.f32.mrb[0].mxu0
    %v3514 = vadd.f32 0.0, %v3513
    %v3515 = vpop.f32.mrb[0].mxu0
    %v3516 = vpop.f32.mrb[0].mxu0
    %v3517 = vadd.f32 0.0, %v3516
    %v3518 = vpop.f32.mrb[0].mxu0
    %3519 = vmatprep.mubr.bf16.mxu0 0
    %3520 = vmatmul.mubr.bf16.gmra.mrb[0].mxu0 %v2263
    %v3521 = vpop.f32.mrb[0].mxu0
    %v3522 = vadd.f32 0.0, %v3521
    %v3523 = vpop.f32.mrb[0].mxu0
    %v3524 = vpop.f32.mrb[0].mxu0
    %v3525 = vadd.f32 0.0, %v3524
    %v3526 = vpop.f32.mrb[0].mxu0
    %3527 = vmatprep.mubr.bf16.mxu0 0
    %3528 = vmatmul.mubr.bf16.gmra.mrb[0].mxu0 %v2266
    %v3529 = vpop.f32.mrb[0].mxu0
    %v3530 = vadd.f32 0.0, %v3529
    %v3531 = vpop.f32.mrb[0].mxu0
    %v3532 = vpop.f32.mrb[0].mxu0
    %v3533 = vadd.f32 0.0, %v3532
    %v3534 = vpop.f32.mrb[0].mxu0
    %3535 = vmatprep.mubr.bf16.mxu0 0
    %3536 = vmatmul.mubr.bf16.gmra.mrb[0].mxu0 %v2269
    %v3537 = vpop.f32.mrb[0].mxu0
    %v3538 = vadd.f32 0.0, %v3537
    %v3539 = vpop.f32.mrb[0].mxu0
    %v3540 = vpop.f32.mrb[0].mxu0
    %v3541 = vadd.f32 0.0, %v3540
    %v3542 = vpop.f32.mrb[0].mxu0
    %3543 = vmatprep.mubr.bf16.mxu0 0
    %3544 = vmatmul.mubr.bf16.gmra.mrb[0].mxu0 %v2272
    %v3545 = vpop.f32.mrb[0].mxu0
    %v3546 = vadd.f32 0.0, %v3545
    %v3547 = vpop.f32.mrb[0].mxu0
    %v3548 = vpop.f32.mrb[0].mxu0
    %v3549 = vadd.f32 0.0, %v3548
    %v3550 = vpop.f32.mrb[0].mxu0
    %3551 = vmatprep.mubr.bf16.mxu0 0
    %3552 = vmatmul.mubr.bf16.gmra.mrb[0].mxu0 %v2275
    %v3553 = vpop.f32.mrb[0].mxu0
    %v3554 = vadd.f32 0.0, %v3553
    %v3555 = vpop.f32.mrb[0].mxu0
    %v3556 = vpop.f32.mrb[0].mxu0
    %v3557 = vadd.f32 0.0, %v3556
    %v3558 = vpop.f32.mrb[0].mxu0
    %3559 = vmatprep.mubr.bf16.mxu0 0
    %3560 = vmatmul.mubr.bf16.gmra.mrb[0].mxu0 %v2278
    %v3561 = vpop.f32.mrb[0].mxu0
    %v3562 = vadd.f32 0.0, %v3561
    %v3563 = vpop.f32.mrb[0].mxu0
    %v3564 = vpop.f32.mrb[0].mxu0
    %v3565 = vadd.f32 0.0, %v3564
    %v3566 = vpop.f32.mrb[0].mxu0
    %3567 = vmatprep.mubr.bf16.mxu0 0
    %3568 = vmatmul.mubr.bf16.gmra.mrb[0].mxu0 %v2281
    %v3569 = vpop.f32.mrb[0].mxu0
    %v3570 = vadd.f32 0.0, %v3569
    %v3571 = vpop.f32.mrb[0].mxu0
    %v3572 = vpop.f32.mrb[0].mxu0
    %v3573 = vadd.f32 0.0, %v3572
    %v3574 = vpop.f32.mrb[0].mxu0
    %3575 = vmatprep.mubr.bf16.mxu0 0
    %3576 = vmatmul.mubr.bf16.gmra.mrb[0].mxu0 %v2284
    %v3577 = vpop.f32.mrb[0].mxu0
    %v3578 = vadd.f32 0.0, %v3577
    %v3579 = vpop.f32.mrb[0].mxu0
    %v3580 = vpop.f32.mrb[0].mxu0
    %v3581 = vadd.f32 0.0, %v3580
    %v3582 = vpop.f32.mrb[0].mxu0
    %3583 = vmatprep.mubr.bf16.mxu0 0
    %3584 = vmatmul.mubr.bf16.gmra.mrb[0].mxu0 %v2287
    %v3585 = vpop.f32.mrb[0].mxu0
    %v3586 = vadd.f32 0.0, %v3585
    %v3587 = vpop.f32.mrb[0].mxu0
    %v3588 = vpop.f32.mrb[0].mxu0
    %v3589 = vadd.f32 0.0, %v3588
    %v3590 = vpop.f32.mrb[0].mxu0
    %3591 = vmatprep.mubr.bf16.mxu0 0
    %3592 = vmatmul.mubr.bf16.gmra.mrb[0].mxu0 %v2290
    %v3593 = vpop.f32.mrb[0].mxu0
    %v3594 = vadd.f32 0.0, %v3593
    %v3595 = vpop.f32.mrb[0].mxu0
    %v3596 = vpop.f32.mrb[0].mxu0
    %v3597 = vadd.f32 0.0, %v3596
    %v3598 = vpop.f32.mrb[0].mxu0
    %3599 = vmatprep.mubr.bf16.mxu0 0
    %3600 = vmatmul.mubr.bf16.gmra.mrb[0].mxu0 %v2293
    %v3601 = vpop.f32.mrb[0].mxu0
    %v3602 = vadd.f32 0.0, %v3601
    %v3603 = vpop.f32.mrb[0].mxu0
    %v3604 = vpop.f32.mrb[0].mxu0
    %v3605 = vadd.f32 0.0, %v3604
    %v3606 = vpop.f32.mrb[0].mxu0
    %3607 = vmatprep.mubr.bf16.mxu0 0
    %3608 = vmatmul.mubr.bf16.gmra.mrb[0].mxu0 %v2296
    %v3609 = vpop.f32.mrb[0].mxu0
    %v3610 = vadd.f32 0.0, %v3609
    %v3611 = vpop.f32.mrb[0].mxu0
    %v3612 = vpop.f32.mrb[0].mxu0
    %v3613 = vadd.f32 0.0, %v3612
    %v3614 = vpop.f32.mrb[0].mxu0
    %3615 = vmatprep.mubr.bf16.mxu0 0
    %3616 = vmatmul.mubr.bf16.gmra.mrb[0].mxu0 %v3333
    %v3617 = vpop.f32.mrb[0].mxu0
    %v3618 = vadd.f32 0.0, %v3617
    %v3619 = vpop.f32.mrb[0].mxu0
    %v3620 = vpop.f32.mrb[0].mxu0
    %v3621 = vadd.f32 0.0, %v3620
    %v3622 = vpop.f32.mrb[0].mxu0
    %3623 = vdwg.mxu0
    %v3624 = vadd.f32 %v3246, %v3370
    %v3625 = vadd.f32 %v3247, %v3373
    %v3626 = vadd.f32 %v3248, %v3378
    %v3627 = vadd.f32 %v3249, %v3381
    %v3628 = vadd.f32 %v3250, %v3386
    %v3629 = vadd.f32 %v3251, %v3389
    %v3630 = vadd.f32 %v3252, %v3394
    %v3631 = vadd.f32 %v3253, %v3397
    %v3632 = vadd.f32 %v3254, %v3402
    %v3633 = vadd.f32 %v3255, %v3405
    %v3634 = vadd.f32 %v3256, %v3410
    %v3635 = vadd.f32 %v3257, %v3413
    %v3636 = vadd.f32 %v3258, %v3418
    %v3637 = vadd.f32 %v3259, %v3421
    %v3638 = vadd.f32 %v3260, %v3426
    %v3639 = vadd.f32 %v3261, %v3429
    %v3640 = vadd.f32 %v3262, %v3434
    %v3641 = vadd.f32 %v3263, %v3437
    %v3642 = vadd.f32 %v3264, %v3442
    %v3643 = vadd.f32 %v3265, %v3445
    %v3644 = vadd.f32 %v3266, %v3450
    %v3645 = vadd.f32 %v3267, %v3453
    %v3646 = vadd.f32 %v3268, %v3458
    %v3647 = vadd.f32 %v3269, %v3461
    %v3648 = vadd.f32 %v3270, %v3466
    %v3649 = vadd.f32 %v3271, %v3469
    %v3650 = vadd.f32 %v3272, %v3474
    %v3651 = vadd.f32 %v3273, %v3477
    %v3652 = vadd.f32 %v3274, %v3482
    %v3653 = vadd.f32 %v3275, %v3485
    %v3654 = vadd.f32 %v3276, %v3490
    %v3655 = vadd.f32 %v3277, %v3493
    %v3656 = vadd.f32 %v3278, %v3498
    %v3657 = vadd.f32 %v3279, %v3501
    %v3658 = vadd.f32 %v3280, %v3506
    %v3659 = vadd.f32 %v3281, %v3509
    %v3660 = vadd.f32 %v3282, %v3514
    %v3661 = vadd.f32 %v3283, %v3517
    %v3662 = vadd.f32 %v3284, %v3522
    %v3663 = vadd.f32 %v3285, %v3525
    %v3664 = vadd.f32 %v3286, %v3530
    %v3665 = vadd.f32 %v3287, %v3533
    %v3666 = vadd.f32 %v3288, %v3538
    %v3667 = vadd.f32 %v3289, %v3541
    %v3668 = vadd.f32 %v3290, %v3546
    %v3669 = vadd.f32 %v3291, %v3549
    %v3670 = vadd.f32 %v3292, %v3554
    %v3671 = vadd.f32 %v3293, %v3557
    %v3672 = vadd.f32 %v3294, %v3562
    %v3673 = vadd.f32 %v3295, %v3565
    %v3674 = vadd.f32 %v3296, %v3570
    %v3675 = vadd.f32 %v3297, %v3573
    %v3676 = vadd.f32 %v3298, %v3578
    %v3677 = vadd.f32 %v3299, %v3581
    %v3678 = vadd.f32 %v3300, %v3586
    %v3679 = vadd.f32 %v3301, %v3589
    %v3680 = vadd.f32 %v3302, %v3594
    %v3681 = vadd.f32 %v3303, %v3597
    %v3682 = vadd.f32 %v3304, %v3602
    %v3683 = vadd.f32 %v3305, %v3605
    %v3684 = vadd.f32 %v3306, %v3610
    %v3685 = vadd.f32 %v3307, %v3613
    %v3686 = vadd.f32 %v3308, %v3618
    %v3687 = vadd.f32 %v3309, %v3621
    %v3694 = vrot.slane %v1339, 1
    %v3695 = vrot.slane %v1340, 1
    %v3696 = vsel %vm1531, %v3694, %v3695
    %v3697 = vrot.slane %v1341, 1
    %v3698 = vsel %vm1531, %v3695, %v3697
    %v3699 = vrot.slane %v1393, 1
    %v3700 = vrot.slane %v1394, 1
    %v3701 = vsel %vm1531, %v3699, %v3700
    %v3702 = vrot.slane %v1395, 1
    %v3703 = vsel %vm1531, %v3700, %v3702
    %v3708 = vpack.c.bf16 %v3698, %v3696
    %v3709 = vpack.c.bf16 %v3703, %v3701
    %s3710 = scalar_lea.vmem [#allocation6], 64
    %v3711 = vld [vmem:[%s3710] sm:$0xf]
    %v3712 = vld [vmem:[%s3710 + $0x4] sm:$0xf]
    %v3713 = vld [vmem:[%s3710 + $0x8] sm:$0xf]
    %v3714 = vld [vmem:[%s3710 + $0xc] sm:$0xf]
    %v3719 = vunpack.c.l.b16 %v3711
    %v3720 = vunpack.c.l.b16 %v3712
    %v3721 = vunpack.c.l.b16 %v3713
    %v3722 = vunpack.c.l.b16 %v3714
    %v3723 = vpack.c.b16 %v3720, %v3719
    %v3724 = vpack.c.b16 %v3722, %v3721
    %v3728 = vsel %vm572, %v3708, 0
    %v3731 = vsel %vm572, %v3709, 0
    %3733 = vmatprep.subr.bf16.mxu0 0
    %3734 = vmatpush1.bf16.msra.mxu0 %v3723
    %3735 = vmatprep.subr.bf16.mxu0 0
    %3736 = vmatpush1.bf16.msra.mxu0 %v3724
    %3737 = vmatprep.subr.bf16.mxu0 0
    %3738 = vmatpush1.bf16.msra.mxu0 0
    %3739 = vmatprep.subr.bf16.mxu0 0
    %3740 = vmatpush1.bf16.msra.mxu0 0
    %3741 = vmatprep.subr.bf16.mxu0 0
    %3742 = vmatpush1.bf16.msra.mxu0 0
    %3743 = vmatprep.subr.bf16.mxu0 0
    %3744 = vmatpush1.bf16.msra.mxu0 0
    %3745 = vmatprep.subr.bf16.mxu0 0
    %3746 = vmatpush1.bf16.msra.mxu0 0
    %3747 = vmatprep.subr.bf16.mxu0 0
    %3748 = vmatpush1.bf16.msra.mxu0 0
    %3749 = vmatprep.subr.bf16.mxu0 0
    %3750 = vmatpush1.bf16.msra.mxu0 0
    %3751 = vmatprep.subr.bf16.mxu0 0
    %3752 = vmatpush1.bf16.msra.mxu0 0
    %3753 = vmatprep.subr.bf16.mxu0 0
    %3754 = vmatpush1.bf16.msra.mxu0 0
    %3755 = vmatprep.subr.bf16.mxu0 0
    %3756 = vmatpush1.bf16.msra.mxu0 0
    %3757 = vmatprep.subr.bf16.mxu0 0
    %3758 = vmatpush1.bf16.msra.mxu0 0
    %3759 = vmatprep.subr.bf16.mxu0 0
    %3760 = vmatpush1.bf16.msra.mxu0 0
    %3761 = vmatprep.subr.bf16.mxu0 0
    %3762 = vmatpush1.bf16.msra.mxu0 0
    %3763 = vmatprep.subr.bf16.mxu0 0
    %3764 = vmatpush1.bf16.msra.mxu0 0
    %3765 = vmatprep.mubr.bf16.mxu0 0
    %3766 = vmatmul.mubr.bf16.gmra.mrb[0].mxu0 %v1809
    %v3767 = vpop.f32.mrb[0].mxu0
    %v3768 = vadd.f32 0.0, %v3767
    %v3769 = vpop.f32.mrb[0].mxu0
    %v3770 = vpop.f32.mrb[0].mxu0
    %v3771 = vadd.f32 0.0, %v3770
    %v3772 = vpop.f32.mrb[0].mxu0
    %3773 = vmatprep.mubr.bf16.mxu0 0
    %3774 = vmatmul.mubr.bf16.gmra.mrb[0].mxu0 %v1812
    %v3775 = vpop.f32.mrb[0].mxu0
    %v3776 = vadd.f32 0.0, %v3775
    %v3777 = vpop.f32.mrb[0].mxu0
    %v3778 = vpop.f32.mrb[0].mxu0
    %v3779 = vadd.f32 0.0, %v3778
    %v3780 = vpop.f32.mrb[0].mxu0
    %3781 = vmatprep.mubr.bf16.mxu0 0
    %3782 = vmatmul.mubr.bf16.gmra.mrb[0].mxu0 %v1815
    %v3783 = vpop.f32.mrb[0].mxu0
    %v3784 = vadd.f32 0.0, %v3783
    %v3785 = vpop.f32.mrb[0].mxu0
    %v3786 = vpop.f32.mrb[0].mxu0
    %v3787 = vadd.f32 0.0, %v3786
    %v3788 = vpop.f32.mrb[0].mxu0
    %3789 = vmatprep.mubr.bf16.mxu0 0
    %3790 = vmatmul.mubr.bf16.gmra.mrb[0].mxu0 %v1818
    %v3791 = vpop.f32.mrb[0].mxu0
    %v3792 = vadd.f32 0.0, %v3791
    %v3793 = vpop.f32.mrb[0].mxu0
    %v3794 = vpop.f32.mrb[0].mxu0
    %v3795 = vadd.f32 0.0, %v3794
    %v3796 = vpop.f32.mrb[0].mxu0
    %3797 = vmatprep.mubr.bf16.mxu0 0
    %3798 = vmatmul.mubr.bf16.gmra.mrb[0].mxu0 %v1821
    %v3799 = vpop.f32.mrb[0].mxu0
    %v3800 = vadd.f32 0.0, %v3799
    %v3801 = vpop.f32.mrb[0].mxu0
    %v3802 = vpop.f32.mrb[0].mxu0
    %v3803 = vadd.f32 0.0, %v3802
    %v3804 = vpop.f32.mrb[0].mxu0
    %3805 = vmatprep.mubr.bf16.mxu0 0
    %3806 = vmatmul.mubr.bf16.gmra.mrb[0].mxu0 %v1824
    %v3807 = vpop.f32.mrb[0].mxu0
    %v3808 = vadd.f32 0.0, %v3807
    %v3809 = vpop.f32.mrb[0].mxu0
    %v3810 = vpop.f32.mrb[0].mxu0
    %v3811 = vadd.f32 0.0, %v3810
    %v3812 = vpop.f32.mrb[0].mxu0
    %3813 = vmatprep.mubr.bf16.mxu0 0
    %3814 = vmatmul.mubr.bf16.gmra.mrb[0].mxu0 %v1827
    %v3815 = vpop.f32.mrb[0].mxu0
    %v3816 = vadd.f32 0.0, %v3815
    %v3817 = vpop.f32.mrb[0].mxu0
    %v3818 = vpop.f32.mrb[0].mxu0
    %v3819 = vadd.f32 0.0, %v3818
    %v3820 = vpop.f32.mrb[0].mxu0
    %3821 = vmatprep.mubr.bf16.mxu0 0
    %3822 = vmatmul.mubr.bf16.gmra.mrb[0].mxu0 %v1830
    %v3823 = vpop.f32.mrb[0].mxu0
    %v3824 = vadd.f32 0.0, %v3823
    %v3825 = vpop.f32.mrb[0].mxu0
    %v3826 = vpop.f32.mrb[0].mxu0
    %v3827 = vadd.f32 0.0, %v3826
    %v3828 = vpop.f32.mrb[0].mxu0
    %3829 = vmatprep.mubr.bf16.mxu0 0
    %3830 = vmatmul.mubr.bf16.gmra.mrb[0].mxu0 %v1833
    %v3831 = vpop.f32.mrb[0].mxu0
    %v3832 = vadd.f32 0.0, %v3831
    %v3833 = vpop.f32.mrb[0].mxu0
    %v3834 = vpop.f32.mrb[0].mxu0
    %v3835 = vadd.f32 0.0, %v3834
    %v3836 = vpop.f32.mrb[0].mxu0
    %3837 = vmatprep.mubr.bf16.mxu0 0
    %3838 = vmatmul.mubr.bf16.gmra.mrb[0].mxu0 %v1836
    %v3839 = vpop.f32.mrb[0].mxu0
    %v3840 = vadd.f32 0.0, %v3839
    %v3841 = vpop.f32.mrb[0].mxu0
    %v3842 = vpop.f32.mrb[0].mxu0
    %v3843 = vadd.f32 0.0, %v3842
    %v3844 = vpop.f32.mrb[0].mxu0
    %3845 = vmatprep.mubr.bf16.mxu0 0
    %3846 = vmatmul.mubr.bf16.gmra.mrb[0].mxu0 %v1839
    %v3847 = vpop.f32.mrb[0].mxu0
    %v3848 = vadd.f32 0.0, %v3847
    %v3849 = vpop.f32.mrb[0].mxu0
    %v3850 = vpop.f32.mrb[0].mxu0
    %v3851 = vadd.f32 0.0, %v3850
    %v3852 = vpop.f32.mrb[0].mxu0
    %3853 = vmatprep.mubr.bf16.mxu0 0
    %3854 = vmatmul.mubr.bf16.gmra.mrb[0].mxu0 %v1842
    %v3855 = vpop.f32.mrb[0].mxu0
    %v3856 = vadd.f32 0.0, %v3855
    %v3857 = vpop.f32.mrb[0].mxu0
    %v3858 = vpop.f32.mrb[0].mxu0
    %v3859 = vadd.f32 0.0, %v3858
    %v3860 = vpop.f32.mrb[0].mxu0
    %3861 = vmatprep.mubr.bf16.mxu0 0
    %3862 = vmatmul.mubr.bf16.gmra.mrb[0].mxu0 %v1845
    %v3863 = vpop.f32.mrb[0].mxu0
    %v3864 = vadd.f32 0.0, %v3863
    %v3865 = vpop.f32.mrb[0].mxu0
    %v3866 = vpop.f32.mrb[0].mxu0
    %v3867 = vadd.f32 0.0, %v3866
    %v3868 = vpop.f32.mrb[0].mxu0
    %3869 = vmatprep.mubr.bf16.mxu0 0
    %3870 = vmatmul.mubr.bf16.gmra.mrb[0].mxu0 %v1848
    %v3871 = vpop.f32.mrb[0].mxu0
    %v3872 = vadd.f32 0.0, %v3871
    %v3873 = vpop.f32.mrb[0].mxu0
    %v3874 = vpop.f32.mrb[0].mxu0
    %v3875 = vadd.f32 0.0, %v3874
    %v3876 = vpop.f32.mrb[0].mxu0
    %3877 = vmatprep.mubr.bf16.mxu0 0
    %3878 = vmatmul.mubr.bf16.gmra.mrb[0].mxu0 %v1851
    %v3879 = vpop.f32.mrb[0].mxu0
    %v3880 = vadd.f32 0.0, %v3879
    %v3881 = vpop.f32.mrb[0].mxu0
    %v3882 = vpop.f32.mrb[0].mxu0
    %v3883 = vadd.f32 0.0, %v3882
    %v3884 = vpop.f32.mrb[0].mxu0
    %3885 = vmatprep.mubr.bf16.mxu0 0
    %3886 = vmatmul.mubr.bf16.gmra.mrb[0].mxu0 %v3728
    %v3887 = vpop.f32.mrb[0].mxu0
    %v3888 = vadd.f32 0.0, %v3887
    %v3889 = vpop.f32.mrb[0].mxu0
    %v3890 = vpop.f32.mrb[0].mxu0
    %v3891 = vadd.f32 0.0, %v3890
    %v3892 = vpop.f32.mrb[0].mxu0
    %3893 = vmatprep.mubr.bf16.mxu0 0
    %3894 = vmatmul.mubr.bf16.gmra.mrb[0].mxu0 %v1857
    %v3895 = vpop.f32.mrb[0].mxu0
    %v3896 = vadd.f32 0.0, %v3895
    %v3897 = vpop.f32.mrb[0].mxu0
    %v3898 = vpop.f32.mrb[0].mxu0
    %v3899 = vadd.f32 0.0, %v3898
    %v3900 = vpop.f32.mrb[0].mxu0
    %3901 = vmatprep.mubr.bf16.mxu0 0
    %3902 = vmatmul.mubr.bf16.gmra.mrb[0].mxu0 %v1860
    %v3903 = vpop.f32.mrb[0].mxu0
    %v3904 = vadd.f32 0.0, %v3903
    %v3905 = vpop.f32.mrb[0].mxu0
    %v3906 = vpop.f32.mrb[0].mxu0
    %v3907 = vadd.f32 0.0, %v3906
    %v3908 = vpop.f32.mrb[0].mxu0
    %3909 = vmatprep.mubr.bf16.mxu0 0
    %3910 = vmatmul.mubr.bf16.gmra.mrb[0].mxu0 %v1863
    %v3911 = vpop.f32.mrb[0].mxu0
    %v3912 = vadd.f32 0.0, %v3911
    %v3913 = vpop.f32.mrb[0].mxu0
    %v3914 = vpop.f32.mrb[0].mxu0
    %v3915 = vadd.f32 0.0, %v3914
    %v3916 = vpop.f32.mrb[0].mxu0
    %3917 = vmatprep.mubr.bf16.mxu0 0
    %3918 = vmatmul.mubr.bf16.gmra.mrb[0].mxu0 %v1866
    %v3919 = vpop.f32.mrb[0].mxu0
    %v3920 = vadd.f32 0.0, %v3919
    %v3921 = vpop.f32.mrb[0].mxu0
    %v3922 = vpop.f32.mrb[0].mxu0
    %v3923 = vadd.f32 0.0, %v3922
    %v3924 = vpop.f32.mrb[0].mxu0
    %3925 = vmatprep.mubr.bf16.mxu0 0
    %3926 = vmatmul.mubr.bf16.gmra.mrb[0].mxu0 %v1869
    %v3927 = vpop.f32.mrb[0].mxu0
    %v3928 = vadd.f32 0.0, %v3927
    %v3929 = vpop.f32.mrb[0].mxu0
    %v3930 = vpop.f32.mrb[0].mxu0
    %v3931 = vadd.f32 0.0, %v3930
    %v3932 = vpop.f32.mrb[0].mxu0
    %3933 = vmatprep.mubr.bf16.mxu0 0
    %3934 = vmatmul.mubr.bf16.gmra.mrb[0].mxu0 %v1872
    %v3935 = vpop.f32.mrb[0].mxu0
    %v3936 = vadd.f32 0.0, %v3935
    %v3937 = vpop.f32.mrb[0].mxu0
    %v3938 = vpop.f32.mrb[0].mxu0
    %v3939 = vadd.f32 0.0, %v3938
    %v3940 = vpop.f32.mrb[0].mxu0
    %3941 = vmatprep.mubr.bf16.mxu0 0
    %3942 = vmatmul.mubr.bf16.gmra.mrb[0].mxu0 %v1875
    %v3943 = vpop.f32.mrb[0].mxu0
    %v3944 = vadd.f32 0.0, %v3943
    %v3945 = vpop.f32.mrb[0].mxu0
    %v3946 = vpop.f32.mrb[0].mxu0
    %v3947 = vadd.f32 0.0, %v3946
    %v3948 = vpop.f32.mrb[0].mxu0
    %3949 = vmatprep.mubr.bf16.mxu0 0
    %3950 = vmatmul.mubr.bf16.gmra.mrb[0].mxu0 %v1878
    %v3951 = vpop.f32.mrb[0].mxu0
    %v3952 = vadd.f32 0.0, %v3951
    %v3953 = vpop.f32.mrb[0].mxu0
    %v3954 = vpop.f32.mrb[0].mxu0
    %v3955 = vadd.f32 0.0, %v3954
    %v3956 = vpop.f32.mrb[0].mxu0
    %3957 = vmatprep.mubr.bf16.mxu0 0
    %3958 = vmatmul.mubr.bf16.gmra.mrb[0].mxu0 %v1881
    %v3959 = vpop.f32.mrb[0].mxu0
    %v3960 = vadd.f32 0.0, %v3959
    %v3961 = vpop.f32.mrb[0].mxu0
    %v3962 = vpop.f32.mrb[0].mxu0
    %v3963 = vadd.f32 0.0, %v3962
    %v3964 = vpop.f32.mrb[0].mxu0
    %3965 = vmatprep.mubr.bf16.mxu0 0
    %3966 = vmatmul.mubr.bf16.gmra.mrb[0].mxu0 %v1884
    %v3967 = vpop.f32.mrb[0].mxu0
    %v3968 = vadd.f32 0.0, %v3967
    %v3969 = vpop.f32.mrb[0].mxu0
    %v3970 = vpop.f32.mrb[0].mxu0
    %v3971 = vadd.f32 0.0, %v3970
    %v3972 = vpop.f32.mrb[0].mxu0
    %3973 = vmatprep.mubr.bf16.mxu0 0
    %3974 = vmatmul.mubr.bf16.gmra.mrb[0].mxu0 %v1887
    %v3975 = vpop.f32.mrb[0].mxu0
    %v3976 = vadd.f32 0.0, %v3975
    %v3977 = vpop.f32.mrb[0].mxu0
    %v3978 = vpop.f32.mrb[0].mxu0
    %v3979 = vadd.f32 0.0, %v3978
    %v3980 = vpop.f32.mrb[0].mxu0
    %3981 = vmatprep.mubr.bf16.mxu0 0
    %3982 = vmatmul.mubr.bf16.gmra.mrb[0].mxu0 %v1890
    %v3983 = vpop.f32.mrb[0].mxu0
    %v3984 = vadd.f32 0.0, %v3983
    %v3985 = vpop.f32.mrb[0].mxu0
    %v3986 = vpop.f32.mrb[0].mxu0
    %v3987 = vadd.f32 0.0, %v3986
    %v3988 = vpop.f32.mrb[0].mxu0
    %3989 = vmatprep.mubr.bf16.mxu0 0
    %3990 = vmatmul.mubr.bf16.gmra.mrb[0].mxu0 %v1893
    %v3991 = vpop.f32.mrb[0].mxu0
    %v3992 = vadd.f32 0.0, %v3991
    %v3993 = vpop.f32.mrb[0].mxu0
    %v3994 = vpop.f32.mrb[0].mxu0
    %v3995 = vadd.f32 0.0, %v3994
    %v3996 = vpop.f32.mrb[0].mxu0
    %3997 = vmatprep.mubr.bf16.mxu0 0
    %3998 = vmatmul.mubr.bf16.gmra.mrb[0].mxu0 %v1896
    %v3999 = vpop.f32.mrb[0].mxu0
    %v4000 = vadd.f32 0.0, %v3999
    %v4001 = vpop.f32.mrb[0].mxu0
    %v4002 = vpop.f32.mrb[0].mxu0
    %v4003 = vadd.f32 0.0, %v4002
    %v4004 = vpop.f32.mrb[0].mxu0
    %4005 = vmatprep.mubr.bf16.mxu0 0
    %4006 = vmatmul.mubr.bf16.gmra.mrb[0].mxu0 %v1899
    %v4007 = vpop.f32.mrb[0].mxu0
    %v4008 = vadd.f32 0.0, %v4007
    %v4009 = vpop.f32.mrb[0].mxu0
    %v4010 = vpop.f32.mrb[0].mxu0
    %v4011 = vadd.f32 0.0, %v4010
    %v4012 = vpop.f32.mrb[0].mxu0
    %4013 = vmatprep.mubr.bf16.mxu0 0
    %4014 = vmatmul.mubr.bf16.gmra.mrb[0].mxu0 %v3731
    %v4015 = vpop.f32.mrb[0].mxu0
    %v4016 = vadd.f32 0.0, %v4015
    %v4017 = vpop.f32.mrb[0].mxu0
    %v4018 = vpop.f32.mrb[0].mxu0
    %v4019 = vadd.f32 0.0, %v4018
    %v4020 = vpop.f32.mrb[0].mxu0
    %4021 = vdwg.mxu0
    %v4022 = vadd.f32 %v3624, %v3768
    %v4023 = vadd.f32 %v3625, %v3771
    %v4024 = vadd.f32 %v3626, %v3776
    %v4025 = vadd.f32 %v3627, %v3779
    %v4026 = vadd.f32 %v3628, %v3784
    %v4027 = vadd.f32 %v3629, %v3787
    %v4028 = vadd.f32 %v3630, %v3792
    %v4029 = vadd.f32 %v3631, %v3795
    %v4030 = vadd.f32 %v3632, %v3800
    %v4031 = vadd.f32 %v3633, %v3803
    %v4032 = vadd.f32 %v3634, %v3808
    %v4033 = vadd.f32 %v3635, %v3811
    %v4034 = vadd.f32 %v3636, %v3816
    %v4035 = vadd.f32 %v3637, %v3819
    %v4036 = vadd.f32 %v3638, %v3824
    %v4037 = vadd.f32 %v3639, %v3827
    %v4038 = vadd.f32 %v3640, %v3832
    %v4039 = vadd.f32 %v3641, %v3835
    %v4040 = vadd.f32 %v3642, %v3840
    %v4041 = vadd.f32 %v3643, %v3843
    %v4042 = vadd.f32 %v3644, %v3848
    %v4043 = vadd.f32 %v3645, %v3851
    %v4044 = vadd.f32 %v3646, %v3856
    %v4045 = vadd.f32 %v3647, %v3859
    %v4046 = vadd.f32 %v3648, %v3864
    %v4047 = vadd.f32 %v3649, %v3867
    %v4048 = vadd.f32 %v3650, %v3872
    %v4049 = vadd.f32 %v3651, %v3875
    %v4050 = vadd.f32 %v3652, %v3880
    %v4051 = vadd.f32 %v3653, %v3883
    %v4052 = vadd.f32 %v3654, %v3888
    %v4053 = vadd.f32 %v3655, %v3891
    %v4054 = vadd.f32 %v3656, %v3896
    %v4055 = vadd.f32 %v3657, %v3899
    %v4056 = vadd.f32 %v3658, %v3904
    %v4057 = vadd.f32 %v3659, %v3907
    %v4058 = vadd.f32 %v3660, %v3912
    %v4059 = vadd.f32 %v3661, %v3915
    %v4060 = vadd.f32 %v3662, %v3920
    %v4061 = vadd.f32 %v3663, %v3923
    %v4062 = vadd.f32 %v3664, %v3928
    %v4063 = vadd.f32 %v3665, %v3931
    %v4064 = vadd.f32 %v3666, %v3936
    %v4065 = vadd.f32 %v3667, %v3939
    %v4066 = vadd.f32 %v3668, %v3944
    %v4067 = vadd.f32 %v3669, %v3947
    %v4068 = vadd.f32 %v3670, %v3952
    %v4069 = vadd.f32 %v3671, %v3955
    %v4070 = vadd.f32 %v3672, %v3960
    %v4071 = vadd.f32 %v3673, %v3963
    %v4072 = vadd.f32 %v3674, %v3968
    %v4073 = vadd.f32 %v3675, %v3971
    %v4074 = vadd.f32 %v3676, %v3976
    %v4075 = vadd.f32 %v3677, %v3979
    %v4076 = vadd.f32 %v3678, %v3984
    %v4077 = vadd.f32 %v3679, %v3987
    %v4078 = vadd.f32 %v3680, %v3992
    %v4079 = vadd.f32 %v3681, %v3995
    %v4080 = vadd.f32 %v3682, %v4000
    %v4081 = vadd.f32 %v3683, %v4003
    %v4082 = vadd.f32 %v3684, %v4008
    %v4083 = vadd.f32 %v3685, %v4011
    %v4084 = vadd.f32 %v3686, %v4016
    %v4085 = vadd.f32 %v3687, %v4019
    %v4086 = vrot.slane %v1339, 2
    %v4087 = vrot.slane %v1340, 2
    %v4088 = vsel %vm2587, %v4086, %v4087
    %v4089 = vrot.slane %v1341, 2
    %v4090 = vsel %vm2587, %v4087, %v4089
    %v4091 = vrot.slane %v1393, 2
    %v4092 = vrot.slane %v1394, 2
    %v4093 = vsel %vm2587, %v4091, %v4092
    %v4094 = vrot.slane %v1395, 2
    %v4095 = vsel %vm2587, %v4092, %v4094
    %v4100 = vpack.c.bf16 %v4090, %v4088
    %v4101 = vpack.c.bf16 %v4095, %v4093
    %s4102 = scalar_lea.vmem [#allocation6], 80
    %v4103 = vld [vmem:[%s4102] sm:$0xf]
    %v4104 = vld [vmem:[%s4102 + $0x4] sm:$0xf]
    %v4105 = vld [vmem:[%s4102 + $0x8] sm:$0xf]
    %v4106 = vld [vmem:[%s4102 + $0xc] sm:$0xf]
    %v4111 = vunpack.c.l.b16 %v4103
    %v4112 = vunpack.c.l.b16 %v4104
    %v4113 = vunpack.c.l.b16 %v4105
    %v4114 = vunpack.c.l.b16 %v4106
    %v4115 = vpack.c.b16 %v4112, %v4111
    %v4116 = vpack.c.b16 %v4114, %v4113
    %v4120 = vsel %vm572, %v4100, 0
    %v4123 = vsel %vm572, %v4101, 0
    %4125 = vmatprep.subr.bf16.mxu0 0
    %4126 = vmatpush1.bf16.msra.mxu0 %v4115
    %4127 = vmatprep.subr.bf16.mxu0 0
    %4128 = vmatpush1.bf16.msra.mxu0 %v4116
    %4129 = vmatprep.subr.bf16.mxu0 0
    %4130 = vmatpush1.bf16.msra.mxu0 0
    %4131 = vmatprep.subr.bf16.mxu0 0
    %4132 = vmatpush1.bf16.msra.mxu0 0
    %4133 = vmatprep.subr.bf16.mxu0 0
    %4134 = vmatpush1.bf16.msra.mxu0 0
    %4135 = vmatprep.subr.bf16.mxu0 0
    %4136 = vmatpush1.bf16.msra.mxu0 0
    %4137 = vmatprep.subr.bf16.mxu0 0
    %4138 = vmatpush1.bf16.msra.mxu0 0
    %4139 = vmatprep.subr.bf16.mxu0 0
    %4140 = vmatpush1.bf16.msra.mxu0 0
    %4141 = vmatprep.subr.bf16.mxu0 0
    %4142 = vmatpush1.bf16.msra.mxu0 0
    %4143 = vmatprep.subr.bf16.mxu0 0
    %4144 = vmatpush1.bf16.msra.mxu0 0
    %4145 = vmatprep.subr.bf16.mxu0 0
    %4146 = vmatpush1.bf16.msra.mxu0 0
    %4147 = vmatprep.subr.bf16.mxu0 0
    %4148 = vmatpush1.bf16.msra.mxu0 0
    %4149 = vmatprep.subr.bf16.mxu0 0
    %4150 = vmatpush1.bf16.msra.mxu0 0
    %4151 = vmatprep.subr.bf16.mxu0 0
    %4152 = vmatpush1.bf16.msra.mxu0 0
    %4153 = vmatprep.subr.bf16.mxu0 0
    %4154 = vmatpush1.bf16.msra.mxu0 0
    %4155 = vmatprep.subr.bf16.mxu0 0
    %4156 = vmatpush1.bf16.msra.mxu0 0
    %4157 = vmatprep.mubr.bf16.mxu0 0
    %4158 = vmatmul.mubr.bf16.gmra.mrb[0].mxu0 %v2865
    %v4159 = vpop.f32.mrb[0].mxu0
    %v4160 = vadd.f32 0.0, %v4159
    %v4161 = vpop.f32.mrb[0].mxu0
    %v4162 = vpop.f32.mrb[0].mxu0
    %v4163 = vadd.f32 0.0, %v4162
    %v4164 = vpop.f32.mrb[0].mxu0
    %4165 = vmatprep.mubr.bf16.mxu0 0
    %4166 = vmatmul.mubr.bf16.gmra.mrb[0].mxu0 %v2868
    %v4167 = vpop.f32.mrb[0].mxu0
    %v4168 = vadd.f32 0.0, %v4167
    %v4169 = vpop.f32.mrb[0].mxu0
    %v4170 = vpop.f32.mrb[0].mxu0
    %v4171 = vadd.f32 0.0, %v4170
    %v4172 = vpop.f32.mrb[0].mxu0
    %4173 = vmatprep.mubr.bf16.mxu0 0
    %4174 = vmatmul.mubr.bf16.gmra.mrb[0].mxu0 %v2871
    %v4175 = vpop.f32.mrb[0].mxu0
    %v4176 = vadd.f32 0.0, %v4175
    %v4177 = vpop.f32.mrb[0].mxu0
    %v4178 = vpop.f32.mrb[0].mxu0
    %v4179 = vadd.f32 0.0, %v4178
    %v4180 = vpop.f32.mrb[0].mxu0
    %4181 = vmatprep.mubr.bf16.mxu0 0
    %4182 = vmatmul.mubr.bf16.gmra.mrb[0].mxu0 %v2874
    %v4183 = vpop.f32.mrb[0].mxu0
    %v4184 = vadd.f32 0.0, %v4183
    %v4185 = vpop.f32.mrb[0].mxu0
    %v4186 = vpop.f32.mrb[0].mxu0
    %v4187 = vadd.f32 0.0, %v4186
    %v4188 = vpop.f32.mrb[0].mxu0
    %4189 = vmatprep.mubr.bf16.mxu0 0
    %4190 = vmatmul.mubr.bf16.gmra.mrb[0].mxu0 %v2877
    %v4191 = vpop.f32.mrb[0].mxu0
    %v4192 = vadd.f32 0.0, %v4191
    %v4193 = vpop.f32.mrb[0].mxu0
    %v4194 = vpop.f32.mrb[0].mxu0
    %v4195 = vadd.f32 0.0, %v4194
    %v4196 = vpop.f32.mrb[0].mxu0
    %4197 = vmatprep.mubr.bf16.mxu0 0
    %4198 = vmatmul.mubr.bf16.gmra.mrb[0].mxu0 %v2880
    %v4199 = vpop.f32.mrb[0].mxu0
    %v4200 = vadd.f32 0.0, %v4199
    %v4201 = vpop.f32.mrb[0].mxu0
    %v4202 = vpop.f32.mrb[0].mxu0
    %v4203 = vadd.f32 0.0, %v4202
    %v4204 = vpop.f32.mrb[0].mxu0
    %4205 = vmatprep.mubr.bf16.mxu0 0
    %4206 = vmatmul.mubr.bf16.gmra.mrb[0].mxu0 %v2883
    %v4207 = vpop.f32.mrb[0].mxu0
    %v4208 = vadd.f32 0.0, %v4207
    %v4209 = vpop.f32.mrb[0].mxu0
    %v4210 = vpop.f32.mrb[0].mxu0
    %v4211 = vadd.f32 0.0, %v4210
    %v4212 = vpop.f32.mrb[0].mxu0
    %4213 = vmatprep.mubr.bf16.mxu0 0
    %4214 = vmatmul.mubr.bf16.gmra.mrb[0].mxu0 %v2886
    %v4215 = vpop.f32.mrb[0].mxu0
    %v4216 = vadd.f32 0.0, %v4215
    %v4217 = vpop.f32.mrb[0].mxu0
    %v4218 = vpop.f32.mrb[0].mxu0
    %v4219 = vadd.f32 0.0, %v4218
    %v4220 = vpop.f32.mrb[0].mxu0
    %4221 = vmatprep.mubr.bf16.mxu0 0
    %4222 = vmatmul.mubr.bf16.gmra.mrb[0].mxu0 %v2889
    %v4223 = vpop.f32.mrb[0].mxu0
    %v4224 = vadd.f32 0.0, %v4223
    %v4225 = vpop.f32.mrb[0].mxu0
    %v4226 = vpop.f32.mrb[0].mxu0
    %v4227 = vadd.f32 0.0, %v4226
    %v4228 = vpop.f32.mrb[0].mxu0
    %4229 = vmatprep.mubr.bf16.mxu0 0
    %4230 = vmatmul.mubr.bf16.gmra.mrb[0].mxu0 %v2892
    %v4231 = vpop.f32.mrb[0].mxu0
    %v4232 = vadd.f32 0.0, %v4231
    %v4233 = vpop.f32.mrb[0].mxu0
    %v4234 = vpop.f32.mrb[0].mxu0
    %v4235 = vadd.f32 0.0, %v4234
    %v4236 = vpop.f32.mrb[0].mxu0
    %4237 = vmatprep.mubr.bf16.mxu0 0
    %4238 = vmatmul.mubr.bf16.gmra.mrb[0].mxu0 %v2895
    %v4239 = vpop.f32.mrb[0].mxu0
    %v4240 = vadd.f32 0.0, %v4239
    %v4241 = vpop.f32.mrb[0].mxu0
    %v4242 = vpop.f32.mrb[0].mxu0
    %v4243 = vadd.f32 0.0, %v4242
    %v4244 = vpop.f32.mrb[0].mxu0
    %4245 = vmatprep.mubr.bf16.mxu0 0
    %4246 = vmatmul.mubr.bf16.gmra.mrb[0].mxu0 %v2898
    %v4247 = vpop.f32.mrb[0].mxu0
    %v4248 = vadd.f32 0.0, %v4247
    %v4249 = vpop.f32.mrb[0].mxu0
    %v4250 = vpop.f32.mrb[0].mxu0
    %v4251 = vadd.f32 0.0, %v4250
    %v4252 = vpop.f32.mrb[0].mxu0
    %4253 = vmatprep.mubr.bf16.mxu0 0
    %4254 = vmatmul.mubr.bf16.gmra.mrb[0].mxu0 %v2901
    %v4255 = vpop.f32.mrb[0].mxu0
    %v4256 = vadd.f32 0.0, %v4255
    %v4257 = vpop.f32.mrb[0].mxu0
    %v4258 = vpop.f32.mrb[0].mxu0
    %v4259 = vadd.f32 0.0, %v4258
    %v4260 = vpop.f32.mrb[0].mxu0
    %4261 = vmatprep.mubr.bf16.mxu0 0
    %4262 = vmatmul.mubr.bf16.gmra.mrb[0].mxu0 %v2904
    %v4263 = vpop.f32.mrb[0].mxu0
    %v4264 = vadd.f32 0.0, %v4263
    %v4265 = vpop.f32.mrb[0].mxu0
    %v4266 = vpop.f32.mrb[0].mxu0
    %v4267 = vadd.f32 0.0, %v4266
    %v4268 = vpop.f32.mrb[0].mxu0
    %4269 = vmatprep.mubr.bf16.mxu0 0
    %4270 = vmatmul.mubr.bf16.gmra.mrb[0].mxu0 %v2907
    %v4271 = vpop.f32.mrb[0].mxu0
    %v4272 = vadd.f32 0.0, %v4271
    %v4273 = vpop.f32.mrb[0].mxu0
    %v4274 = vpop.f32.mrb[0].mxu0
    %v4275 = vadd.f32 0.0, %v4274
    %v4276 = vpop.f32.mrb[0].mxu0
    %4277 = vmatprep.mubr.bf16.mxu0 0
    %4278 = vmatmul.mubr.bf16.gmra.mrb[0].mxu0 %v4120
    %v4279 = vpop.f32.mrb[0].mxu0
    %v4280 = vadd.f32 0.0, %v4279
    %v4281 = vpop.f32.mrb[0].mxu0
    %v4282 = vpop.f32.mrb[0].mxu0
    %v4283 = vadd.f32 0.0, %v4282
    %v4284 = vpop.f32.mrb[0].mxu0
    %4285 = vmatprep.mubr.bf16.mxu0 0
    %4286 = vmatmul.mubr.bf16.gmra.mrb[0].mxu0 %v2913
    %v4287 = vpop.f32.mrb[0].mxu0
    %v4288 = vadd.f32 0.0, %v4287
    %v4289 = vpop.f32.mrb[0].mxu0
    %v4290 = vpop.f32.mrb[0].mxu0
    %v4291 = vadd.f32 0.0, %v4290
    %v4292 = vpop.f32.mrb[0].mxu0
    %4293 = vmatprep.mubr.bf16.mxu0 0
    %4294 = vmatmul.mubr.bf16.gmra.mrb[0].mxu0 %v2916
    %v4295 = vpop.f32.mrb[0].mxu0
    %v4296 = vadd.f32 0.0, %v4295
    %v4297 = vpop.f32.mrb[0].mxu0
    %v4298 = vpop.f32.mrb[0].mxu0
    %v4299 = vadd.f32 0.0, %v4298
    %v4300 = vpop.f32.mrb[0].mxu0
    %4301 = vmatprep.mubr.bf16.mxu0 0
    %4302 = vmatmul.mubr.bf16.gmra.mrb[0].mxu0 %v2919
    %v4303 = vpop.f32.mrb[0].mxu0
    %v4304 = vadd.f32 0.0, %v4303
    %v4305 = vpop.f32.mrb[0].mxu0
    %v4306 = vpop.f32.mrb[0].mxu0
    %v4307 = vadd.f32 0.0, %v4306
    %v4308 = vpop.f32.mrb[0].mxu0
    %4309 = vmatprep.mubr.bf16.mxu0 0
    %4310 = vmatmul.mubr.bf16.gmra.mrb[0].mxu0 %v2922
    %v4311 = vpop.f32.mrb[0].mxu0
    %v4312 = vadd.f32 0.0, %v4311
    %v4313 = vpop.f32.mrb[0].mxu0
    %v4314 = vpop.f32.mrb[0].mxu0
    %v4315 = vadd.f32 0.0, %v4314
    %v4316 = vpop.f32.mrb[0].mxu0
    %4317 = vmatprep.mubr.bf16.mxu0 0
    %4318 = vmatmul.mubr.bf16.gmra.mrb[0].mxu0 %v2925
    %v4319 = vpop.f32.mrb[0].mxu0
    %v4320 = vadd.f32 0.0, %v4319
    %v4321 = vpop.f32.mrb[0].mxu0
    %v4322 = vpop.f32.mrb[0].mxu0
    %v4323 = vadd.f32 0.0, %v4322
    %v4324 = vpop.f32.mrb[0].mxu0
    %4325 = vmatprep.mubr.bf16.mxu0 0
    %4326 = vmatmul.mubr.bf16.gmra.mrb[0].mxu0 %v2928
    %v4327 = vpop.f32.mrb[0].mxu0
    %v4328 = vadd.f32 0.0, %v4327
    %v4329 = vpop.f32.mrb[0].mxu0
    %v4330 = vpop.f32.mrb[0].mxu0
    %v4331 = vadd.f32 0.0, %v4330
    %v4332 = vpop.f32.mrb[0].mxu0
    %4333 = vmatprep.mubr.bf16.mxu0 0
    %4334 = vmatmul.mubr.bf16.gmra.mrb[0].mxu0 %v2931
    %v4335 = vpop.f32.mrb[0].mxu0
    %v4336 = vadd.f32 0.0, %v4335
    %v4337 = vpop.f32.mrb[0].mxu0
    %v4338 = vpop.f32.mrb[0].mxu0
    %v4339 = vadd.f32 0.0, %v4338
    %v4340 = vpop.f32.mrb[0].mxu0
    %4341 = vmatprep.mubr.bf16.mxu0 0
    %4342 = vmatmul.mubr.bf16.gmra.mrb[0].mxu0 %v2934
    %v4343 = vpop.f32.mrb[0].mxu0
    %v4344 = vadd.f32 0.0, %v4343
    %v4345 = vpop.f32.mrb[0].mxu0
    %v4346 = vpop.f32.mrb[0].mxu0
    %v4347 = vadd.f32 0.0, %v4346
    %v4348 = vpop.f32.mrb[0].mxu0
    %4349 = vmatprep.mubr.bf16.mxu0 0
    %4350 = vmatmul.mubr.bf16.gmra.mrb[0].mxu0 %v2937
    %v4351 = vpop.f32.mrb[0].mxu0
    %v4352 = vadd.f32 0.0, %v4351
    %v4353 = vpop.f32.mrb[0].mxu0
    %v4354 = vpop.f32.mrb[0].mxu0
    %v4355 = vadd.f32 0.0, %v4354
    %v4356 = vpop.f32.mrb[0].mxu0
    %4357 = vmatprep.mubr.bf16.mxu0 0
    %4358 = vmatmul.mubr.bf16.gmra.mrb[0].mxu0 %v2940
    %v4359 = vpop.f32.mrb[0].mxu0
    %v4360 = vadd.f32 0.0, %v4359
    %v4361 = vpop.f32.mrb[0].mxu0
    %v4362 = vpop.f32.mrb[0].mxu0
    %v4363 = vadd.f32 0.0, %v4362
    %v4364 = vpop.f32.mrb[0].mxu0
    %4365 = vmatprep.mubr.bf16.mxu0 0
    %4366 = vmatmul.mubr.bf16.gmra.mrb[0].mxu0 %v2943
    %v4367 = vpop.f32.mrb[0].mxu0
    %v4368 = vadd.f32 0.0, %v4367
    %v4369 = vpop.f32.mrb[0].mxu0
    %v4370 = vpop.f32.mrb[0].mxu0
    %v4371 = vadd.f32 0.0, %v4370
    %v4372 = vpop.f32.mrb[0].mxu0
    %4373 = vmatprep.mubr.bf16.mxu0 0
    %4374 = vmatmul.mubr.bf16.gmra.mrb[0].mxu0 %v2946
    %v4375 = vpop.f32.mrb[0].mxu0
    %v4376 = vadd.f32 0.0, %v4375
    %v4377 = vpop.f32.mrb[0].mxu0
    %v4378 = vpop.f32.mrb[0].mxu0
    %v4379 = vadd.f32 0.0, %v4378
    %v4380 = vpop.f32.mrb[0].mxu0
    %4381 = vmatprep.mubr.bf16.mxu0 0
    %4382 = vmatmul.mubr.bf16.gmra.mrb[0].mxu0 %v2949
    %v4383 = vpop.f32.mrb[0].mxu0
    %v4384 = vadd.f32 0.0, %v4383
    %v4385 = vpop.f32.mrb[0].mxu0
    %v4386 = vpop.f32.mrb[0].mxu0
    %v4387 = vadd.f32 0.0, %v4386
    %v4388 = vpop.f32.mrb[0].mxu0
    %4389 = vmatprep.mubr.bf16.mxu0 0
    %4390 = vmatmul.mubr.bf16.gmra.mrb[0].mxu0 %v2952
    %v4391 = vpop.f32.mrb[0].mxu0
    %v4392 = vadd.f32 0.0, %v4391
    %v4393 = vpop.f32.mrb[0].mxu0
    %v4394 = vpop.f32.mrb[0].mxu0
    %v4395 = vadd.f32 0.0, %v4394
    %v4396 = vpop.f32.mrb[0].mxu0
    %4397 = vmatprep.mubr.bf16.mxu0 0
    %4398 = vmatmul.mubr.bf16.gmra.mrb[0].mxu0 %v2955
    %v4399 = vpop.f32.mrb[0].mxu0
    %v4400 = vadd.f32 0.0, %v4399
    %v4401 = vpop.f32.mrb[0].mxu0
    %v4402 = vpop.f32.mrb[0].mxu0
    %v4403 = vadd.f32 0.0, %v4402
    %v4404 = vpop.f32.mrb[0].mxu0
    %4405 = vmatprep.mubr.bf16.mxu0 0
    %4406 = vmatmul.mubr.bf16.gmra.mrb[0].mxu0 %v4123
    %v4407 = vpop.f32.mrb[0].mxu0
    %v4408 = vadd.f32 0.0, %v4407
    %v4409 = vpop.f32.mrb[0].mxu0
    %v4410 = vpop.f32.mrb[0].mxu0
    %v4411 = vadd.f32 0.0, %v4410
    %v4412 = vpop.f32.mrb[0].mxu0
    %4413 = vdwg.mxu0
    %v4414 = vadd.f32 %v4022, %v4160
    %v4415 = vadd.f32 %v4023, %v4163
    %v4416 = vadd.f32 %v4024, %v4168
    %v4417 = vadd.f32 %v4025, %v4171
    %v4418 = vadd.f32 %v4026, %v4176
    %v4419 = vadd.f32 %v4027, %v4179
    %v4420 = vadd.f32 %v4028, %v4184
    %v4421 = vadd.f32 %v4029, %v4187
    %v4422 = vadd.f32 %v4030, %v4192
    %v4423 = vadd.f32 %v4031, %v4195
    %v4424 = vadd.f32 %v4032, %v4200
    %v4425 = vadd.f32 %v4033, %v4203
    %v4426 = vadd.f32 %v4034, %v4208
    %v4427 = vadd.f32 %v4035, %v4211
    %v4428 = vadd.f32 %v4036, %v4216
    %v4429 = vadd.f32 %v4037, %v4219
    %v4430 = vadd.f32 %v4038, %v4224
    %v4431 = vadd.f32 %v4039, %v4227
    %v4432 = vadd.f32 %v4040, %v4232
    %v4433 = vadd.f32 %v4041, %v4235
    %v4434 = vadd.f32 %v4042, %v4240
    %v4435 = vadd.f32 %v4043, %v4243
    %v4436 = vadd.f32 %v4044, %v4248
    %v4437 = vadd.f32 %v4045, %v4251
    %v4438 = vadd.f32 %v4046, %v4256
    %v4439 = vadd.f32 %v4047, %v4259
    %v4440 = vadd.f32 %v4048, %v4264
    %v4441 = vadd.f32 %v4049, %v4267
    %v4442 = vadd.f32 %v4050, %v4272
    %v4443 = vadd.f32 %v4051, %v4275
    %v4444 = vadd.f32 %v4052, %v4280
    %v4445 = vadd.f32 %v4053, %v4283
    %v4446 = vadd.f32 %v4054, %v4288
    %v4447 = vadd.f32 %v4055, %v4291
    %v4448 = vadd.f32 %v4056, %v4296
    %v4449 = vadd.f32 %v4057, %v4299
    %v4450 = vadd.f32 %v4058, %v4304
    %v4451 = vadd.f32 %v4059, %v4307
    %v4452 = vadd.f32 %v4060, %v4312
    %v4453 = vadd.f32 %v4061, %v4315
    %v4454 = vadd.f32 %v4062, %v4320
    %v4455 = vadd.f32 %v4063, %v4323
    %v4456 = vadd.f32 %v4064, %v4328
    %v4457 = vadd.f32 %v4065, %v4331
    %v4458 = vadd.f32 %v4066, %v4336
    %v4459 = vadd.f32 %v4067, %v4339
    %v4460 = vadd.f32 %v4068, %v4344
    %v4461 = vadd.f32 %v4069, %v4347
    %v4462 = vadd.f32 %v4070, %v4352
    %v4463 = vadd.f32 %v4071, %v4355
    %v4464 = vadd.f32 %v4072, %v4360
    %v4465 = vadd.f32 %v4073, %v4363
    %v4466 = vadd.f32 %v4074, %v4368
    %v4467 = vadd.f32 %v4075, %v4371
    %v4468 = vadd.f32 %v4076, %v4376
    %v4469 = vadd.f32 %v4077, %v4379
    %v4470 = vadd.f32 %v4078, %v4384
    %v4471 = vadd.f32 %v4079, %v4387
    %v4472 = vadd.f32 %v4080, %v4392
    %v4473 = vadd.f32 %v4081, %v4395
    %v4474 = vadd.f32 %v4082, %v4400
    %v4475 = vadd.f32 %v4083, %v4403
    %v4476 = vadd.f32 %v4084, %v4408
    %v4477 = vadd.f32 %v4085, %v4411
    %v4478 = vpack.c.bf16 %v1343, %v1342
    %v4479 = vpack.c.bf16 %v1397, %v1396
    %s4480 = scalar_lea.vmem [#allocation6], 96
    %v4481 = vld [vmem:[%s4480] sm:$0xf]
    %v4482 = vld [vmem:[%s4480 + $0x4] sm:$0xf]
    %v4483 = vld [vmem:[%s4480 + $0x8] sm:$0xf]
    %v4484 = vld [vmem:[%s4480 + $0xc] sm:$0xf]
    %v4489 = vunpack.c.l.b16 %v4481
    %v4490 = vunpack.c.l.b16 %v4482
    %v4491 = vunpack.c.l.b16 %v4483
    %v4492 = vunpack.c.l.b16 %v4484
    %v4493 = vpack.c.b16 %v4490, %v4489
    %v4494 = vpack.c.b16 %v4492, %v4491
    %v4498 = vsel %vm572, %v4478, 0
    %v4501 = vsel %vm572, %v4479, 0
    %4503 = vmatprep.subr.bf16.mxu0 0
    %4504 = vmatpush1.bf16.msra.mxu0 %v4493
    %4505 = vmatprep.subr.bf16.mxu0 0
    %4506 = vmatpush1.bf16.msra.mxu0 %v4494
    %4507 = vmatprep.subr.bf16.mxu0 0
    %4508 = vmatpush1.bf16.msra.mxu0 0
    %4509 = vmatprep.subr.bf16.mxu0 0
    %4510 = vmatpush1.bf16.msra.mxu0 0
    %4511 = vmatprep.subr.bf16.mxu0 0
    %4512 = vmatpush1.bf16.msra.mxu0 0
    %4513 = vmatprep.subr.bf16.mxu0 0
    %4514 = vmatpush1.bf16.msra.mxu0 0
    %4515 = vmatprep.subr.bf16.mxu0 0
    %4516 = vmatpush1.bf16.msra.mxu0 0
    %4517 = vmatprep.subr.bf16.mxu0 0
    %4518 = vmatpush1.bf16.msra.mxu0 0
    %4519 = vmatprep.subr.bf16.mxu0 0
    %4520 = vmatpush1.bf16.msra.mxu0 0
    %4521 = vmatprep.subr.bf16.mxu0 0
    %4522 = vmatpush1.bf16.msra.mxu0 0
    %4523 = vmatprep.subr.bf16.mxu0 0
    %4524 = vmatpush1.bf16.msra.mxu0 0
    %4525 = vmatprep.subr.bf16.mxu0 0
    %4526 = vmatpush1.bf16.msra.mxu0 0
    %4527 = vmatprep.subr.bf16.mxu0 0
    %4528 = vmatpush1.bf16.msra.mxu0 0
    %4529 = vmatprep.subr.bf16.mxu0 0
    %4530 = vmatpush1.bf16.msra.mxu0 0
    %4531 = vmatprep.subr.bf16.mxu0 0
    %4532 = vmatpush1.bf16.msra.mxu0 0
    %4533 = vmatprep.subr.bf16.mxu0 0
    %4534 = vmatpush1.bf16.msra.mxu0 0
    %4535 = vmatprep.mubr.bf16.mxu0 0
    %4536 = vmatmul.mubr.bf16.gmra.mrb[0].mxu0 %v2209
    %v4537 = vpop.f32.mrb[0].mxu0
    %v4538 = vadd.f32 0.0, %v4537
    %v4539 = vpop.f32.mrb[0].mxu0
    %v4540 = vpop.f32.mrb[0].mxu0
    %v4541 = vadd.f32 0.0, %v4540
    %v4542 = vpop.f32.mrb[0].mxu0
    %4543 = vmatprep.mubr.bf16.mxu0 0
    %4544 = vmatmul.mubr.bf16.gmra.mrb[0].mxu0 %v2212
    %v4545 = vpop.f32.mrb[0].mxu0
    %v4546 = vadd.f32 0.0, %v4545
    %v4547 = vpop.f32.mrb[0].mxu0
    %v4548 = vpop.f32.mrb[0].mxu0
    %v4549 = vadd.f32 0.0, %v4548
    %v4550 = vpop.f32.mrb[0].mxu0
    %4551 = vmatprep.mubr.bf16.mxu0 0
    %4552 = vmatmul.mubr.bf16.gmra.mrb[0].mxu0 %v2215
    %v4553 = vpop.f32.mrb[0].mxu0
    %v4554 = vadd.f32 0.0, %v4553
    %v4555 = vpop.f32.mrb[0].mxu0
    %v4556 = vpop.f32.mrb[0].mxu0
    %v4557 = vadd.f32 0.0, %v4556
    %v4558 = vpop.f32.mrb[0].mxu0
    %4559 = vmatprep.mubr.bf16.mxu0 0
    %4560 = vmatmul.mubr.bf16.gmra.mrb[0].mxu0 %v2218
    %v4561 = vpop.f32.mrb[0].mxu0
    %v4562 = vadd.f32 0.0, %v4561
    %v4563 = vpop.f32.mrb[0].mxu0
    %v4564 = vpop.f32.mrb[0].mxu0
    %v4565 = vadd.f32 0.0, %v4564
    %v4566 = vpop.f32.mrb[0].mxu0
    %4567 = vmatprep.mubr.bf16.mxu0 0
    %4568 = vmatmul.mubr.bf16.gmra.mrb[0].mxu0 %v2221
    %v4569 = vpop.f32.mrb[0].mxu0
    %v4570 = vadd.f32 0.0, %v4569
    %v4571 = vpop.f32.mrb[0].mxu0
    %v4572 = vpop.f32.mrb[0].mxu0
    %v4573 = vadd.f32 0.0, %v4572
    %v4574 = vpop.f32.mrb[0].mxu0
    %4575 = vmatprep.mubr.bf16.mxu0 0
    %4576 = vmatmul.mubr.bf16.gmra.mrb[0].mxu0 %v2224
    %v4577 = vpop.f32.mrb[0].mxu0
    %v4578 = vadd.f32 0.0, %v4577
    %v4579 = vpop.f32.mrb[0].mxu0
    %v4580 = vpop.f32.mrb[0].mxu0
    %v4581 = vadd.f32 0.0, %v4580
    %v4582 = vpop.f32.mrb[0].mxu0
    %4583 = vmatprep.mubr.bf16.mxu0 0
    %4584 = vmatmul.mubr.bf16.gmra.mrb[0].mxu0 %v2227
    %v4585 = vpop.f32.mrb[0].mxu0
    %v4586 = vadd.f32 0.0, %v4585
    %v4587 = vpop.f32.mrb[0].mxu0
    %v4588 = vpop.f32.mrb[0].mxu0
    %v4589 = vadd.f32 0.0, %v4588
    %v4590 = vpop.f32.mrb[0].mxu0
    %4591 = vmatprep.mubr.bf16.mxu0 0
    %4592 = vmatmul.mubr.bf16.gmra.mrb[0].mxu0 %v2230
    %v4593 = vpop.f32.mrb[0].mxu0
    %v4594 = vadd.f32 0.0, %v4593
    %v4595 = vpop.f32.mrb[0].mxu0
    %v4596 = vpop.f32.mrb[0].mxu0
    %v4597 = vadd.f32 0.0, %v4596
    %v4598 = vpop.f32.mrb[0].mxu0
    %4599 = vmatprep.mubr.bf16.mxu0 0
    %4600 = vmatmul.mubr.bf16.gmra.mrb[0].mxu0 %v2233
    %v4601 = vpop.f32.mrb[0].mxu0
    %v4602 = vadd.f32 0.0, %v4601
    %v4603 = vpop.f32.mrb[0].mxu0
    %v4604 = vpop.f32.mrb[0].mxu0
    %v4605 = vadd.f32 0.0, %v4604
    %v4606 = vpop.f32.mrb[0].mxu0
    %4607 = vmatprep.mubr.bf16.mxu0 0
    %4608 = vmatmul.mubr.bf16.gmra.mrb[0].mxu0 %v2236
    %v4609 = vpop.f32.mrb[0].mxu0
    %v4610 = vadd.f32 0.0, %v4609
    %v4611 = vpop.f32.mrb[0].mxu0
    %v4612 = vpop.f32.mrb[0].mxu0
    %v4613 = vadd.f32 0.0, %v4612
    %v4614 = vpop.f32.mrb[0].mxu0
    %4615 = vmatprep.mubr.bf16.mxu0 0
    %4616 = vmatmul.mubr.bf16.gmra.mrb[0].mxu0 %v2239
    %v4617 = vpop.f32.mrb[0].mxu0
    %v4618 = vadd.f32 0.0, %v4617
    %v4619 = vpop.f32.mrb[0].mxu0
    %v4620 = vpop.f32.mrb[0].mxu0
    %v4621 = vadd.f32 0.0, %v4620
    %v4622 = vpop.f32.mrb[0].mxu0
    %4623 = vmatprep.mubr.bf16.mxu0 0
    %4624 = vmatmul.mubr.bf16.gmra.mrb[0].mxu0 %v2242
    %v4625 = vpop.f32.mrb[0].mxu0
    %v4626 = vadd.f32 0.0, %v4625
    %v4627 = vpop.f32.mrb[0].mxu0
    %v4628 = vpop.f32.mrb[0].mxu0
    %v4629 = vadd.f32 0.0, %v4628
    %v4630 = vpop.f32.mrb[0].mxu0
    %4631 = vmatprep.mubr.bf16.mxu0 0
    %4632 = vmatmul.mubr.bf16.gmra.mrb[0].mxu0 %v2245
    %v4633 = vpop.f32.mrb[0].mxu0
    %v4634 = vadd.f32 0.0, %v4633
    %v4635 = vpop.f32.mrb[0].mxu0
    %v4636 = vpop.f32.mrb[0].mxu0
    %v4637 = vadd.f32 0.0, %v4636
    %v4638 = vpop.f32.mrb[0].mxu0
    %4639 = vmatprep.mubr.bf16.mxu0 0
    %4640 = vmatmul.mubr.bf16.gmra.mrb[0].mxu0 %v2248
    %v4641 = vpop.f32.mrb[0].mxu0
    %v4642 = vadd.f32 0.0, %v4641
    %v4643 = vpop.f32.mrb[0].mxu0
    %v4644 = vpop.f32.mrb[0].mxu0
    %v4645 = vadd.f32 0.0, %v4644
    %v4646 = vpop.f32.mrb[0].mxu0
    %4647 = vmatprep.mubr.bf16.mxu0 0
    %4648 = vmatmul.mubr.bf16.gmra.mrb[0].mxu0 %v3330
    %v4649 = vpop.f32.mrb[0].mxu0
    %v4650 = vadd.f32 0.0, %v4649
    %v4651 = vpop.f32.mrb[0].mxu0
    %v4652 = vpop.f32.mrb[0].mxu0
    %v4653 = vadd.f32 0.0, %v4652
    %v4654 = vpop.f32.mrb[0].mxu0
    %4655 = vmatprep.mubr.bf16.mxu0 0
    %4656 = vmatmul.mubr.bf16.gmra.mrb[0].mxu0 %v4498
    %v4657 = vpop.f32.mrb[0].mxu0
    %v4658 = vadd.f32 0.0, %v4657
    %v4659 = vpop.f32.mrb[0].mxu0
    %v4660 = vpop.f32.mrb[0].mxu0
    %v4661 = vadd.f32 0.0, %v4660
    %v4662 = vpop.f32.mrb[0].mxu0
    %4663 = vmatprep.mubr.bf16.mxu0 0
    %4664 = vmatmul.mubr.bf16.gmra.mrb[0].mxu0 %v2257
    %v4665 = vpop.f32.mrb[0].mxu0
    %v4666 = vadd.f32 0.0, %v4665
    %v4667 = vpop.f32.mrb[0].mxu0
    %v4668 = vpop.f32.mrb[0].mxu0
    %v4669 = vadd.f32 0.0, %v4668
    %v4670 = vpop.f32.mrb[0].mxu0
    %4671 = vmatprep.mubr.bf16.mxu0 0
    %4672 = vmatmul.mubr.bf16.gmra.mrb[0].mxu0 %v2260
    %v4673 = vpop.f32.mrb[0].mxu0
    %v4674 = vadd.f32 0.0, %v4673
    %v4675 = vpop.f32.mrb[0].mxu0
    %v4676 = vpop.f32.mrb[0].mxu0
    %v4677 = vadd.f32 0.0, %v4676
    %v4678 = vpop.f32.mrb[0].mxu0
    %4679 = vmatprep.mubr.bf16.mxu0 0
    %4680 = vmatmul.mubr.bf16.gmra.mrb[0].mxu0 %v2263
    %v4681 = vpop.f32.mrb[0].mxu0
    %v4682 = vadd.f32 0.0, %v4681
    %v4683 = vpop.f32.mrb[0].mxu0
    %v4684 = vpop.f32.mrb[0].mxu0
    %v4685 = vadd.f32 0.0, %v4684
    %v4686 = vpop.f32.mrb[0].mxu0
    %4687 = vmatprep.mubr.bf16.mxu0 0
    %4688 = vmatmul.mubr.bf16.gmra.mrb[0].mxu0 %v2266
    %v4689 = vpop.f32.mrb[0].mxu0
    %v4690 = vadd.f32 0.0, %v4689
    %v4691 = vpop.f32.mrb[0].mxu0
    %v4692 = vpop.f32.mrb[0].mxu0
    %v4693 = vadd.f32 0.0, %v4692
    %v4694 = vpop.f32.mrb[0].mxu0
    %4695 = vmatprep.mubr.bf16.mxu0 0
    %4696 = vmatmul.mubr.bf16.gmra.mrb[0].mxu0 %v2269
    %v4697 = vpop.f32.mrb[0].mxu0
    %v4698 = vadd.f32 0.0, %v4697
    %v4699 = vpop.f32.mrb[0].mxu0
    %v4700 = vpop.f32.mrb[0].mxu0
    %v4701 = vadd.f32 0.0, %v4700
    %v4702 = vpop.f32.mrb[0].mxu0
    %4703 = vmatprep.mubr.bf16.mxu0 0
    %4704 = vmatmul.mubr.bf16.gmra.mrb[0].mxu0 %v2272
    %v4705 = vpop.f32.mrb[0].mxu0
    %v4706 = vadd.f32 0.0, %v4705
    %v4707 = vpop.f32.mrb[0].mxu0
    %v4708 = vpop.f32.mrb[0].mxu0
    %v4709 = vadd.f32 0.0, %v4708
    %v4710 = vpop.f32.mrb[0].mxu0
    %4711 = vmatprep.mubr.bf16.mxu0 0
    %4712 = vmatmul.mubr.bf16.gmra.mrb[0].mxu0 %v2275
    %v4713 = vpop.f32.mrb[0].mxu0
    %v4714 = vadd.f32 0.0, %v4713
    %v4715 = vpop.f32.mrb[0].mxu0
    %v4716 = vpop.f32.mrb[0].mxu0
    %v4717 = vadd.f32 0.0, %v4716
    %v4718 = vpop.f32.mrb[0].mxu0
    %4719 = vmatprep.mubr.bf16.mxu0 0
    %4720 = vmatmul.mubr.bf16.gmra.mrb[0].mxu0 %v2278
    %v4721 = vpop.f32.mrb[0].mxu0
    %v4722 = vadd.f32 0.0, %v4721
    %v4723 = vpop.f32.mrb[0].mxu0
    %v4724 = vpop.f32.mrb[0].mxu0
    %v4725 = vadd.f32 0.0, %v4724
    %v4726 = vpop.f32.mrb[0].mxu0
    %4727 = vmatprep.mubr.bf16.mxu0 0
    %4728 = vmatmul.mubr.bf16.gmra.mrb[0].mxu0 %v2281
    %v4729 = vpop.f32.mrb[0].mxu0
    %v4730 = vadd.f32 0.0, %v4729
    %v4731 = vpop.f32.mrb[0].mxu0
    %v4732 = vpop.f32.mrb[0].mxu0
    %v4733 = vadd.f32 0.0, %v4732
    %v4734 = vpop.f32.mrb[0].mxu0
    %4735 = vmatprep.mubr.bf16.mxu0 0
    %4736 = vmatmul.mubr.bf16.gmra.mrb[0].mxu0 %v2284
    %v4737 = vpop.f32.mrb[0].mxu0
    %v4738 = vadd.f32 0.0, %v4737
    %v4739 = vpop.f32.mrb[0].mxu0
    %v4740 = vpop.f32.mrb[0].mxu0
    %v4741 = vadd.f32 0.0, %v4740
    %v4742 = vpop.f32.mrb[0].mxu0
    %4743 = vmatprep.mubr.bf16.mxu0 0
    %4744 = vmatmul.mubr.bf16.gmra.mrb[0].mxu0 %v2287
    %v4745 = vpop.f32.mrb[0].mxu0
    %v4746 = vadd.f32 0.0, %v4745
    %v4747 = vpop.f32.mrb[0].mxu0
    %v4748 = vpop.f32.mrb[0].mxu0
    %v4749 = vadd.f32 0.0, %v4748
    %v4750 = vpop.f32.mrb[0].mxu0
    %4751 = vmatprep.mubr.bf16.mxu0 0
    %4752 = vmatmul.mubr.bf16.gmra.mrb[0].mxu0 %v2290
    %v4753 = vpop.f32.mrb[0].mxu0
    %v4754 = vadd.f32 0.0, %v4753
    %v4755 = vpop.f32.mrb[0].mxu0
    %v4756 = vpop.f32.mrb[0].mxu0
    %v4757 = vadd.f32 0.0, %v4756
    %v4758 = vpop.f32.mrb[0].mxu0
    %4759 = vmatprep.mubr.bf16.mxu0 0
    %4760 = vmatmul.mubr.bf16.gmra.mrb[0].mxu0 %v2293
    %v4761 = vpop.f32.mrb[0].mxu0
    %v4762 = vadd.f32 0.0, %v4761
    %v4763 = vpop.f32.mrb[0].mxu0
    %v4764 = vpop.f32.mrb[0].mxu0
    %v4765 = vadd.f32 0.0, %v4764
    %v4766 = vpop.f32.mrb[0].mxu0
    %4767 = vmatprep.mubr.bf16.mxu0 0
    %4768 = vmatmul.mubr.bf16.gmra.mrb[0].mxu0 %v2296
    %v4769 = vpop.f32.mrb[0].mxu0
    %v4770 = vadd.f32 0.0, %v4769
    %v4771 = vpop.f32.mrb[0].mxu0
    %v4772 = vpop.f32.mrb[0].mxu0
    %v4773 = vadd.f32 0.0, %v4772
    %v4774 = vpop.f32.mrb[0].mxu0
    %4775 = vmatprep.mubr.bf16.mxu0 0
    %4776 = vmatmul.mubr.bf16.gmra.mrb[0].mxu0 %v3333
    %v4777 = vpop.f32.mrb[0].mxu0
    %v4778 = vadd.f32 0.0, %v4777
    %v4779 = vpop.f32.mrb[0].mxu0
    %v4780 = vpop.f32.mrb[0].mxu0
    %v4781 = vadd.f32 0.0, %v4780
    %v4782 = vpop.f32.mrb[0].mxu0
    %4783 = vmatprep.mubr.bf16.mxu0 0
    %4784 = vmatmul.mubr.bf16.gmra.mrb[0].mxu0 %v4501
    %v4785 = vpop.f32.mrb[0].mxu0
    %v4786 = vadd.f32 0.0, %v4785
    %v4787 = vpop.f32.mrb[0].mxu0
    %v4788 = vpop.f32.mrb[0].mxu0
    %v4789 = vadd.f32 0.0, %v4788
    %v4790 = vpop.f32.mrb[0].mxu0
    %4791 = vdwg.mxu0
    %v4792 = vadd.f32 %v4414, %v4538
    %v4793 = vadd.f32 %v4415, %v4541
    %v4794 = vadd.f32 %v4416, %v4546
    %v4795 = vadd.f32 %v4417, %v4549
    %v4796 = vadd.f32 %v4418, %v4554
    %v4797 = vadd.f32 %v4419, %v4557
    %v4798 = vadd.f32 %v4420, %v4562
    %v4799 = vadd.f32 %v4421, %v4565
    %v4800 = vadd.f32 %v4422, %v4570
    %v4801 = vadd.f32 %v4423, %v4573
    %v4802 = vadd.f32 %v4424, %v4578
    %v4803 = vadd.f32 %v4425, %v4581
    %v4804 = vadd.f32 %v4426, %v4586
    %v4805 = vadd.f32 %v4427, %v4589
    %v4806 = vadd.f32 %v4428, %v4594
    %v4807 = vadd.f32 %v4429, %v4597
    %v4808 = vadd.f32 %v4430, %v4602
    %v4809 = vadd.f32 %v4431, %v4605
    %v4810 = vadd.f32 %v4432, %v4610
    %v4811 = vadd.f32 %v4433, %v4613
    %v4812 = vadd.f32 %v4434, %v4618
    %v4813 = vadd.f32 %v4435, %v4621
    %v4814 = vadd.f32 %v4436, %v4626
    %v4815 = vadd.f32 %v4437, %v4629
    %v4816 = vadd.f32 %v4438, %v4634
    %v4817 = vadd.f32 %v4439, %v4637
    %v4818 = vadd.f32 %v4440, %v4642
    %v4819 = vadd.f32 %v4441, %v4645
    %v4820 = vadd.f32 %v4442, %v4650
    %v4821 = vadd.f32 %v4443, %v4653
    %v4822 = vadd.f32 %v4444, %v4658
    %v4823 = vadd.f32 %v4445, %v4661
    %v4824 = vadd.f32 %v4446, %v4666
    %v4825 = vadd.f32 %v4447, %v4669
    %v4826 = vadd.f32 %v4448, %v4674
    %v4827 = vadd.f32 %v4449, %v4677
    %v4828 = vadd.f32 %v4450, %v4682
    %v4829 = vadd.f32 %v4451, %v4685
    %v4830 = vadd.f32 %v4452, %v4690
    %v4831 = vadd.f32 %v4453, %v4693
    %v4832 = vadd.f32 %v4454, %v4698
    %v4833 = vadd.f32 %v4455, %v4701
    %v4834 = vadd.f32 %v4456, %v4706
    %v4835 = vadd.f32 %v4457, %v4709
    %v4836 = vadd.f32 %v4458, %v4714
    %v4837 = vadd.f32 %v4459, %v4717
    %v4838 = vadd.f32 %v4460, %v4722
    %v4839 = vadd.f32 %v4461, %v4725
    %v4840 = vadd.f32 %v4462, %v4730
    %v4841 = vadd.f32 %v4463, %v4733
    %v4842 = vadd.f32 %v4464, %v4738
    %v4843 = vadd.f32 %v4465, %v4741
    %v4844 = vadd.f32 %v4466, %v4746
    %v4845 = vadd.f32 %v4467, %v4749
    %v4846 = vadd.f32 %v4468, %v4754
    %v4847 = vadd.f32 %v4469, %v4757
    %v4848 = vadd.f32 %v4470, %v4762
    %v4849 = vadd.f32 %v4471, %v4765
    %v4850 = vadd.f32 %v4472, %v4770
    %v4851 = vadd.f32 %v4473, %v4773
    %v4852 = vadd.f32 %v4474, %v4778
    %v4853 = vadd.f32 %v4475, %v4781
    %v4854 = vadd.f32 %v4476, %v4786
    %v4855 = vadd.f32 %v4477, %v4789
    %v4862 = vrot.slane %v1342, 1
    %v4863 = vrot.slane %v1343, 1
    %v4864 = vsel %vm1531, %v4862, %v4863
    %v4865 = vrot.slane %v1344, 1
    %v4866 = vsel %vm1531, %v4863, %v4865
    %v4867 = vrot.slane %v1396, 1
    %v4868 = vrot.slane %v1397, 1
    %v4869 = vsel %vm1531, %v4867, %v4868
    %v4870 = vrot.slane %v1398, 1
    %v4871 = vsel %vm1531, %v4868, %v4870
    %v4876 = vpack.c.bf16 %v4866, %v4864
    %v4877 = vpack.c.bf16 %v4871, %v4869
    %s4878 = scalar_lea.vmem [#allocation6], 112
    %v4879 = vld [vmem:[%s4878] sm:$0xf]
    %v4880 = vld [vmem:[%s4878 + $0x4] sm:$0xf]
    %v4881 = vld [vmem:[%s4878 + $0x8] sm:$0xf]
    %v4882 = vld [vmem:[%s4878 + $0xc] sm:$0xf]
    %v4887 = vunpack.c.l.b16 %v4879
    %v4888 = vunpack.c.l.b16 %v4880
    %v4889 = vunpack.c.l.b16 %v4881
    %v4890 = vunpack.c.l.b16 %v4882
    %v4891 = vpack.c.b16 %v4888, %v4887
    %v4892 = vpack.c.b16 %v4890, %v4889
    %v4896 = vsel %vm572, %v4876, 0
    %v4899 = vsel %vm572, %v4877, 0
    %4901 = vmatprep.subr.bf16.mxu0 0
    %4902 = vmatpush1.bf16.msra.mxu0 %v4891
    %4903 = vmatprep.subr.bf16.mxu0 0
    %4904 = vmatpush1.bf16.msra.mxu0 %v4892
    %4905 = vmatprep.subr.bf16.mxu0 0
    %4906 = vmatpush1.bf16.msra.mxu0 0
    %4907 = vmatprep.subr.bf16.mxu0 0
    %4908 = vmatpush1.bf16.msra.mxu0 0
    %4909 = vmatprep.subr.bf16.mxu0 0
    %4910 = vmatpush1.bf16.msra.mxu0 0
    %4911 = vmatprep.subr.bf16.mxu0 0
    %4912 = vmatpush1.bf16.msra.mxu0 0
    %4913 = vmatprep.subr.bf16.mxu0 0
    %4914 = vmatpush1.bf16.msra.mxu0 0
    %4915 = vmatprep.subr.bf16.mxu0 0
    %4916 = vmatpush1.bf16.msra.mxu0 0
    %4917 = vmatprep.subr.bf16.mxu0 0
    %4918 = vmatpush1.bf16.msra.mxu0 0
    %4919 = vmatprep.subr.bf16.mxu0 0
    %4920 = vmatpush1.bf16.msra.mxu0 0
    %4921 = vmatprep.subr.bf16.mxu0 0
    %4922 = vmatpush1.bf16.msra.mxu0 0
    %4923 = vmatprep.subr.bf16.mxu0 0
    %4924 = vmatpush1.bf16.msra.mxu0 0
    %4925 = vmatprep.subr.bf16.mxu0 0
    %4926 = vmatpush1.bf16.msra.mxu0 0
    %4927 = vmatprep.subr.bf16.mxu0 0
    %4928 = vmatpush1.bf16.msra.mxu0 0
    %4929 = vmatprep.subr.bf16.mxu0 0
    %4930 = vmatpush1.bf16.msra.mxu0 0
    %4931 = vmatprep.subr.bf16.mxu0 0
    %4932 = vmatpush1.bf16.msra.mxu0 0
    %4933 = vmatprep.mubr.bf16.mxu0 0
    %4934 = vmatmul.mubr.bf16.gmra.mrb[0].mxu0 %v1812
    %v4935 = vpop.f32.mrb[0].mxu0
    %v4936 = vadd.f32 0.0, %v4935
    %v4937 = vpop.f32.mrb[0].mxu0
    %v4938 = vpop.f32.mrb[0].mxu0
    %v4939 = vadd.f32 0.0, %v4938
    %v4940 = vpop.f32.mrb[0].mxu0
    %4941 = vmatprep.mubr.bf16.mxu0 0
    %4942 = vmatmul.mubr.bf16.gmra.mrb[0].mxu0 %v1815
    %v4943 = vpop.f32.mrb[0].mxu0
    %v4944 = vadd.f32 0.0, %v4943
    %v4945 = vpop.f32.mrb[0].mxu0
    %v4946 = vpop.f32.mrb[0].mxu0
    %v4947 = vadd.f32 0.0, %v4946
    %v4948 = vpop.f32.mrb[0].mxu0
    %4949 = vmatprep.mubr.bf16.mxu0 0
    %4950 = vmatmul.mubr.bf16.gmra.mrb[0].mxu0 %v1818
    %v4951 = vpop.f32.mrb[0].mxu0
    %v4952 = vadd.f32 0.0, %v4951
    %v4953 = vpop.f32.mrb[0].mxu0
    %v4954 = vpop.f32.mrb[0].mxu0
    %v4955 = vadd.f32 0.0, %v4954
    %v4956 = vpop.f32.mrb[0].mxu0
    %4957 = vmatprep.mubr.bf16.mxu0 0
    %4958 = vmatmul.mubr.bf16.gmra.mrb[0].mxu0 %v1821
    %v4959 = vpop.f32.mrb[0].mxu0
    %v4960 = vadd.f32 0.0, %v4959
    %v4961 = vpop.f32.mrb[0].mxu0
    %v4962 = vpop.f32.mrb[0].mxu0
    %v4963 = vadd.f32 0.0, %v4962
    %v4964 = vpop.f32.mrb[0].mxu0
    %4965 = vmatprep.mubr.bf16.mxu0 0
    %4966 = vmatmul.mubr.bf16.gmra.mrb[0].mxu0 %v1824
    %v4967 = vpop.f32.mrb[0].mxu0
    %v4968 = vadd.f32 0.0, %v4967
    %v4969 = vpop.f32.mrb[0].mxu0
    %v4970 = vpop.f32.mrb[0].mxu0
    %v4971 = vadd.f32 0.0, %v4970
    %v4972 = vpop.f32.mrb[0].mxu0
    %4973 = vmatprep.mubr.bf16.mxu0 0
    %4974 = vmatmul.mubr.bf16.gmra.mrb[0].mxu0 %v1827
    %v4975 = vpop.f32.mrb[0].mxu0
    %v4976 = vadd.f32 0.0, %v4975
    %v4977 = vpop.f32.mrb[0].mxu0
    %v4978 = vpop.f32.mrb[0].mxu0
    %v4979 = vadd.f32 0.0, %v4978
    %v4980 = vpop.f32.mrb[0].mxu0
    %4981 = vmatprep.mubr.bf16.mxu0 0
    %4982 = vmatmul.mubr.bf16.gmra.mrb[0].mxu0 %v1830
    %v4983 = vpop.f32.mrb[0].mxu0
    %v4984 = vadd.f32 0.0, %v4983
    %v4985 = vpop.f32.mrb[0].mxu0
    %v4986 = vpop.f32.mrb[0].mxu0
    %v4987 = vadd.f32 0.0, %v4986
    %v4988 = vpop.f32.mrb[0].mxu0
    %4989 = vmatprep.mubr.bf16.mxu0 0
    %4990 = vmatmul.mubr.bf16.gmra.mrb[0].mxu0 %v1833
    %v4991 = vpop.f32.mrb[0].mxu0
    %v4992 = vadd.f32 0.0, %v4991
    %v4993 = vpop.f32.mrb[0].mxu0
    %v4994 = vpop.f32.mrb[0].mxu0
    %v4995 = vadd.f32 0.0, %v4994
    %v4996 = vpop.f32.mrb[0].mxu0
    %4997 = vmatprep.mubr.bf16.mxu0 0
    %4998 = vmatmul.mubr.bf16.gmra.mrb[0].mxu0 %v1836
    %v4999 = vpop.f32.mrb[0].mxu0
    %v5000 = vadd.f32 0.0, %v4999
    %v5001 = vpop.f32.mrb[0].mxu0
    %v5002 = vpop.f32.mrb[0].mxu0
    %v5003 = vadd.f32 0.0, %v5002
    %v5004 = vpop.f32.mrb[0].mxu0
    %5005 = vmatprep.mubr.bf16.mxu0 0
    %5006 = vmatmul.mubr.bf16.gmra.mrb[0].mxu0 %v1839
    %v5007 = vpop.f32.mrb[0].mxu0
    %v5008 = vadd.f32 0.0, %v5007
    %v5009 = vpop.f32.mrb[0].mxu0
    %v5010 = vpop.f32.mrb[0].mxu0
    %v5011 = vadd.f32 0.0, %v5010
    %v5012 = vpop.f32.mrb[0].mxu0
    %5013 = vmatprep.mubr.bf16.mxu0 0
    %5014 = vmatmul.mubr.bf16.gmra.mrb[0].mxu0 %v1842
    %v5015 = vpop.f32.mrb[0].mxu0
    %v5016 = vadd.f32 0.0, %v5015
    %v5017 = vpop.f32.mrb[0].mxu0
    %v5018 = vpop.f32.mrb[0].mxu0
    %v5019 = vadd.f32 0.0, %v5018
    %v5020 = vpop.f32.mrb[0].mxu0
    %5021 = vmatprep.mubr.bf16.mxu0 0
    %5022 = vmatmul.mubr.bf16.gmra.mrb[0].mxu0 %v1845
    %v5023 = vpop.f32.mrb[0].mxu0
    %v5024 = vadd.f32 0.0, %v5023
    %v5025 = vpop.f32.mrb[0].mxu0
    %v5026 = vpop.f32.mrb[0].mxu0
    %v5027 = vadd.f32 0.0, %v5026
    %v5028 = vpop.f32.mrb[0].mxu0
    %5029 = vmatprep.mubr.bf16.mxu0 0
    %5030 = vmatmul.mubr.bf16.gmra.mrb[0].mxu0 %v1848
    %v5031 = vpop.f32.mrb[0].mxu0
    %v5032 = vadd.f32 0.0, %v5031
    %v5033 = vpop.f32.mrb[0].mxu0
    %v5034 = vpop.f32.mrb[0].mxu0
    %v5035 = vadd.f32 0.0, %v5034
    %v5036 = vpop.f32.mrb[0].mxu0
    %5037 = vmatprep.mubr.bf16.mxu0 0
    %5038 = vmatmul.mubr.bf16.gmra.mrb[0].mxu0 %v1851
    %v5039 = vpop.f32.mrb[0].mxu0
    %v5040 = vadd.f32 0.0, %v5039
    %v5041 = vpop.f32.mrb[0].mxu0
    %v5042 = vpop.f32.mrb[0].mxu0
    %v5043 = vadd.f32 0.0, %v5042
    %v5044 = vpop.f32.mrb[0].mxu0
    %5045 = vmatprep.mubr.bf16.mxu0 0
    %5046 = vmatmul.mubr.bf16.gmra.mrb[0].mxu0 %v3728
    %v5047 = vpop.f32.mrb[0].mxu0
    %v5048 = vadd.f32 0.0, %v5047
    %v5049 = vpop.f32.mrb[0].mxu0
    %v5050 = vpop.f32.mrb[0].mxu0
    %v5051 = vadd.f32 0.0, %v5050
    %v5052 = vpop.f32.mrb[0].mxu0
    %5053 = vmatprep.mubr.bf16.mxu0 0
    %5054 = vmatmul.mubr.bf16.gmra.mrb[0].mxu0 %v4896
    %v5055 = vpop.f32.mrb[0].mxu0
    %v5056 = vadd.f32 0.0, %v5055
    %v5057 = vpop.f32.mrb[0].mxu0
    %v5058 = vpop.f32.mrb[0].mxu0
    %v5059 = vadd.f32 0.0, %v5058
    %v5060 = vpop.f32.mrb[0].mxu0
    %5061 = vmatprep.mubr.bf16.mxu0 0
    %5062 = vmatmul.mubr.bf16.gmra.mrb[0].mxu0 %v1860
    %v5063 = vpop.f32.mrb[0].mxu0
    %v5064 = vadd.f32 0.0, %v5063
    %v5065 = vpop.f32.mrb[0].mxu0
    %v5066 = vpop.f32.mrb[0].mxu0
    %v5067 = vadd.f32 0.0, %v5066
    %v5068 = vpop.f32.mrb[0].mxu0
    %5069 = vmatprep.mubr.bf16.mxu0 0
    %5070 = vmatmul.mubr.bf16.gmra.mrb[0].mxu0 %v1863
    %v5071 = vpop.f32.mrb[0].mxu0
    %v5072 = vadd.f32 0.0, %v5071
    %v5073 = vpop.f32.mrb[0].mxu0
    %v5074 = vpop.f32.mrb[0].mxu0
    %v5075 = vadd.f32 0.0, %v5074
    %v5076 = vpop.f32.mrb[0].mxu0
    %5077 = vmatprep.mubr.bf16.mxu0 0
    %5078 = vmatmul.mubr.bf16.gmra.mrb[0].mxu0 %v1866
    %v5079 = vpop.f32.mrb[0].mxu0
    %v5080 = vadd.f32 0.0, %v5079
    %v5081 = vpop.f32.mrb[0].mxu0
    %v5082 = vpop.f32.mrb[0].mxu0
    %v5083 = vadd.f32 0.0, %v5082
    %v5084 = vpop.f32.mrb[0].mxu0
    %5085 = vmatprep.mubr.bf16.mxu0 0
    %5086 = vmatmul.mubr.bf16.gmra.mrb[0].mxu0 %v1869
    %v5087 = vpop.f32.mrb[0].mxu0
    %v5088 = vadd.f32 0.0, %v5087
    %v5089 = vpop.f32.mrb[0].mxu0
    %v5090 = vpop.f32.mrb[0].mxu0
    %v5091 = vadd.f32 0.0, %v5090
    %v5092 = vpop.f32.mrb[0].mxu0
    %5093 = vmatprep.mubr.bf16.mxu0 0
    %5094 = vmatmul.mubr.bf16.gmra.mrb[0].mxu0 %v1872
    %v5095 = vpop.f32.mrb[0].mxu0
    %v5096 = vadd.f32 0.0, %v5095
    %v5097 = vpop.f32.mrb[0].mxu0
    %v5098 = vpop.f32.mrb[0].mxu0
    %v5099 = vadd.f32 0.0, %v5098
    %v5100 = vpop.f32.mrb[0].mxu0
    %5101 = vmatprep.mubr.bf16.mxu0 0
    %5102 = vmatmul.mubr.bf16.gmra.mrb[0].mxu0 %v1875
    %v5103 = vpop.f32.mrb[0].mxu0
    %v5104 = vadd.f32 0.0, %v5103
    %v5105 = vpop.f32.mrb[0].mxu0
    %v5106 = vpop.f32.mrb[0].mxu0
    %v5107 = vadd.f32 0.0, %v5106
    %v5108 = vpop.f32.mrb[0].mxu0
    %5109 = vmatprep.mubr.bf16.mxu0 0
    %5110 = vmatmul.mubr.bf16.gmra.mrb[0].mxu0 %v1878
    %v5111 = vpop.f32.mrb[0].mxu0
    %v5112 = vadd.f32 0.0, %v5111
    %v5113 = vpop.f32.mrb[0].mxu0
    %v5114 = vpop.f32.mrb[0].mxu0
    %v5115 = vadd.f32 0.0, %v5114
    %v5116 = vpop.f32.mrb[0].mxu0
    %5117 = vmatprep.mubr.bf16.mxu0 0
    %5118 = vmatmul.mubr.bf16.gmra.mrb[0].mxu0 %v1881
    %v5119 = vpop.f32.mrb[0].mxu0
    %v5120 = vadd.f32 0.0, %v5119
    %v5121 = vpop.f32.mrb[0].mxu0
    %v5122 = vpop.f32.mrb[0].mxu0
    %v5123 = vadd.f32 0.0, %v5122
    %v5124 = vpop.f32.mrb[0].mxu0
    %5125 = vmatprep.mubr.bf16.mxu0 0
    %5126 = vmatmul.mubr.bf16.gmra.mrb[0].mxu0 %v1884
    %v5127 = vpop.f32.mrb[0].mxu0
    %v5128 = vadd.f32 0.0, %v5127
    %v5129 = vpop.f32.mrb[0].mxu0
    %v5130 = vpop.f32.mrb[0].mxu0
    %v5131 = vadd.f32 0.0, %v5130
    %v5132 = vpop.f32.mrb[0].mxu0
    %5133 = vmatprep.mubr.bf16.mxu0 0
    %5134 = vmatmul.mubr.bf16.gmra.mrb[0].mxu0 %v1887
    %v5135 = vpop.f32.mrb[0].mxu0
    %v5136 = vadd.f32 0.0, %v5135
    %v5137 = vpop.f32.mrb[0].mxu0
    %v5138 = vpop.f32.mrb[0].mxu0
    %v5139 = vadd.f32 0.0, %v5138
    %v5140 = vpop.f32.mrb[0].mxu0
    %5141 = vmatprep.mubr.bf16.mxu0 0
    %5142 = vmatmul.mubr.bf16.gmra.mrb[0].mxu0 %v1890
    %v5143 = vpop.f32.mrb[0].mxu0
    %v5144 = vadd.f32 0.0, %v5143
    %v5145 = vpop.f32.mrb[0].mxu0
    %v5146 = vpop.f32.mrb[0].mxu0
    %v5147 = vadd.f32 0.0, %v5146
    %v5148 = vpop.f32.mrb[0].mxu0
    %5149 = vmatprep.mubr.bf16.mxu0 0
    %5150 = vmatmul.mubr.bf16.gmra.mrb[0].mxu0 %v1893
    %v5151 = vpop.f32.mrb[0].mxu0
    %v5152 = vadd.f32 0.0, %v5151
    %v5153 = vpop.f32.mrb[0].mxu0
    %v5154 = vpop.f32.mrb[0].mxu0
    %v5155 = vadd.f32 0.0, %v5154
    %v5156 = vpop.f32.mrb[0].mxu0
    %5157 = vmatprep.mubr.bf16.mxu0 0
    %5158 = vmatmul.mubr.bf16.gmra.mrb[0].mxu0 %v1896
    %v5159 = vpop.f32.mrb[0].mxu0
    %v5160 = vadd.f32 0.0, %v5159
    %v5161 = vpop.f32.mrb[0].mxu0
    %v5162 = vpop.f32.mrb[0].mxu0
    %v5163 = vadd.f32 0.0, %v5162
    %v5164 = vpop.f32.mrb[0].mxu0
    %5165 = vmatprep.mubr.bf16.mxu0 0
    %5166 = vmatmul.mubr.bf16.gmra.mrb[0].mxu0 %v1899
    %v5167 = vpop.f32.mrb[0].mxu0
    %v5168 = vadd.f32 0.0, %v5167
    %v5169 = vpop.f32.mrb[0].mxu0
    %v5170 = vpop.f32.mrb[0].mxu0
    %v5171 = vadd.f32 0.0, %v5170
    %v5172 = vpop.f32.mrb[0].mxu0
    %5173 = vmatprep.mubr.bf16.mxu0 0
    %5174 = vmatmul.mubr.bf16.gmra.mrb[0].mxu0 %v3731
    %v5175 = vpop.f32.mrb[0].mxu0
    %v5176 = vadd.f32 0.0, %v5175
    %v5177 = vpop.f32.mrb[0].mxu0
    %v5178 = vpop.f32.mrb[0].mxu0
    %v5179 = vadd.f32 0.0, %v5178
    %v5180 = vpop.f32.mrb[0].mxu0
    %5181 = vmatprep.mubr.bf16.mxu0 0
    %5182 = vmatmul.mubr.bf16.gmra.mrb[0].mxu0 %v4899
    %v5183 = vpop.f32.mrb[0].mxu0
    %v5184 = vadd.f32 0.0, %v5183
    %v5185 = vpop.f32.mrb[0].mxu0
    %v5186 = vpop.f32.mrb[0].mxu0
    %v5187 = vadd.f32 0.0, %v5186
    %v5188 = vpop.f32.mrb[0].mxu0
    %5189 = vdwg.mxu0
    %v5190 = vadd.f32 %v4792, %v4936
    %v5191 = vadd.f32 %v4793, %v4939
    %v5192 = vadd.f32 %v4794, %v4944
    %v5193 = vadd.f32 %v4795, %v4947
    %v5194 = vadd.f32 %v4796, %v4952
    %v5195 = vadd.f32 %v4797, %v4955
    %v5196 = vadd.f32 %v4798, %v4960
    %v5197 = vadd.f32 %v4799, %v4963
    %v5198 = vadd.f32 %v4800, %v4968
    %v5199 = vadd.f32 %v4801, %v4971
    %v5200 = vadd.f32 %v4802, %v4976
    %v5201 = vadd.f32 %v4803, %v4979
    %v5202 = vadd.f32 %v4804, %v4984
    %v5203 = vadd.f32 %v4805, %v4987
    %v5204 = vadd.f32 %v4806, %v4992
    %v5205 = vadd.f32 %v4807, %v4995
    %v5206 = vadd.f32 %v4808, %v5000
    %v5207 = vadd.f32 %v4809, %v5003
    %v5208 = vadd.f32 %v4810, %v5008
    %v5209 = vadd.f32 %v4811, %v5011
    %v5210 = vadd.f32 %v4812, %v5016
    %v5211 = vadd.f32 %v4813, %v5019
    %v5212 = vadd.f32 %v4814, %v5024
    %v5213 = vadd.f32 %v4815, %v5027
    %v5214 = vadd.f32 %v4816, %v5032
    %v5215 = vadd.f32 %v4817, %v5035
    %v5216 = vadd.f32 %v4818, %v5040
    %v5217 = vadd.f32 %v4819, %v5043
    %v5218 = vadd.f32 %v4820, %v5048
    %v5219 = vadd.f32 %v4821, %v5051
    %v5220 = vadd.f32 %v4822, %v5056
    %v5221 = vadd.f32 %v4823, %v5059
    %v5222 = vadd.f32 %v4824, %v5064
    %v5223 = vadd.f32 %v4825, %v5067
    %v5224 = vadd.f32 %v4826, %v5072
    %v5225 = vadd.f32 %v4827, %v5075
    %v5226 = vadd.f32 %v4828, %v5080
    %v5227 = vadd.f32 %v4829, %v5083
    %v5228 = vadd.f32 %v4830, %v5088
    %v5229 = vadd.f32 %v4831, %v5091
    %v5230 = vadd.f32 %v4832, %v5096
    %v5231 = vadd.f32 %v4833, %v5099
    %v5232 = vadd.f32 %v4834, %v5104
    %v5233 = vadd.f32 %v4835, %v5107
    %v5234 = vadd.f32 %v4836, %v5112
    %v5235 = vadd.f32 %v4837, %v5115
    %v5236 = vadd.f32 %v4838, %v5120
    %v5237 = vadd.f32 %v4839, %v5123
    %v5238 = vadd.f32 %v4840, %v5128
    %v5239 = vadd.f32 %v4841, %v5131
    %v5240 = vadd.f32 %v4842, %v5136
    %v5241 = vadd.f32 %v4843, %v5139
    %v5242 = vadd.f32 %v4844, %v5144
    %v5243 = vadd.f32 %v4845, %v5147
    %v5244 = vadd.f32 %v4846, %v5152
    %v5245 = vadd.f32 %v4847, %v5155
    %v5246 = vadd.f32 %v4848, %v5160
    %v5247 = vadd.f32 %v4849, %v5163
    %v5248 = vadd.f32 %v4850, %v5168
    %v5249 = vadd.f32 %v4851, %v5171
    %v5250 = vadd.f32 %v4852, %v5176
    %v5251 = vadd.f32 %v4853, %v5179
    %v5252 = vadd.f32 %v4854, %v5184
    %v5253 = vadd.f32 %v4855, %v5187
    %v5254 = vrot.slane %v1342, 2
    %v5255 = vrot.slane %v1343, 2
    %v5256 = vsel %vm2587, %v5254, %v5255
    %v5257 = vrot.slane %v1344, 2
    %v5258 = vsel %vm2587, %v5255, %v5257
    %v5259 = vrot.slane %v1396, 2
    %v5260 = vrot.slane %v1397, 2
    %v5261 = vsel %vm2587, %v5259, %v5260
    %v5262 = vrot.slane %v1398, 2
    %v5263 = vsel %vm2587, %v5260, %v5262
    %v5268 = vpack.c.bf16 %v5258, %v5256
    %v5269 = vpack.c.bf16 %v5263, %v5261
    %s5270 = scalar_lea.vmem [#allocation6], 128
    %v5271 = vld [vmem:[%s5270] sm:$0xf]
    %v5272 = vld [vmem:[%s5270 + $0x4] sm:$0xf]
    %v5273 = vld [vmem:[%s5270 + $0x8] sm:$0xf]
    %v5274 = vld [vmem:[%s5270 + $0xc] sm:$0xf]
    %v5279 = vunpack.c.l.b16 %v5271
    %v5280 = vunpack.c.l.b16 %v5272
    %v5281 = vunpack.c.l.b16 %v5273
    %v5282 = vunpack.c.l.b16 %v5274
    %v5283 = vpack.c.b16 %v5280, %v5279
    %v5284 = vpack.c.b16 %v5282, %v5281
    %v5288 = vsel %vm572, %v5268, 0
    %v5291 = vsel %vm572, %v5269, 0
    %5293 = vmatprep.subr.bf16.mxu0 0
    %5294 = vmatpush1.bf16.msra.mxu0 %v5283
    %5295 = vmatprep.subr.bf16.mxu0 0
    %5296 = vmatpush1.bf16.msra.mxu0 %v5284
    %5297 = vmatprep.subr.bf16.mxu0 0
    %5298 = vmatpush1.bf16.msra.mxu0 0
    %5299 = vmatprep.subr.bf16.mxu0 0
    %5300 = vmatpush1.bf16.msra.mxu0 0
    %5301 = vmatprep.subr.bf16.mxu0 0
    %5302 = vmatpush1.bf16.msra.mxu0 0
    %5303 = vmatprep.subr.bf16.mxu0 0
    %5304 = vmatpush1.bf16.msra.mxu0 0
    %5305 = vmatprep.subr.bf16.mxu0 0
    %5306 = vmatpush1.bf16.msra.mxu0 0
    %5307 = vmatprep.subr.bf16.mxu0 0
    %5308 = vmatpush1.bf16.msra.mxu0 0
    %5309 = vmatprep.subr.bf16.mxu0 0
    %5310 = vmatpush1.bf16.msra.mxu0 0
    %5311 = vmatprep.subr.bf16.mxu0 0
    %5312 = vmatpush1.bf16.msra.mxu0 0
    %5313 = vmatprep.subr.bf16.mxu0 0
    %5314 = vmatpush1.bf16.msra.mxu0 0
    %5315 = vmatprep.subr.bf16.mxu0 0
    %5316 = vmatpush1.bf16.msra.mxu0 0
    %5317 = vmatprep.subr.bf16.mxu0 0
    %5318 = vmatpush1.bf16.msra.mxu0 0
    %5319 = vmatprep.subr.bf16.mxu0 0
    %5320 = vmatpush1.bf16.msra.mxu0 0
    %5321 = vmatprep.subr.bf16.mxu0 0
    %5322 = vmatpush1.bf16.msra.mxu0 0
    %5323 = vmatprep.subr.bf16.mxu0 0
    %5324 = vmatpush1.bf16.msra.mxu0 0
    %5325 = vmatprep.mubr.bf16.mxu0 0
    %5326 = vmatmul.mubr.bf16.gmra.mrb[0].mxu0 %v2868
    %v5327 = vpop.f32.mrb[0].mxu0
    %v5328 = vadd.f32 0.0, %v5327
    %v5329 = vpop.f32.mrb[0].mxu0
    %v5330 = vpop.f32.mrb[0].mxu0
    %v5331 = vadd.f32 0.0, %v5330
    %v5332 = vpop.f32.mrb[0].mxu0
    %5333 = vmatprep.mubr.bf16.mxu0 0
    %5334 = vmatmul.mubr.bf16.gmra.mrb[0].mxu0 %v2871
    %v5335 = vpop.f32.mrb[0].mxu0
    %v5336 = vadd.f32 0.0, %v5335
    %v5337 = vpop.f32.mrb[0].mxu0
    %v5338 = vpop.f32.mrb[0].mxu0
    %v5339 = vadd.f32 0.0, %v5338
    %v5340 = vpop.f32.mrb[0].mxu0
    %5341 = vmatprep.mubr.bf16.mxu0 0
    %5342 = vmatmul.mubr.bf16.gmra.mrb[0].mxu0 %v2874
    %v5343 = vpop.f32.mrb[0].mxu0
    %v5344 = vadd.f32 0.0, %v5343
    %v5345 = vpop.f32.mrb[0].mxu0
    %v5346 = vpop.f32.mrb[0].mxu0
    %v5347 = vadd.f32 0.0, %v5346
    %v5348 = vpop.f32.mrb[0].mxu0
    %5349 = vmatprep.mubr.bf16.mxu0 0
    %5350 = vmatmul.mubr.bf16.gmra.mrb[0].mxu0 %v2877
    %v5351 = vpop.f32.mrb[0].mxu0
    %v5352 = vadd.f32 0.0, %v5351
    %v5353 = vpop.f32.mrb[0].mxu0
    %v5354 = vpop.f32.mrb[0].mxu0
    %v5355 = vadd.f32 0.0, %v5354
    %v5356 = vpop.f32.mrb[0].mxu0
    %5357 = vmatprep.mubr.bf16.mxu0 0
    %5358 = vmatmul.mubr.bf16.gmra.mrb[0].mxu0 %v2880
    %v5359 = vpop.f32.mrb[0].mxu0
    %v5360 = vadd.f32 0.0, %v5359
    %v5361 = vpop.f32.mrb[0].mxu0
    %v5362 = vpop.f32.mrb[0].mxu0
    %v5363 = vadd.f32 0.0, %v5362
    %v5364 = vpop.f32.mrb[0].mxu0
    %5365 = vmatprep.mubr.bf16.mxu0 0
    %5366 = vmatmul.mubr.bf16.gmra.mrb[0].mxu0 %v2883
    %v5367 = vpop.f32.mrb[0].mxu0
    %v5368 = vadd.f32 0.0, %v5367
    %v5369 = vpop.f32.mrb[0].mxu0
    %v5370 = vpop.f32.mrb[0].mxu0
    %v5371 = vadd.f32 0.0, %v5370
    %v5372 = vpop.f32.mrb[0].mxu0
    %5373 = vmatprep.mubr.bf16.mxu0 0
    %5374 = vmatmul.mubr.bf16.gmra.mrb[0].mxu0 %v2886
    %v5375 = vpop.f32.mrb[0].mxu0
    %v5376 = vadd.f32 0.0, %v5375
    %v5377 = vpop.f32.mrb[0].mxu0
    %v5378 = vpop.f32.mrb[0].mxu0
    %v5379 = vadd.f32 0.0, %v5378
    %v5380 = vpop.f32.mrb[0].mxu0
    %5381 = vmatprep.mubr.bf16.mxu0 0
    %5382 = vmatmul.mubr.bf16.gmra.mrb[0].mxu0 %v2889
    %v5383 = vpop.f32.mrb[0].mxu0
    %v5384 = vadd.f32 0.0, %v5383
    %v5385 = vpop.f32.mrb[0].mxu0
    %v5386 = vpop.f32.mrb[0].mxu0
    %v5387 = vadd.f32 0.0, %v5386
    %v5388 = vpop.f32.mrb[0].mxu0
    %5389 = vmatprep.mubr.bf16.mxu0 0
    %5390 = vmatmul.mubr.bf16.gmra.mrb[0].mxu0 %v2892
    %v5391 = vpop.f32.mrb[0].mxu0
    %v5392 = vadd.f32 0.0, %v5391
    %v5393 = vpop.f32.mrb[0].mxu0
    %v5394 = vpop.f32.mrb[0].mxu0
    %v5395 = vadd.f32 0.0, %v5394
    %v5396 = vpop.f32.mrb[0].mxu0
    %5397 = vmatprep.mubr.bf16.mxu0 0
    %5398 = vmatmul.mubr.bf16.gmra.mrb[0].mxu0 %v2895
    %v5399 = vpop.f32.mrb[0].mxu0
    %v5400 = vadd.f32 0.0, %v5399
    %v5401 = vpop.f32.mrb[0].mxu0
    %v5402 = vpop.f32.mrb[0].mxu0
    %v5403 = vadd.f32 0.0, %v5402
    %v5404 = vpop.f32.mrb[0].mxu0
    %5405 = vmatprep.mubr.bf16.mxu0 0
    %5406 = vmatmul.mubr.bf16.gmra.mrb[0].mxu0 %v2898
    %v5407 = vpop.f32.mrb[0].mxu0
    %v5408 = vadd.f32 0.0, %v5407
    %v5409 = vpop.f32.mrb[0].mxu0
    %v5410 = vpop.f32.mrb[0].mxu0
    %v5411 = vadd.f32 0.0, %v5410
    %v5412 = vpop.f32.mrb[0].mxu0
    %5413 = vmatprep.mubr.bf16.mxu0 0
    %5414 = vmatmul.mubr.bf16.gmra.mrb[0].mxu0 %v2901
    %v5415 = vpop.f32.mrb[0].mxu0
    %v5416 = vadd.f32 0.0, %v5415
    %v5417 = vpop.f32.mrb[0].mxu0
    %v5418 = vpop.f32.mrb[0].mxu0
    %v5419 = vadd.f32 0.0, %v5418
    %v5420 = vpop.f32.mrb[0].mxu0
    %5421 = vmatprep.mubr.bf16.mxu0 0
    %5422 = vmatmul.mubr.bf16.gmra.mrb[0].mxu0 %v2904
    %v5423 = vpop.f32.mrb[0].mxu0
    %v5424 = vadd.f32 0.0, %v5423
    %v5425 = vpop.f32.mrb[0].mxu0
    %v5426 = vpop.f32.mrb[0].mxu0
    %v5427 = vadd.f32 0.0, %v5426
    %v5428 = vpop.f32.mrb[0].mxu0
    %5429 = vmatprep.mubr.bf16.mxu0 0
    %5430 = vmatmul.mubr.bf16.gmra.mrb[0].mxu0 %v2907
    %v5431 = vpop.f32.mrb[0].mxu0
    %v5432 = vadd.f32 0.0, %v5431
    %v5433 = vpop.f32.mrb[0].mxu0
    %v5434 = vpop.f32.mrb[0].mxu0
    %v5435 = vadd.f32 0.0, %v5434
    %v5436 = vpop.f32.mrb[0].mxu0
    %5437 = vmatprep.mubr.bf16.mxu0 0
    %5438 = vmatmul.mubr.bf16.gmra.mrb[0].mxu0 %v4120
    %v5439 = vpop.f32.mrb[0].mxu0
    %v5440 = vadd.f32 0.0, %v5439
    %v5441 = vpop.f32.mrb[0].mxu0
    %v5442 = vpop.f32.mrb[0].mxu0
    %v5443 = vadd.f32 0.0, %v5442
    %v5444 = vpop.f32.mrb[0].mxu0
    %5445 = vmatprep.mubr.bf16.mxu0 0
    %5446 = vmatmul.mubr.bf16.gmra.mrb[0].mxu0 %v5288
    %v5447 = vpop.f32.mrb[0].mxu0
    %v5448 = vadd.f32 0.0, %v5447
    %v5449 = vpop.f32.mrb[0].mxu0
    %v5450 = vpop.f32.mrb[0].mxu0
    %v5451 = vadd.f32 0.0, %v5450
    %v5452 = vpop.f32.mrb[0].mxu0
    %5453 = vmatprep.mubr.bf16.mxu0 0
    %5454 = vmatmul.mubr.bf16.gmra.mrb[0].mxu0 %v2916
    %v5455 = vpop.f32.mrb[0].mxu0
    %v5456 = vadd.f32 0.0, %v5455
    %v5457 = vpop.f32.mrb[0].mxu0
    %v5458 = vpop.f32.mrb[0].mxu0
    %v5459 = vadd.f32 0.0, %v5458
    %v5460 = vpop.f32.mrb[0].mxu0
    %5461 = vmatprep.mubr.bf16.mxu0 0
    %5462 = vmatmul.mubr.bf16.gmra.mrb[0].mxu0 %v2919
    %v5463 = vpop.f32.mrb[0].mxu0
    %v5464 = vadd.f32 0.0, %v5463
    %v5465 = vpop.f32.mrb[0].mxu0
    %v5466 = vpop.f32.mrb[0].mxu0
    %v5467 = vadd.f32 0.0, %v5466
    %v5468 = vpop.f32.mrb[0].mxu0
    %5469 = vmatprep.mubr.bf16.mxu0 0
    %5470 = vmatmul.mubr.bf16.gmra.mrb[0].mxu0 %v2922
    %v5471 = vpop.f32.mrb[0].mxu0
    %v5472 = vadd.f32 0.0, %v5471
    %v5473 = vpop.f32.mrb[0].mxu0
    %v5474 = vpop.f32.mrb[0].mxu0
    %v5475 = vadd.f32 0.0, %v5474
    %v5476 = vpop.f32.mrb[0].mxu0
    %5477 = vmatprep.mubr.bf16.mxu0 0
    %5478 = vmatmul.mubr.bf16.gmra.mrb[0].mxu0 %v2925
    %v5479 = vpop.f32.mrb[0].mxu0
    %v5480 = vadd.f32 0.0, %v5479
    %v5481 = vpop.f32.mrb[0].mxu0
    %v5482 = vpop.f32.mrb[0].mxu0
    %v5483 = vadd.f32 0.0, %v5482
    %v5484 = vpop.f32.mrb[0].mxu0
    %5485 = vmatprep.mubr.bf16.mxu0 0
    %5486 = vmatmul.mubr.bf16.gmra.mrb[0].mxu0 %v2928
    %v5487 = vpop.f32.mrb[0].mxu0
    %v5488 = vadd.f32 0.0, %v5487
    %v5489 = vpop.f32.mrb[0].mxu0
    %v5490 = vpop.f32.mrb[0].mxu0
    %v5491 = vadd.f32 0.0, %v5490
    %v5492 = vpop.f32.mrb[0].mxu0
    %5493 = vmatprep.mubr.bf16.mxu0 0
    %5494 = vmatmul.mubr.bf16.gmra.mrb[0].mxu0 %v2931
    %v5495 = vpop.f32.mrb[0].mxu0
    %v5496 = vadd.f32 0.0, %v5495
    %v5497 = vpop.f32.mrb[0].mxu0
    %v5498 = vpop.f32.mrb[0].mxu0
    %v5499 = vadd.f32 0.0, %v5498
    %v5500 = vpop.f32.mrb[0].mxu0
    %5501 = vmatprep.mubr.bf16.mxu0 0
    %5502 = vmatmul.mubr.bf16.gmra.mrb[0].mxu0 %v2934
    %v5503 = vpop.f32.mrb[0].mxu0
    %v5504 = vadd.f32 0.0, %v5503
    %v5505 = vpop.f32.mrb[0].mxu0
    %v5506 = vpop.f32.mrb[0].mxu0
    %v5507 = vadd.f32 0.0, %v5506
    %v5508 = vpop.f32.mrb[0].mxu0
    %5509 = vmatprep.mubr.bf16.mxu0 0
    %5510 = vmatmul.mubr.bf16.gmra.mrb[0].mxu0 %v2937
    %v5511 = vpop.f32.mrb[0].mxu0
    %v5512 = vadd.f32 0.0, %v5511
    %v5513 = vpop.f32.mrb[0].mxu0
    %v5514 = vpop.f32.mrb[0].mxu0
    %v5515 = vadd.f32 0.0, %v5514
    %v5516 = vpop.f32.mrb[0].mxu0
    %5517 = vmatprep.mubr.bf16.mxu0 0
    %5518 = vmatmul.mubr.bf16.gmra.mrb[0].mxu0 %v2940
    %v5519 = vpop.f32.mrb[0].mxu0
    %v5520 = vadd.f32 0.0, %v5519
    %v5521 = vpop.f32.mrb[0].mxu0
    %v5522 = vpop.f32.mrb[0].mxu0
    %v5523 = vadd.f32 0.0, %v5522
    %v5524 = vpop.f32.mrb[0].mxu0
    %5525 = vmatprep.mubr.bf16.mxu0 0
    %5526 = vmatmul.mubr.bf16.gmra.mrb[0].mxu0 %v2943
    %v5527 = vpop.f32.mrb[0].mxu0
    %v5528 = vadd.f32 0.0, %v5527
    %v5529 = vpop.f32.mrb[0].mxu0
    %v5530 = vpop.f32.mrb[0].mxu0
    %v5531 = vadd.f32 0.0, %v5530
    %v5532 = vpop.f32.mrb[0].mxu0
    %5533 = vmatprep.mubr.bf16.mxu0 0
    %5534 = vmatmul.mubr.bf16.gmra.mrb[0].mxu0 %v2946
    %v5535 = vpop.f32.mrb[0].mxu0
    %v5536 = vadd.f32 0.0, %v5535
    %v5537 = vpop.f32.mrb[0].mxu0
    %v5538 = vpop.f32.mrb[0].mxu0
    %v5539 = vadd.f32 0.0, %v5538
    %v5540 = vpop.f32.mrb[0].mxu0
    %5541 = vmatprep.mubr.bf16.mxu0 0
    %5542 = vmatmul.mubr.bf16.gmra.mrb[0].mxu0 %v2949
    %v5543 = vpop.f32.mrb[0].mxu0
    %v5544 = vadd.f32 0.0, %v5543
    %v5545 = vpop.f32.mrb[0].mxu0
    %v5546 = vpop.f32.mrb[0].mxu0
    %v5547 = vadd.f32 0.0, %v5546
    %v5548 = vpop.f32.mrb[0].mxu0
    %5549 = vmatprep.mubr.bf16.mxu0 0
    %5550 = vmatmul.mubr.bf16.gmra.mrb[0].mxu0 %v2952
    %v5551 = vpop.f32.mrb[0].mxu0
    %v5552 = vadd.f32 0.0, %v5551
    %v5553 = vpop.f32.mrb[0].mxu0
    %v5554 = vpop.f32.mrb[0].mxu0
    %v5555 = vadd.f32 0.0, %v5554
    %v5556 = vpop.f32.mrb[0].mxu0
    %5557 = vmatprep.mubr.bf16.mxu0 0
    %5558 = vmatmul.mubr.bf16.gmra.mrb[0].mxu0 %v2955
    %v5559 = vpop.f32.mrb[0].mxu0
    %v5560 = vadd.f32 0.0, %v5559
    %v5561 = vpop.f32.mrb[0].mxu0
    %v5562 = vpop.f32.mrb[0].mxu0
    %v5563 = vadd.f32 0.0, %v5562
    %v5564 = vpop.f32.mrb[0].mxu0
    %5565 = vmatprep.mubr.bf16.mxu0 0
    %5566 = vmatmul.mubr.bf16.gmra.mrb[0].mxu0 %v4123
    %v5567 = vpop.f32.mrb[0].mxu0
    %v5568 = vadd.f32 0.0, %v5567
    %v5569 = vpop.f32.mrb[0].mxu0
    %v5570 = vpop.f32.mrb[0].mxu0
    %v5571 = vadd.f32 0.0, %v5570
    %v5572 = vpop.f32.mrb[0].mxu0
    %5573 = vmatprep.mubr.bf16.mxu0 0
    %5574 = vmatmul.mubr.bf16.gmra.mrb[0].mxu0 %v5291
    %v5575 = vpop.f32.mrb[0].mxu0
    %v5576 = vadd.f32 0.0, %v5575
    %v5577 = vpop.f32.mrb[0].mxu0
    %v5578 = vpop.f32.mrb[0].mxu0
    %v5579 = vadd.f32 0.0, %v5578
    %v5580 = vpop.f32.mrb[0].mxu0
    %5581 = vdwg.mxu0
    %v5582 = vadd.f32 %v5190, %v5328
    %v5583 = vadd.f32 %v5191, %v5331
    %v5584 = vadd.f32 %v5192, %v5336
    %v5585 = vadd.f32 %v5193, %v5339
    %v5586 = vadd.f32 %v5194, %v5344
    %v5587 = vadd.f32 %v5195, %v5347
    %v5588 = vadd.f32 %v5196, %v5352
    %v5589 = vadd.f32 %v5197, %v5355
    %v5590 = vadd.f32 %v5198, %v5360
    %v5591 = vadd.f32 %v5199, %v5363
    %v5592 = vadd.f32 %v5200, %v5368
    %v5593 = vadd.f32 %v5201, %v5371
    %v5594 = vadd.f32 %v5202, %v5376
    %v5595 = vadd.f32 %v5203, %v5379
    %v5596 = vadd.f32 %v5204, %v5384
    %v5597 = vadd.f32 %v5205, %v5387
    %v5598 = vadd.f32 %v5206, %v5392
    %v5599 = vadd.f32 %v5207, %v5395
    %v5600 = vadd.f32 %v5208, %v5400
    %v5601 = vadd.f32 %v5209, %v5403
    %v5602 = vadd.f32 %v5210, %v5408
    %v5603 = vadd.f32 %v5211, %v5411
    %v5604 = vadd.f32 %v5212, %v5416
    %v5605 = vadd.f32 %v5213, %v5419
    %v5606 = vadd.f32 %v5214, %v5424
    %v5607 = vadd.f32 %v5215, %v5427
    %v5608 = vadd.f32 %v5216, %v5432
    %v5609 = vadd.f32 %v5217, %v5435
    %v5610 = vadd.f32 %v5218, %v5440
    %v5611 = vadd.f32 %v5219, %v5443
    %v5612 = vadd.f32 %v5220, %v5448
    %v5613 = vadd.f32 %v5221, %v5451
    %v5614 = vadd.f32 %v5222, %v5456
    %v5615 = vadd.f32 %v5223, %v5459
    %v5616 = vadd.f32 %v5224, %v5464
    %v5617 = vadd.f32 %v5225, %v5467
    %v5618 = vadd.f32 %v5226, %v5472
    %v5619 = vadd.f32 %v5227, %v5475
    %v5620 = vadd.f32 %v5228, %v5480
    %v5621 = vadd.f32 %v5229, %v5483
    %v5622 = vadd.f32 %v5230, %v5488
    %v5623 = vadd.f32 %v5231, %v5491
    %v5624 = vadd.f32 %v5232, %v5496
    %v5625 = vadd.f32 %v5233, %v5499
    %v5626 = vadd.f32 %v5234, %v5504
    %v5627 = vadd.f32 %v5235, %v5507
    %v5628 = vadd.f32 %v5236, %v5512
    %v5629 = vadd.f32 %v5237, %v5515
    %v5630 = vadd.f32 %v5238, %v5520
    %v5631 = vadd.f32 %v5239, %v5523
    %v5632 = vadd.f32 %v5240, %v5528
    %v5633 = vadd.f32 %v5241, %v5531
    %v5634 = vadd.f32 %v5242, %v5536
    %v5635 = vadd.f32 %v5243, %v5539
    %v5636 = vadd.f32 %v5244, %v5544
    %v5637 = vadd.f32 %v5245, %v5547
    %v5638 = vadd.f32 %v5246, %v5552
    %v5639 = vadd.f32 %v5247, %v5555
    %v5640 = vadd.f32 %v5248, %v5560
    %v5641 = vadd.f32 %v5249, %v5563
    %v5642 = vadd.f32 %v5250, %v5568
    %v5643 = vadd.f32 %v5251, %v5571
    %v5644 = vadd.f32 %v5252, %v5576
    %v5645 = vadd.f32 %v5253, %v5579
    %v5646 = vld [vmem:[%s5] sm:$0x1]
    %v5647 = vld [vmem:[%s6] sm:$0x1]
    %v5648 = vsel %vm572, %v5582, 0.0
    %v5649 = vsel %vm572, %v5583, 0.0
    %v5650 = vadd.f32 %v5648, %v5649
    %v5651 = vsel %vm572, %v5584, 0.0
    %v5652 = vadd.f32 %v5650, %v5651
    %v5653 = vsel %vm572, %v5585, 0.0
    %v5654 = vadd.f32 %v5652, %v5653
    %v5655 = vsel %vm572, %v5586, 0.0
    %v5656 = vadd.f32 %v5654, %v5655
    %v5657 = vsel %vm572, %v5587, 0.0
    %v5658 = vadd.f32 %v5656, %v5657
    %v5659 = vsel %vm572, %v5588, 0.0
    %v5660 = vadd.f32 %v5658, %v5659
    %v5661 = vsel %vm572, %v5589, 0.0
    %v5662 = vadd.f32 %v5660, %v5661
    %v5663 = vsel %vm572, %v5590, 0.0
    %v5664 = vadd.f32 %v5662, %v5663
    %v5665 = vsel %vm572, %v5591, 0.0
    %v5666 = vadd.f32 %v5664, %v5665
    %v5667 = vsel %vm572, %v5592, 0.0
    %v5668 = vadd.f32 %v5666, %v5667
    %v5669 = vsel %vm572, %v5593, 0.0
    %v5670 = vadd.f32 %v5668, %v5669
    %v5671 = vsel %vm572, %v5594, 0.0
    %v5672 = vadd.f32 %v5670, %v5671
    %v5673 = vsel %vm572, %v5595, 0.0
    %v5674 = vadd.f32 %v5672, %v5673
    %v5675 = vsel %vm572, %v5596, 0.0
    %v5676 = vadd.f32 %v5674, %v5675
    %v5677 = vsel %vm572, %v5597, 0.0
    %v5678 = vadd.f32 %v5676, %v5677
    %v5679 = vsel %vm572, %v5598, 0.0
    %v5680 = vadd.f32 %v5678, %v5679
    %v5681 = vsel %vm572, %v5599, 0.0
    %v5682 = vadd.f32 %v5680, %v5681
    %v5683 = vsel %vm572, %v5600, 0.0
    %v5684 = vadd.f32 %v5682, %v5683
    %v5685 = vsel %vm572, %v5601, 0.0
    %v5686 = vadd.f32 %v5684, %v5685
    %v5687 = vsel %vm572, %v5602, 0.0
    %v5688 = vadd.f32 %v5686, %v5687
    %v5689 = vsel %vm572, %v5603, 0.0
    %v5690 = vadd.f32 %v5688, %v5689
    %v5691 = vsel %vm572, %v5604, 0.0
    %v5692 = vadd.f32 %v5690, %v5691
    %v5693 = vsel %vm572, %v5605, 0.0
    %v5694 = vadd.f32 %v5692, %v5693
    %v5695 = vsel %vm572, %v5606, 0.0
    %v5696 = vadd.f32 %v5694, %v5695
    %v5697 = vsel %vm572, %v5607, 0.0
    %v5698 = vadd.f32 %v5696, %v5697
    %v5699 = vsel %vm572, %v5608, 0.0
    %v5700 = vadd.f32 %v5698, %v5699
    %v5701 = vsel %vm572, %v5609, 0.0
    %v5702 = vadd.f32 %v5700, %v5701
    %v5703 = vsel %vm572, %v5610, 0.0
    %v5704 = vadd.f32 %v5702, %v5703
    %v5705 = vsel %vm572, %v5611, 0.0
    %v5706 = vadd.f32 %v5704, %v5705
    %v5707 = vsel %vm572, %v5612, 0.0
    %v5708 = vadd.f32 %v5706, %v5707
    %v5709 = vsel %vm572, %v5613, 0.0
    %v5710 = vadd.f32 %v5708, %v5709
    %v5711 = vsel %vm572, %v5614, 0.0
    %v5712 = vadd.f32 %v5710, %v5711
    %v5713 = vsel %vm572, %v5615, 0.0
    %v5714 = vadd.f32 %v5712, %v5713
    %v5715 = vsel %vm572, %v5616, 0.0
    %v5716 = vadd.f32 %v5714, %v5715
    %v5717 = vsel %vm572, %v5617, 0.0
    %v5718 = vadd.f32 %v5716, %v5717
    %v5719 = vsel %vm572, %v5618, 0.0
    %v5720 = vadd.f32 %v5718, %v5719
    %v5721 = vsel %vm572, %v5619, 0.0
    %v5722 = vadd.f32 %v5720, %v5721
    %v5723 = vsel %vm572, %v5620, 0.0
    %v5724 = vadd.f32 %v5722, %v5723
    %v5725 = vsel %vm572, %v5621, 0.0
    %v5726 = vadd.f32 %v5724, %v5725
    %v5727 = vsel %vm572, %v5622, 0.0
    %v5728 = vadd.f32 %v5726, %v5727
    %v5729 = vsel %vm572, %v5623, 0.0
    %v5730 = vadd.f32 %v5728, %v5729
    %v5731 = vsel %vm572, %v5624, 0.0
    %v5732 = vadd.f32 %v5730, %v5731
    %v5733 = vsel %vm572, %v5625, 0.0
    %v5734 = vadd.f32 %v5732, %v5733
    %v5735 = vsel %vm572, %v5626, 0.0
    %v5736 = vadd.f32 %v5734, %v5735
    %v5737 = vsel %vm572, %v5627, 0.0
    %v5738 = vadd.f32 %v5736, %v5737
    %v5739 = vsel %vm572, %v5628, 0.0
    %v5740 = vadd.f32 %v5738, %v5739
    %v5741 = vsel %vm572, %v5629, 0.0
    %v5742 = vadd.f32 %v5740, %v5741
    %v5743 = vsel %vm572, %v5630, 0.0
    %v5744 = vadd.f32 %v5742, %v5743
    %v5745 = vsel %vm572, %v5631, 0.0
    %v5746 = vadd.f32 %v5744, %v5745
    %v5747 = vsel %vm572, %v5632, 0.0
    %v5748 = vadd.f32 %v5746, %v5747
    %v5749 = vsel %vm572, %v5633, 0.0
    %v5750 = vadd.f32 %v5748, %v5749
    %v5751 = vsel %vm572, %v5634, 0.0
    %v5752 = vadd.f32 %v5750, %v5751
    %v5753 = vsel %vm572, %v5635, 0.0
    %v5754 = vadd.f32 %v5752, %v5753
    %v5755 = vsel %vm572, %v5636, 0.0
    %v5756 = vadd.f32 %v5754, %v5755
    %v5757 = vsel %vm572, %v5637, 0.0
    %v5758 = vadd.f32 %v5756, %v5757
    %v5759 = vsel %vm572, %v5638, 0.0
    %v5760 = vadd.f32 %v5758, %v5759
    %v5761 = vsel %vm572, %v5639, 0.0
    %v5762 = vadd.f32 %v5760, %v5761
    %v5763 = vsel %vm572, %v5640, 0.0
    %v5764 = vadd.f32 %v5762, %v5763
    %v5765 = vsel %vm572, %v5641, 0.0
    %v5766 = vadd.f32 %v5764, %v5765
    %v5767 = vsel %vm572, %v5642, 0.0
    %v5768 = vadd.f32 %v5766, %v5767
    %v5769 = vsel %vm572, %v5643, 0.0
    %v5770 = vadd.f32 %v5768, %v5769
    %v5771 = vsel %vm572, %v5644, 0.0
    %v5772 = vadd.f32 %v5770, %v5771
    %v5773 = vsel %vm572, %v5645, 0.0
    %v5774 = vadd.f32 %v5772, %v5773
    %v5775 = vrot.slane %v5774, 4
    %v5776 = vadd.f32 %v5774, %v5775
    %v5777 = vrot.slane %v5776, 2
    %v5778 = vadd.f32 %v5776, %v5777
    %v5779 = vrot.slane %v5778, 1
    %v5780 = vadd.f32 %v5778, %v5779
    %v5781 = vmul.f32 %v5582, %v5582
    %v5782 = vmul.f32 %v5583, %v5583
    %v5783 = vmul.f32 %v5584, %v5584
    %v5784 = vmul.f32 %v5585, %v5585
    %v5785 = vmul.f32 %v5586, %v5586
    %v5786 = vmul.f32 %v5587, %v5587
    %v5787 = vmul.f32 %v5588, %v5588
    %v5788 = vmul.f32 %v5589, %v5589
    %v5789 = vmul.f32 %v5590, %v5590
    %v5790 = vmul.f32 %v5591, %v5591
    %v5791 = vmul.f32 %v5592, %v5592
    %v5792 = vmul.f32 %v5593, %v5593
    %v5793 = vmul.f32 %v5594, %v5594
    %v5794 = vmul.f32 %v5595, %v5595
    %v5795 = vmul.f32 %v5596, %v5596
    %v5796 = vmul.f32 %v5597, %v5597
    %v5797 = vmul.f32 %v5598, %v5598
    %v5798 = vmul.f32 %v5599, %v5599
    %v5799 = vmul.f32 %v5600, %v5600
    %v5800 = vmul.f32 %v5601, %v5601
    %v5801 = vmul.f32 %v5602, %v5602
    %v5802 = vmul.f32 %v5603, %v5603
    %v5803 = vmul.f32 %v5604, %v5604
    %v5804 = vmul.f32 %v5605, %v5605
    %v5805 = vmul.f32 %v5606, %v5606
    %v5806 = vmul.f32 %v5607, %v5607
    %v5807 = vmul.f32 %v5608, %v5608
    %v5808 = vmul.f32 %v5609, %v5609
    %v5809 = vmul.f32 %v5610, %v5610
    %v5810 = vmul.f32 %v5611, %v5611
    %v5811 = vmul.f32 %v5612, %v5612
    %v5812 = vmul.f32 %v5613, %v5613
    %v5813 = vmul.f32 %v5614, %v5614
    %v5814 = vmul.f32 %v5615, %v5615
    %v5815 = vmul.f32 %v5616, %v5616
    %v5816 = vmul.f32 %v5617, %v5617
    %v5817 = vmul.f32 %v5618, %v5618
    %v5818 = vmul.f32 %v5619, %v5619
    %v5819 = vmul.f32 %v5620, %v5620
    %v5820 = vmul.f32 %v5621, %v5621
    %v5821 = vmul.f32 %v5622, %v5622
    %v5822 = vmul.f32 %v5623, %v5623
    %v5823 = vmul.f32 %v5624, %v5624
    %v5824 = vmul.f32 %v5625, %v5625
    %v5825 = vmul.f32 %v5626, %v5626
    %v5826 = vmul.f32 %v5627, %v5627
    %v5827 = vmul.f32 %v5628, %v5628
    %v5828 = vmul.f32 %v5629, %v5629
    %v5829 = vmul.f32 %v5630, %v5630
    %v5830 = vmul.f32 %v5631, %v5631
    %v5831 = vmul.f32 %v5632, %v5632
    %v5832 = vmul.f32 %v5633, %v5633
    %v5833 = vmul.f32 %v5634, %v5634
    %v5834 = vmul.f32 %v5635, %v5635
    %v5835 = vmul.f32 %v5636, %v5636
    %v5836 = vmul.f32 %v5637, %v5637
    %v5837 = vmul.f32 %v5638, %v5638
    %v5838 = vmul.f32 %v5639, %v5639
    %v5839 = vmul.f32 %v5640, %v5640
    %v5840 = vmul.f32 %v5641, %v5641
    %v5841 = vmul.f32 %v5642, %v5642
    %v5842 = vmul.f32 %v5643, %v5643
    %v5843 = vmul.f32 %v5644, %v5644
    %v5844 = vmul.f32 %v5645, %v5645
    %v5845 = vsel %vm572, %v5781, 0.0
    %v5846 = vsel %vm572, %v5782, 0.0
    %v5847 = vadd.f32 %v5845, %v5846
    %v5848 = vsel %vm572, %v5783, 0.0
    %v5849 = vadd.f32 %v5847, %v5848
    %v5850 = vsel %vm572, %v5784, 0.0
    %v5851 = vadd.f32 %v5849, %v5850
    %v5852 = vsel %vm572, %v5785, 0.0
    %v5853 = vadd.f32 %v5851, %v5852
    %v5854 = vsel %vm572, %v5786, 0.0
    %v5855 = vadd.f32 %v5853, %v5854
    %v5856 = vsel %vm572, %v5787, 0.0
    %v5857 = vadd.f32 %v5855, %v5856
    %v5858 = vsel %vm572, %v5788, 0.0
    %v5859 = vadd.f32 %v5857, %v5858
    %v5860 = vsel %vm572, %v5789, 0.0
    %v5861 = vadd.f32 %v5859, %v5860
    %v5862 = vsel %vm572, %v5790, 0.0
    %v5863 = vadd.f32 %v5861, %v5862
    %v5864 = vsel %vm572, %v5791, 0.0
    %v5865 = vadd.f32 %v5863, %v5864
    %v5866 = vsel %vm572, %v5792, 0.0
    %v5867 = vadd.f32 %v5865, %v5866
    %v5868 = vsel %vm572, %v5793, 0.0
    %v5869 = vadd.f32 %v5867, %v5868
    %v5870 = vsel %vm572, %v5794, 0.0
    %v5871 = vadd.f32 %v5869, %v5870
    %v5872 = vsel %vm572, %v5795, 0.0
    %v5873 = vadd.f32 %v5871, %v5872
    %v5874 = vsel %vm572, %v5796, 0.0
    %v5875 = vadd.f32 %v5873, %v5874
    %v5876 = vsel %vm572, %v5797, 0.0
    %v5877 = vadd.f32 %v5875, %v5876
    %v5878 = vsel %vm572, %v5798, 0.0
    %v5879 = vadd.f32 %v5877, %v5878
    %v5880 = vsel %vm572, %v5799, 0.0
    %v5881 = vadd.f32 %v5879, %v5880
    %v5882 = vsel %vm572, %v5800, 0.0
    %v5883 = vadd.f32 %v5881, %v5882
    %v5884 = vsel %vm572, %v5801, 0.0
    %v5885 = vadd.f32 %v5883, %v5884
    %v5886 = vsel %vm572, %v5802, 0.0
    %v5887 = vadd.f32 %v5885, %v5886
    %v5888 = vsel %vm572, %v5803, 0.0
    %v5889 = vadd.f32 %v5887, %v5888
    %v5890 = vsel %vm572, %v5804, 0.0
    %v5891 = vadd.f32 %v5889, %v5890
    %v5892 = vsel %vm572, %v5805, 0.0
    %v5893 = vadd.f32 %v5891, %v5892
    %v5894 = vsel %vm572, %v5806, 0.0
    %v5895 = vadd.f32 %v5893, %v5894
    %v5896 = vsel %vm572, %v5807, 0.0
    %v5897 = vadd.f32 %v5895, %v5896
    %v5898 = vsel %vm572, %v5808, 0.0
    %v5899 = vadd.f32 %v5897, %v5898
    %v5900 = vsel %vm572, %v5809, 0.0
    %v5901 = vadd.f32 %v5899, %v5900
    %v5902 = vsel %vm572, %v5810, 0.0
    %v5903 = vadd.f32 %v5901, %v5902
    %v5904 = vsel %vm572, %v5811, 0.0
    %v5905 = vadd.f32 %v5903, %v5904
    %v5906 = vsel %vm572, %v5812, 0.0
    %v5907 = vadd.f32 %v5905, %v5906
    %v5908 = vsel %vm572, %v5813, 0.0
    %v5909 = vadd.f32 %v5907, %v5908
    %v5910 = vsel %vm572, %v5814, 0.0
    %v5911 = vadd.f32 %v5909, %v5910
    %v5912 = vsel %vm572, %v5815, 0.0
    %v5913 = vadd.f32 %v5911, %v5912
    %v5914 = vsel %vm572, %v5816, 0.0
    %v5915 = vadd.f32 %v5913, %v5914
    %v5916 = vsel %vm572, %v5817, 0.0
    %v5917 = vadd.f32 %v5915, %v5916
    %v5918 = vsel %vm572, %v5818, 0.0
    %v5919 = vadd.f32 %v5917, %v5918
    %v5920 = vsel %vm572, %v5819, 0.0
    %v5921 = vadd.f32 %v5919, %v5920
    %v5922 = vsel %vm572, %v5820, 0.0
    %v5923 = vadd.f32 %v5921, %v5922
    %v5924 = vsel %vm572, %v5821, 0.0
    %v5925 = vadd.f32 %v5923, %v5924
    %v5926 = vsel %vm572, %v5822, 0.0
    %v5927 = vadd.f32 %v5925, %v5926
    %v5928 = vsel %vm572, %v5823, 0.0
    %v5929 = vadd.f32 %v5927, %v5928
    %v5930 = vsel %vm572, %v5824, 0.0
    %v5931 = vadd.f32 %v5929, %v5930
    %v5932 = vsel %vm572, %v5825, 0.0
    %v5933 = vadd.f32 %v5931, %v5932
    %v5934 = vsel %vm572, %v5826, 0.0
    %v5935 = vadd.f32 %v5933, %v5934
    %v5936 = vsel %vm572, %v5827, 0.0
    %v5937 = vadd.f32 %v5935, %v5936
    %v5938 = vsel %vm572, %v5828, 0.0
    %v5939 = vadd.f32 %v5937, %v5938
    %v5940 = vsel %vm572, %v5829, 0.0
    %v5941 = vadd.f32 %v5939, %v5940
    %v5942 = vsel %vm572, %v5830, 0.0
    %v5943 = vadd.f32 %v5941, %v5942
    %v5944 = vsel %vm572, %v5831, 0.0
    %v5945 = vadd.f32 %v5943, %v5944
    %v5946 = vsel %vm572, %v5832, 0.0
    %v5947 = vadd.f32 %v5945, %v5946
    %v5948 = vsel %vm572, %v5833, 0.0
    %v5949 = vadd.f32 %v5947, %v5948
    %v5950 = vsel %vm572, %v5834, 0.0
    %v5951 = vadd.f32 %v5949, %v5950
    %v5952 = vsel %vm572, %v5835, 0.0
    %v5953 = vadd.f32 %v5951, %v5952
    %v5954 = vsel %vm572, %v5836, 0.0
    %v5955 = vadd.f32 %v5953, %v5954
    %v5956 = vsel %vm572, %v5837, 0.0
    %v5957 = vadd.f32 %v5955, %v5956
    %v5958 = vsel %vm572, %v5838, 0.0
    %v5959 = vadd.f32 %v5957, %v5958
    %v5960 = vsel %vm572, %v5839, 0.0
    %v5961 = vadd.f32 %v5959, %v5960
    %v5962 = vsel %vm572, %v5840, 0.0
    %v5963 = vadd.f32 %v5961, %v5962
    %v5964 = vsel %vm572, %v5841, 0.0
    %v5965 = vadd.f32 %v5963, %v5964
    %v5966 = vsel %vm572, %v5842, 0.0
    %v5967 = vadd.f32 %v5965, %v5966
    %v5968 = vsel %vm572, %v5843, 0.0
    %v5969 = vadd.f32 %v5967, %v5968
    %v5970 = vsel %vm572, %v5844, 0.0
    %v5971 = vadd.f32 %v5969, %v5970
    %v5972 = vrot.slane %v5971, 4
    %v5973 = vadd.f32 %v5971, %v5972
    %v5974 = vrot.slane %v5973, 2
    %v5975 = vadd.f32 %v5973, %v5974
    %v5976 = vrot.slane %v5975, 1
    %v5977 = vadd.f32 %v5975, %v5976
    %v5978 = vmul.f32 %v5780, 0.001953125
    %v5979 = vmul.f32 %v5977, 0.001953125
    %v5980 = vmul.f32 %v5978, %v5978
    %v5981 = vsub.f32 %v5979, %v5980
    %v5982 = vmax.f32 %v5981, 0.0
    %v5983 = vadd.f32 %v5982, 1e-05
    %v5984 = vrsqrt.pop %v5983
    %v5985 = vmul.f32 %v5646, %v5984
    %v5986 = vmul.f32 %v5978, %v5985
    %v5987 = vsub.f32 %v5647, %v5986
    %v5989 = vlaneseq
    %v5990 = vshrl.u32 %v5989, 7
    %v5991 = vsub.s32 0, %v5990
    %v5992 = vrot.slane %v5985, %v5991
    %v5994 = vmul.f32 %v5582, %v5992
    %v5995 = vmul.f32 %v5583, %v5992
    %v5996 = vmul.f32 %v5584, %v5992
    %v5997 = vmul.f32 %v5585, %v5992
    %v5998 = vmul.f32 %v5586, %v5992
    %v5999 = vmul.f32 %v5587, %v5992
    %v6000 = vmul.f32 %v5588, %v5992
    %v6001 = vmul.f32 %v5589, %v5992
    %v6002 = vmul.f32 %v5590, %v5992
    %v6003 = vmul.f32 %v5591, %v5992
    %v6004 = vmul.f32 %v5592, %v5992
    %v6005 = vmul.f32 %v5593, %v5992
    %v6006 = vmul.f32 %v5594, %v5992
    %v6007 = vmul.f32 %v5595, %v5992
    %v6008 = vmul.f32 %v5596, %v5992
    %v6009 = vmul.f32 %v5597, %v5992
    %v6010 = vmul.f32 %v5598, %v5992
    %v6011 = vmul.f32 %v5599, %v5992
    %v6012 = vmul.f32 %v5600, %v5992
    %v6013 = vmul.f32 %v5601, %v5992
    %v6014 = vmul.f32 %v5602, %v5992
    %v6015 = vmul.f32 %v5603, %v5992
    %v6016 = vmul.f32 %v5604, %v5992
    %v6017 = vmul.f32 %v5605, %v5992
    %v6018 = vmul.f32 %v5606, %v5992
    %v6019 = vmul.f32 %v5607, %v5992
    %v6020 = vmul.f32 %v5608, %v5992
    %v6021 = vmul.f32 %v5609, %v5992
    %v6022 = vmul.f32 %v5610, %v5992
    %v6023 = vmul.f32 %v5611, %v5992
    %v6024 = vmul.f32 %v5612, %v5992
    %v6025 = vmul.f32 %v5613, %v5992
    %v6026 = vmul.f32 %v5614, %v5992
    %v6027 = vmul.f32 %v5615, %v5992
    %v6028 = vmul.f32 %v5616, %v5992
    %v6029 = vmul.f32 %v5617, %v5992
    %v6030 = vmul.f32 %v5618, %v5992
    %v6031 = vmul.f32 %v5619, %v5992
    %v6032 = vmul.f32 %v5620, %v5992
    %v6033 = vmul.f32 %v5621, %v5992
    %v6034 = vmul.f32 %v5622, %v5992
    %v6035 = vmul.f32 %v5623, %v5992
    %v6036 = vmul.f32 %v5624, %v5992
    %v6037 = vmul.f32 %v5625, %v5992
    %v6038 = vmul.f32 %v5626, %v5992
    %v6039 = vmul.f32 %v5627, %v5992
    %v6040 = vmul.f32 %v5628, %v5992
    %v6041 = vmul.f32 %v5629, %v5992
    %v6042 = vmul.f32 %v5630, %v5992
    %v6043 = vmul.f32 %v5631, %v5992
    %v6044 = vmul.f32 %v5632, %v5992
    %v6045 = vmul.f32 %v5633, %v5992
    %v6046 = vmul.f32 %v5634, %v5992
    %v6047 = vmul.f32 %v5635, %v5992
    %v6048 = vmul.f32 %v5636, %v5992
    %v6049 = vmul.f32 %v5637, %v5992
    %v6050 = vmul.f32 %v5638, %v5992
    %v6051 = vmul.f32 %v5639, %v5992
    %v6052 = vmul.f32 %v5640, %v5992
    %v6053 = vmul.f32 %v5641, %v5992
    %v6054 = vmul.f32 %v5642, %v5992
    %v6055 = vmul.f32 %v5643, %v5992
    %v6056 = vmul.f32 %v5644, %v5992
    %v6057 = vmul.f32 %v5645, %v5992
    %v6059 = vlaneseq
    %v6060 = vshrl.u32 %v6059, 7
    %v6061 = vsub.s32 0, %v6060
    %v6062 = vrot.slane %v5987, %v6061
    %v6064 = vadd.f32 %v5994, %v6062
    %v6065 = vadd.f32 %v5995, %v6062
    %v6066 = vadd.f32 %v5996, %v6062
    %v6067 = vadd.f32 %v5997, %v6062
    %v6068 = vadd.f32 %v5998, %v6062
    %v6069 = vadd.f32 %v5999, %v6062
    %v6070 = vadd.f32 %v6000, %v6062
    %v6071 = vadd.f32 %v6001, %v6062
    %v6072 = vadd.f32 %v6002, %v6062
    %v6073 = vadd.f32 %v6003, %v6062
    %v6074 = vadd.f32 %v6004, %v6062
    %v6075 = vadd.f32 %v6005, %v6062
    %v6076 = vadd.f32 %v6006, %v6062
    %v6077 = vadd.f32 %v6007, %v6062
    %v6078 = vadd.f32 %v6008, %v6062
    %v6079 = vadd.f32 %v6009, %v6062
    %v6080 = vadd.f32 %v6010, %v6062
    %v6081 = vadd.f32 %v6011, %v6062
    %v6082 = vadd.f32 %v6012, %v6062
    %v6083 = vadd.f32 %v6013, %v6062
    %v6084 = vadd.f32 %v6014, %v6062
    %v6085 = vadd.f32 %v6015, %v6062
    %v6086 = vadd.f32 %v6016, %v6062
    %v6087 = vadd.f32 %v6017, %v6062
    %v6088 = vadd.f32 %v6018, %v6062
    %v6089 = vadd.f32 %v6019, %v6062
    %v6090 = vadd.f32 %v6020, %v6062
    %v6091 = vadd.f32 %v6021, %v6062
    %v6092 = vadd.f32 %v6022, %v6062
    %v6093 = vadd.f32 %v6023, %v6062
    %v6094 = vadd.f32 %v6024, %v6062
    %v6095 = vadd.f32 %v6025, %v6062
    %v6096 = vadd.f32 %v6026, %v6062
    %v6097 = vadd.f32 %v6027, %v6062
    %v6098 = vadd.f32 %v6028, %v6062
    %v6099 = vadd.f32 %v6029, %v6062
    %v6100 = vadd.f32 %v6030, %v6062
    %v6101 = vadd.f32 %v6031, %v6062
    %v6102 = vadd.f32 %v6032, %v6062
    %v6103 = vadd.f32 %v6033, %v6062
    %v6104 = vadd.f32 %v6034, %v6062
    %v6105 = vadd.f32 %v6035, %v6062
    %v6106 = vadd.f32 %v6036, %v6062
    %v6107 = vadd.f32 %v6037, %v6062
    %v6108 = vadd.f32 %v6038, %v6062
    %v6109 = vadd.f32 %v6039, %v6062
    %v6110 = vadd.f32 %v6040, %v6062
    %v6111 = vadd.f32 %v6041, %v6062
    %v6112 = vadd.f32 %v6042, %v6062
    %v6113 = vadd.f32 %v6043, %v6062
    %v6114 = vadd.f32 %v6044, %v6062
    %v6115 = vadd.f32 %v6045, %v6062
    %v6116 = vadd.f32 %v6046, %v6062
    %v6117 = vadd.f32 %v6047, %v6062
    %v6118 = vadd.f32 %v6048, %v6062
    %v6119 = vadd.f32 %v6049, %v6062
    %v6120 = vadd.f32 %v6050, %v6062
    %v6121 = vadd.f32 %v6051, %v6062
    %v6122 = vadd.f32 %v6052, %v6062
    %v6123 = vadd.f32 %v6053, %v6062
    %v6124 = vadd.f32 %v6054, %v6062
    %v6125 = vadd.f32 %v6055, %v6062
    %v6126 = vadd.f32 %v6056, %v6062
    %v6127 = vadd.f32 %v6057, %v6062
    %v6128 = vmax.f32 %v6064, 0.0
    %v6129 = vmax.f32 %v6065, 0.0
    %v6130 = vmax.f32 %v6066, 0.0
    %v6131 = vmax.f32 %v6067, 0.0
    %v6132 = vmax.f32 %v6068, 0.0
    %v6133 = vmax.f32 %v6069, 0.0
    %v6134 = vmax.f32 %v6070, 0.0
    %v6135 = vmax.f32 %v6071, 0.0
    %v6136 = vmax.f32 %v6072, 0.0
    %v6137 = vmax.f32 %v6073, 0.0
    %v6138 = vmax.f32 %v6074, 0.0
    %v6139 = vmax.f32 %v6075, 0.0
    %v6140 = vmax.f32 %v6076, 0.0
    %v6141 = vmax.f32 %v6077, 0.0
    %v6142 = vmax.f32 %v6078, 0.0
    %v6143 = vmax.f32 %v6079, 0.0
    %v6144 = vmax.f32 %v6080, 0.0
    %v6145 = vmax.f32 %v6081, 0.0
    %v6146 = vmax.f32 %v6082, 0.0
    %v6147 = vmax.f32 %v6083, 0.0
    %v6148 = vmax.f32 %v6084, 0.0
    %v6149 = vmax.f32 %v6085, 0.0
    %v6150 = vmax.f32 %v6086, 0.0
    %v6151 = vmax.f32 %v6087, 0.0
    %v6152 = vmax.f32 %v6088, 0.0
    %v6153 = vmax.f32 %v6089, 0.0
    %v6154 = vmax.f32 %v6090, 0.0
    %v6155 = vmax.f32 %v6091, 0.0
    %v6156 = vmax.f32 %v6092, 0.0
    %v6157 = vmax.f32 %v6093, 0.0
    %v6158 = vmax.f32 %v6094, 0.0
    %v6159 = vmax.f32 %v6095, 0.0
    %v6160 = vmax.f32 %v6096, 0.0
    %v6161 = vmax.f32 %v6097, 0.0
    %v6162 = vmax.f32 %v6098, 0.0
    %v6163 = vmax.f32 %v6099, 0.0
    %v6164 = vmax.f32 %v6100, 0.0
    %v6165 = vmax.f32 %v6101, 0.0
    %v6166 = vmax.f32 %v6102, 0.0
    %v6167 = vmax.f32 %v6103, 0.0
    %v6168 = vmax.f32 %v6104, 0.0
    %v6169 = vmax.f32 %v6105, 0.0
    %v6170 = vmax.f32 %v6106, 0.0
    %v6171 = vmax.f32 %v6107, 0.0
    %v6172 = vmax.f32 %v6108, 0.0
    %v6173 = vmax.f32 %v6109, 0.0
    %v6174 = vmax.f32 %v6110, 0.0
    %v6175 = vmax.f32 %v6111, 0.0
    %v6176 = vmax.f32 %v6112, 0.0
    %v6177 = vmax.f32 %v6113, 0.0
    %v6178 = vmax.f32 %v6114, 0.0
    %v6179 = vmax.f32 %v6115, 0.0
    %v6180 = vmax.f32 %v6116, 0.0
    %v6181 = vmax.f32 %v6117, 0.0
    %v6182 = vmax.f32 %v6118, 0.0
    %v6183 = vmax.f32 %v6119, 0.0
    %v6184 = vmax.f32 %v6120, 0.0
    %v6185 = vmax.f32 %v6121, 0.0
    %v6186 = vmax.f32 %v6122, 0.0
    %v6187 = vmax.f32 %v6123, 0.0
    %v6188 = vmax.f32 %v6124, 0.0
    %v6189 = vmax.f32 %v6125, 0.0
    %v6190 = vmax.f32 %v6126, 0.0
    %v6191 = vmax.f32 %v6127, 0.0
    %6192 = vst.msk [vmem:[#allocation8] sm:$0xff] %vm572, %v6128
    %6193 = vst.msk [vmem:[#allocation8 + $0x8] sm:$0xff] %vm572, %v6129
    %6194 = vst.msk [vmem:[#allocation8 + $0x10] sm:$0xff] %vm572, %v6130
    %6195 = vst.msk [vmem:[#allocation8 + $0x18] sm:$0xff] %vm572, %v6131
    %6196 = vst.msk [vmem:[#allocation8 + $0x20] sm:$0xff] %vm572, %v6132
    %6197 = vst.msk [vmem:[#allocation8 + $0x28] sm:$0xff] %vm572, %v6133
    %6198 = vst.msk [vmem:[#allocation8 + $0x30] sm:$0xff] %vm572, %v6134
    %6199 = vst.msk [vmem:[#allocation8 + $0x38] sm:$0xff] %vm572, %v6135
    %6200 = vst.msk [vmem:[#allocation8 + $0x40] sm:$0xff] %vm572, %v6136
    %6201 = vst.msk [vmem:[#allocation8 + $0x48] sm:$0xff] %vm572, %v6137
    %6202 = vst.msk [vmem:[#allocation8 + $0x50] sm:$0xff] %vm572, %v6138
    %6203 = vst.msk [vmem:[#allocation8 + $0x58] sm:$0xff] %vm572, %v6139
    %6204 = vst.msk [vmem:[#allocation8 + $0x60] sm:$0xff] %vm572, %v6140
    %6205 = vst.msk [vmem:[#allocation8 + $0x68] sm:$0xff] %vm572, %v6141
    %6206 = vst.msk [vmem:[#allocation8 + $0x70] sm:$0xff] %vm572, %v6142
    %6207 = vst.msk [vmem:[#allocation8 + $0x78] sm:$0xff] %vm572, %v6143
    %6208 = vst.msk [vmem:[#allocation8 + $0x80] sm:$0xff] %vm572, %v6144
    %6209 = vst.msk [vmem:[#allocation8 + $0x88] sm:$0xff] %vm572, %v6145
    %6210 = vst.msk [vmem:[#allocation8 + $0x90] sm:$0xff] %vm572, %v6146
    %6211 = vst.msk [vmem:[#allocation8 + $0x98] sm:$0xff] %vm572, %v6147
    %6212 = vst.msk [vmem:[#allocation8 + $0xa0] sm:$0xff] %vm572, %v6148
    %6213 = vst.msk [vmem:[#allocation8 + $0xa8] sm:$0xff] %vm572, %v6149
    %6214 = vst.msk [vmem:[#allocation8 + $0xb0] sm:$0xff] %vm572, %v6150
    %6215 = vst.msk [vmem:[#allocation8 + $0xb8] sm:$0xff] %vm572, %v6151
    %6216 = vst.msk [vmem:[#allocation8 + $0xc0] sm:$0xff] %vm572, %v6152
    %6217 = vst.msk [vmem:[#allocation8 + $0xc8] sm:$0xff] %vm572, %v6153
    %6218 = vst.msk [vmem:[#allocation8 + $0xd0] sm:$0xff] %vm572, %v6154
    %6219 = vst.msk [vmem:[#allocation8 + $0xd8] sm:$0xff] %vm572, %v6155
    %6220 = vst.msk [vmem:[#allocation8 + $0xe0] sm:$0xff] %vm572, %v6156
    %6221 = vst.msk [vmem:[#allocation8 + $0xe8] sm:$0xff] %vm572, %v6157
    %6222 = vst.msk [vmem:[#allocation8 + $0xf0] sm:$0xff] %vm572, %v6158
    %6223 = vst.msk [vmem:[#allocation8 + $0xf8] sm:$0xff] %vm572, %v6159
    %6224 = vst.msk [vmem:[#allocation8 + $0x100] sm:$0xff] %vm572, %v6160
    %6225 = vst.msk [vmem:[#allocation8 + $0x108] sm:$0xff] %vm572, %v6161
    %6226 = vst.msk [vmem:[#allocation8 + $0x110] sm:$0xff] %vm572, %v6162
    %6227 = vst.msk [vmem:[#allocation8 + $0x118] sm:$0xff] %vm572, %v6163
    %6228 = vst.msk [vmem:[#allocation8 + $0x120] sm:$0xff] %vm572, %v6164
    %6229 = vst.msk [vmem:[#allocation8 + $0x128] sm:$0xff] %vm572, %v6165
    %6230 = vst.msk [vmem:[#allocation8 + $0x130] sm:$0xff] %vm572, %v6166
    %6231 = vst.msk [vmem:[#allocation8 + $0x138] sm:$0xff] %vm572, %v6167
    %6232 = vst.msk [vmem:[#allocation8 + $0x140] sm:$0xff] %vm572, %v6168
    %6233 = vst.msk [vmem:[#allocation8 + $0x148] sm:$0xff] %vm572, %v6169
    %6234 = vst.msk [vmem:[#allocation8 + $0x150] sm:$0xff] %vm572, %v6170
    %6235 = vst.msk [vmem:[#allocation8 + $0x158] sm:$0xff] %vm572, %v6171
    %6236 = vst.msk [vmem:[#allocation8 + $0x160] sm:$0xff] %vm572, %v6172
    %6237 = vst.msk [vmem:[#allocation8 + $0x168] sm:$0xff] %vm572, %v6173
    %6238 = vst.msk [vmem:[#allocation8 + $0x170] sm:$0xff] %vm572, %v6174
    %6239 = vst.msk [vmem:[#allocation8 + $0x178] sm:$0xff] %vm572, %v6175
    %6240 = vst.msk [vmem:[#allocation8 + $0x180] sm:$0xff] %vm572, %v6176
    %6241 = vst.msk [vmem:[#allocation8 + $0x188] sm:$0xff] %vm572, %v6177
    %6242 = vst.msk [vmem:[#allocation8 + $0x190] sm:$0xff] %vm572, %v6178
    %6243 = vst.msk [vmem:[#allocation8 + $0x198] sm:$0xff] %vm572, %v6179
    %6244 = vst.msk [vmem:[#allocation8 + $0x1a0] sm:$0xff] %vm572, %v6180
    %6245 = vst.msk [vmem:[#allocation8 + $0x1a8] sm:$0xff] %vm572, %v6181
    %6246 = vst.msk [vmem:[#allocation8 + $0x1b0] sm:$0xff] %vm572, %v6182
    %6247 = vst.msk [vmem:[#allocation8 + $0x1b8] sm:$0xff] %vm572, %v6183
    %6248 = vst.msk [vmem:[#allocation8 + $0x1c0] sm:$0xff] %vm572, %v6184
    %6249 = vst.msk [vmem:[#allocation8 + $0x1c8] sm:$0xff] %vm572, %v6185
    %6250 = vst.msk [vmem:[#allocation8 + $0x1d0] sm:$0xff] %vm572, %v6186
    %6251 = vst.msk [vmem:[#allocation8 + $0x1d8] sm:$0xff] %vm572, %v6187
    %6252 = vst.msk [vmem:[#allocation8 + $0x1e0] sm:$0xff] %vm572, %v6188
    %6253 = vst.msk [vmem:[#allocation8 + $0x1e8] sm:$0xff] %vm572, %v6189
    %6254 = vst.msk [vmem:[#allocation8 + $0x1f0] sm:$0xff] %vm572, %v6190
    %6255 = vst.msk [vmem:[#allocation8 + $0x1f8] sm:$0xff] %vm572, %v6191
    // Predicated region
    $region38: #{tpu_custom_call.1} parent=1 // pred_check
      _
    $region39: #{tpu_custom_call.1} parent=1 // pred_check_branch
      %6257 = sbr.rel (0) target = $region41
    $region40: #{tpu_custom_call.1} parent=1 // pred_region
      %s6259 = ssub.s32 8192, 8192
      %6260 = vsyncadd [#allocation5], %s6259
      %s6261 = sshll.u32 [#allocation8], 4
      %s6262 = int_to_ptr.vmem [resolvable:$true] %s6261
      %6267 = dma.vmem_to_hbm [thread:$0]  %s6262, 8192, %s7, [#allocation5], 128, 128, 8
    $region41: #{tpu_custom_call.1} parent=1 // pred_fallthru
      _
    // Predicated region
    $region42: #{tpu_custom_call.1} parent=1 // pred_check
      _
    $region43: #{tpu_custom_call.1} parent=1 // pred_check_branch
      %6269 = sbr.rel (0) target = $region45
    $region44: #{tpu_custom_call.1} parent=1 // pred_region
      %6270 = dma.done [#allocation5], 8192
    $region45: #{tpu_custom_call.1} parent=1 // pred_fallthru
      _
    %6271 = vsyncpa [#allocation4], 1
    %6272 = vsyncpa [#allocation7], 1
    %6273 = vsyncpa [#allocation5], 1

</llo_original>
